<compile_context>
chip_gen: v7x
topology: tpu7x:2x2x1
jax: 0.10.0
libtpu: 0.0.40
codegen_flags: <defaults>
</compile_context>

<pallas_src>
import functools
import math

import jax
import jax.numpy as jnp
from jax import lax
from jax.experimental import pallas as pl
from jax.experimental.pallas import tpu as pltpu


MATMUL_DTYPE = jnp.bfloat16          # MXU input dtype (accumulation stays f32)
LN_EPS = 1e-5
MASK_VALUE = -1e4
ROW_TILE = 512                       # row tile for the final [B*T, C] dense
VMEM_LIMIT = 48 * 1024 * 1024        # safe on v5e / v6e / v7x


# ----------------------------------------------------------------------------
# Fused attention layer: QKV proj + rel-pos MHA + out proj + residual + LN
# ----------------------------------------------------------------------------
def _attn_layer_kernel(x_ref, qm_ref, km_ref, wqkv_ref, bqkv_ref, ek_ref,
                       ev_ref, wo_ref, bo_ref, g_ref, be_ref, o_ref,
                       *, n_heads, head_dim, window):
    T = x_ref.shape[1]
    H = n_heads * head_dim

    x_f32 = x_ref[0].astype(jnp.float32)              # [T, H] residual input
    qm = qm_ref[0]                                     # [T, 1]
    km = km_ref[0]                                     # [1, T]
    ek = ek_ref[...]                                   # [2W+1, Dk] bf16
    ev = ev_ref[...]                                   # [2W+1, Dk] bf16

    # Fused QKV projection (1/sqrt(Dk) already folded into the Q columns).
    qkv = jnp.dot(x_ref[0].astype(MATMUL_DTYPE), wqkv_ref[...],
                  preferred_element_type=jnp.float32) + bqkv_ref[...]  # [T,3H]

    # Band machinery: computed ONCE, reused across heads and for both the
    # relative-key scatter and the relative-value gather.
    t_idx = lax.broadcasted_iota(jnp.int32, (T, T), 0)
    s_idx = lax.broadcasted_iota(jnp.int32, (T, T), 1)
    rel = s_idx - t_idx                                # rel[t, s] = s - t
    invalid = (qm * km) == 0.0                         # [T, T]
    bands = [(rel == w).astype(jnp.float32)
             for w in range(-window, window + 1)]      # 2W+1 x [T, T]

    y = bo_ref[...].astype(jnp.float32)                # [1, H] -> broadcasts
    for h in range(n_heads):
        q = qkv[:, h * head_dim:(h + 1) * head_dim]
        k = qkv[:, H + h * head_dim: H + (h + 1) * head_dim]
        v = qkv[:, 2 * H + h * head_dim: 2 * H + (h + 1) * head_dim]
        qb = q.astype(MATMUL_DTYPE)

        # content scores: q . k^T  (MXU)
        scores = lax.dot_general(qb, k.astype(MATMUL_DTYPE),
                                 (((1,), (1,)), ((), ())),
                                 preferred_element_type=jnp.float32)   # [T, T]

        # relative-key logits: c[t, w+W] = q[t] . emb_rel_k[w+W]  (MXU),
        # scattered onto the 2W+1 diagonals with the hoisted band masks.
        c = lax.dot_general(qb, ek, (((1,), (1,)), ((), ())),
                            preferred_element_type=jnp.float32)        # [T,2W+1]
        for j, band in enumerate(bands):
            scores = scores + band * c[:, j:j + 1]

        scores = jnp.where(invalid, MASK_VALUE, scores)

        smax = jnp.max(scores, axis=-1, keepdims=True)
        e = jnp.exp(scores - smax)
        p = e * pl.reciprocal(jnp.sum(e, axis=-1, keepdims=True), approx=False)

        # content output: p @ v  (MXU)
        out = jnp.dot(p.astype(MATMUL_DTYPE), v.astype(MATMUL_DTYPE),
                      preferred_element_type=jnp.float32)               # [T,Dk]

        # relative-value term on the MXU: gather the 2W+1 diagonals of p into
        # dvec [T, 2W+1] then contract with emb_rel_v in one small matmul.
        dvec = jnp.concatenate(
            [jnp.sum(band * p, axis=-1, keepdims=True) for band in bands],
            axis=-1)                                                    # [T,2W+1]
        out = out + jnp.dot(dvec.astype(MATMUL_DTYPE), ev,
                            preferred_element_type=jnp.float32)

        # fused output projection, accumulated per head (no concat/relayout):
        y = y + jnp.dot(out.astype(MATMUL_DTYPE),
                        wo_ref[h * head_dim:(h + 1) * head_dim, :],
                        preferred_element_type=jnp.float32)             # [T, H]

    # residual + LayerNorm epilogue
    r = x_f32 + y
    mean = jnp.mean(r, axis=-1, keepdims=True)
    var = jnp.mean(jnp.square(r - mean), axis=-1, keepdims=True)
    rn = (r - mean) * lax.rsqrt(var + LN_EPS)
    o_ref[0] = (rn * g_ref[...] + be_ref[...]).astype(o_ref.dtype)


def pallas_attn_layer(x, qmask, kmask, layer, *, n_heads, window):
    B, T, H = x.shape
    head_dim = H // n_heads
    nrel = 2 * window + 1
    kernel = functools.partial(_attn_layer_kernel, n_heads=n_heads,
                               head_dim=head_dim, window=window)
    return pl.pallas_call(
        kernel,
        out_shape=jax.ShapeDtypeStruct((B, T, H), x.dtype),
        grid=(B,),
        in_specs=[
            pl.BlockSpec((1, T, H), lambda b: (b, 0, 0)),       # x
            pl.BlockSpec((1, T, 1), lambda b: (b, 0, 0)),       # query mask
            pl.BlockSpec((1, 1, T), lambda b: (b, 0, 0)),       # key mask
            pl.BlockSpec((H, 3 * H), lambda b: (0, 0)),         # w_qkv (bf16)
            pl.BlockSpec((1, 3 * H), lambda b: (0, 0)),         # b_qkv
            pl.BlockSpec((nrel, head_dim), lambda b: (0, 0)),   # emb_rel_k
            pl.BlockSpec((nrel, head_dim), lambda b: (0, 0)),   # emb_rel_v
            pl.BlockSpec((H, H), lambda b: (0, 0)),             # wo (bf16)
            pl.BlockSpec((1, H), lambda b: (0, 0)),             # bo
            pl.BlockSpec((1, H), lambda b: (0, 0)),             # gamma
            pl.BlockSpec((1, H), lambda b: (0, 0)),             # beta
        ],
        out_specs=pl.BlockSpec((1, T, H), lambda b: (b, 0, 0)),
        compiler_params=pltpu.CompilerParams(
            dimension_semantics=("parallel",),
            vmem_limit_bytes=VMEM_LIMIT),
    )(x, qmask, kmask, layer["w_qkv"], layer["b_qkv"],
      layer["emb_rel_k"], layer["emb_rel_v"], layer["wo"], layer["bo"],
      layer["g1"], layer["be1"])


# ----------------------------------------------------------------------------
# Fused FFN layer: mask -> conv1 -> relu -> mask -> conv2 -> mask -> res -> LN
# ----------------------------------------------------------------------------
def _shift_rows(x, s):
    """out[t] = x[t - s] with zero fill at the edges (s is a static int)."""
    if s == 0:
        return x
    T = x.shape[0]
    rolled = pltpu.roll(x, shift=s % T, axis=0)         # rolled[t] = x[(t-s)%T]
    t = lax.broadcasted_iota(jnp.int32, x.shape, 0)
    keep = (t >= s) if s > 0 else (t < T + s)
    return jnp.where(keep, rolled, 0.0)


def _conv1d_same(x, w_ref, ksize):
    """Same-padded conv1d as `ksize` shifted MXU matmuls.
       x: [T, Cin] f32 (already masked); w_ref: [K, Cin, Cout] bf16 ref."""
    pad_l = (ksize - 1) // 2
    acc = None
    for k in range(ksize):
        xs = _shift_rows(x, pad_l - k).astype(MATMUL_DTYPE)
        term = jnp.dot(xs, w_ref[k], preferred_element_type=jnp.float32)
        acc = term if acc is None else acc + term
    return acc


def _ffn_layer_kernel(x_ref, m_ref, w1_ref, b1_ref, w2_ref, b2_ref,
                      g_ref, be_ref, o_ref, *, ksize):
    m = m_ref[0]                                        # [T, 1]
    x_f32 = x_ref[0].astype(jnp.float32)                # [T, H]

    f = _conv1d_same(x_f32 * m, w1_ref, ksize) + b1_ref[...]   # [T, Fc]
    f = jnp.maximum(f, 0.0)                             # activation=None -> relu
    y = (_conv1d_same(f * m, w2_ref, ksize) + b2_ref[...]) * m  # [T, H]

    r = x_f32 + y                                       # residual
    mean = jnp.mean(r, axis=-1, keepdims=True)
    var = jnp.mean(jnp.square(r - mean), axis=-1, keepdims=True)
    rn = (r - mean) * lax.rsqrt(var + LN_EPS)
    o_ref[0] = (rn * g_ref[...] + be_ref[...]).astype(o_ref.dtype)


def pallas_ffn_layer(x, qmask, layer):
    B, T, H = x.shape
    K, _, Fc = layer["w1"].shape
    kernel = functools.partial(_ffn_layer_kernel, ksize=K)
    return pl.pallas_call(
        kernel,
        out_shape=jax.ShapeDtypeStruct((B, T, H), x.dtype),
        grid=(B,),
        in_specs=[
            pl.BlockSpec((1, T, H), lambda b: (b, 0, 0)),       # x
            pl.BlockSpec((1, T, 1), lambda b: (b, 0, 0)),       # mask
            pl.BlockSpec((K, H, Fc), lambda b: (0, 0, 0)),      # w1 (bf16)
            pl.BlockSpec((1, Fc), lambda b: (0, 0)),            # b1
            pl.BlockSpec((K, Fc, H), lambda b: (0, 0, 0)),      # w2 (bf16)
            pl.BlockSpec((1, H), lambda b: (0, 0)),             # b2
            pl.BlockSpec((1, H), lambda b: (0, 0)),             # gamma
            pl.BlockSpec((1, H), lambda b: (0, 0)),             # beta
        ],
        out_specs=pl.BlockSpec((1, T, H), lambda b: (b, 0, 0)),
        compiler_params=pltpu.CompilerParams(
            dimension_semantics=("parallel",),
            vmem_limit_bytes=VMEM_LIMIT),
    )(x, qmask, layer["w1"], layer["bf1"], layer["w2"], layer["bf2"],
      layer["g2"], layer["be2"])


# ----------------------------------------------------------------------------
# Row-tiled dense (final 1x1-conv projection)
# ----------------------------------------------------------------------------
def _dense_kernel(x_ref, w_ref, b_ref, o_ref):
    acc = jnp.dot(x_ref[...].astype(MATMUL_DTYPE), w_ref[...],
                  preferred_element_type=jnp.float32)
    o_ref[...] = (acc + b_ref[...]).astype(o_ref.dtype)


def pallas_dense(x, w_bf16, b_row):
    N, Cin = x.shape
    Cout = w_bf16.shape[1]
    tm = N if N <= ROW_TILE else ROW_TILE
    return pl.pallas_call(
        _dense_kernel,
        out_shape=jax.ShapeDtypeStruct((N, Cout), x.dtype),
        grid=(pl.cdiv(N, tm),),
        in_specs=[
            pl.BlockSpec((tm, Cin), lambda i: (i, 0)),
            pl.BlockSpec((Cin, Cout), lambda i: (0, 0)),
            pl.BlockSpec((1, Cout), lambda i: (0, 0)),
        ],
        out_specs=pl.BlockSpec((tm, Cout), lambda i: (i, 0)),
        compiler_params=pltpu.CompilerParams(dimension_semantics=("parallel",)),
    )(x, w_bf16, b_row)


# ----------------------------------------------------------------------------
# Parameters (structure matches the PyTorch module; values are random)
# ----------------------------------------------------------------------------
def init_params(key, cfg):
    H, Fc, nh, K = cfg["hidden"], cfg["filter"], cfg["n_heads"], cfg["kernel_size"]
    W, out = cfg["window_size"], cfg["out_channels"]
    Dk = H // nh
    keys = iter(jax.random.split(key, 8 + 12 * cfg["n_layers"]))

    def nrm(shape, scale):
        return jax.random.normal(next(keys), shape, jnp.float32) * scale

    def xavier(cin, cout):
        lim = math.sqrt(6.0 / (cin + cout))
        return jax.random.uniform(next(keys), (cin, cout), jnp.float32, -lim, lim)

    params = {
        "emb": nrm((cfg["n_vocab"], H), H ** -0.5),
        "emb_t": nrm((6, H), H ** -0.5),
        "w_proj": nrm((H, 2 * out), 1.0 / math.sqrt(H)),
        "b_proj": nrm((2 * out,), 0.01),
        "layers": [],
    }
    for _ in range(cfg["n_layers"]):
        params["layers"].append({
            "w_qkv": xavier(H, 3 * H), "b_qkv": nrm((3 * H,), 0.01),
            "wo": nrm((H, H), 1.0 / math.sqrt(H)), "bo": nrm((H,), 0.01),
            "emb_rel_k": nrm((2 * W + 1, Dk), Dk ** -0.5),
            "emb_rel_v": nrm((2 * W + 1, Dk), Dk ** -0.5),
            "g1": jnp.ones((H,), jnp.float32), "be1": jnp.zeros((H,), jnp.float32),
            "w1": nrm((K, H, Fc), 1.0 / math.sqrt(K * H)), "bf1": nrm((Fc,), 0.01),
            "w2": nrm((K, Fc, H), 1.0 / math.sqrt(K * Fc)), "bf2": nrm((H,), 0.01),
            "g2": jnp.ones((H,), jnp.float32), "be2": jnp.zeros((H,), jnp.float32),
        })
    return params


def prepare_params(params, cfg):
    """Fold 1/sqrt(Dk) into the Q projection, reshape vectors to [1, C] rows,
    and pre-cast all MXU weights to bf16 (no per-step weight casts in-kernel)."""
    H, nh = cfg["hidden"], cfg["n_heads"]
    scale = 1.0 / math.sqrt(H // nh)

    def row(v):
        return v.reshape(1, -1).astype(jnp.float32)

    out = {
        "emb": params["emb"],
        "emb_t": params["emb_t"],
        "w_proj": params["w_proj"].astype(MATMUL_DTYPE),
        "b_proj": row(params["b_proj"]),
        "layers": [],
    }
    for l in params["layers"]:
        w_qkv = l["w_qkv"].at[:, :H].multiply(scale).astype(MATMUL_DTYPE)
        b_qkv = l["b_qkv"].at[:H].multiply(scale)
        out["layers"].append({
            "w_qkv": w_qkv, "b_qkv": row(b_qkv),
            "wo": l["wo"].astype(MATMUL_DTYPE), "bo": row(l["bo"]),
            "emb_rel_k": l["emb_rel_k"].astype(MATMUL_DTYPE),
            "emb_rel_v": l["emb_rel_v"].astype(MATMUL_DTYPE),
            "g1": row(l["g1"]), "be1": row(l["be1"]),
            "w1": l["w1"].astype(MATMUL_DTYPE), "bf1": row(l["bf1"]),
            "w2": l["w2"].astype(MATMUL_DTYPE), "bf2": row(l["bf2"]),
            "g2": row(l["g2"]), "be2": row(l["be2"]),
        })
    return out


# ----------------------------------------------------------------------------
# Forward pass
# ----------------------------------------------------------------------------
def text_encoder_forward(params, x_tok, t_tok, x_lengths, cfg):
    H, nh = cfg["hidden"], cfg["n_heads"]
    W, out = cfg["window_size"], cfg["out_channels"]
    B, T = x_tok.shape

    # embeddings (token gathers stay in XLA glue)
    emb_x = params["emb"][x_tok]                                   # [B,T,H]
    emb_t = params["emb_t"][t_tok]
    emb_t = jnp.where((t_tok == 0)[:, :, None], 0.0, emb_t)        # emb_t[t==0]=0
    h = (emb_x + emb_t) * math.sqrt(H)                             # [B,T,H]

    x_mask = (jnp.arange(T)[None, :] < x_lengths[:, None]).astype(h.dtype)
    qmask = x_mask[:, :, None]                                     # [B,T,1]
    kmask = x_mask[:, None, :]                                     # [B,1,T]
    h = h * qmask

    for layer in params["layers"]:
        h = pallas_attn_layer(h, qmask, kmask, layer, n_heads=nh, window=W)
        h = pallas_ffn_layer(h, qmask, layer)

    h = h * qmask                                                  # final mask

    stats = pallas_dense(h.reshape(B * T, H), params["w_proj"], params["b_proj"])
    stats = stats.reshape(B, T, 2 * out) * qmask
    m, logs = stats[..., :out], stats[..., out:]

    # back to PyTorch layouts
    return (h.transpose(0, 2, 1),          # [B, H, T]
            m.transpose(0, 2, 1),          # [B, out, T]
            logs.transpose(0, 2, 1),       # [B, out, T]
            x_mask[:, None, :])            # [B, 1, T]


# ----------------------------------------------------------------------------
if __name__ == "__main__":
    cfg = dict(n_vocab=50, out_channels=8, hidden=32, filter=64, n_heads=2,
               n_layers=2, kernel_size=3, window_size=4)

    key = jax.random.PRNGKey(0)
    pkey, xkey, tkey = jax.random.split(key, 3)
    params = prepare_params(init_params(pkey, cfg), cfg)

    B, T = 2, 8
    x_tok = jax.random.randint(xkey, (B, T), 0, cfg["n_vocab"], dtype=jnp.int32)
    t_tok = jax.random.randint(tkey, (B, T), 0, 6, dtype=jnp.int32)
    x_lengths = jnp.array([8, 5], dtype=jnp.int32)

    fwd = jax.jit(functools.partial(text_encoder_forward, cfg=cfg))
    x, m, logs, x_mask = fwd(params, x_tok, t_tok, x_lengths)
    jax.block_until_ready((x, m, logs, x_mask))

    assert x.shape == (B, cfg["hidden"], T)
    assert m.shape == (B, cfg["out_channels"], T)
    assert logs.shape == (B, cfg["out_channels"], T)
    assert x_mask.shape == (B, 1, T)
    assert bool(jnp.all(jnp.isfinite(x)))
    assert bool(jnp.all(jnp.isfinite(m))) and bool(jnp.all(jnp.isfinite(logs)))
    print("KERNEL_OK")
</pallas_src>

<mosaic_0001>
module attributes {stable_mosaic.version = 11 : i64} {
  func.func @_ffn_layer_kernel(%arg0: i32, %arg1: memref<1x8x32xf32, #tpu.memory_space<vmem>>, %arg2: memref<1x8x1xf32, #tpu.memory_space<vmem>>, %arg3: memref<3x32x64xbf16, #tpu.memory_space<vmem>>, %arg4: memref<1x64xf32, #tpu.memory_space<vmem>>, %arg5: memref<3x64x32xbf16, #tpu.memory_space<vmem>>, %arg6: memref<1x32xf32, #tpu.memory_space<vmem>>, %arg7: memref<1x32xf32, #tpu.memory_space<vmem>>, %arg8: memref<1x32xf32, #tpu.memory_space<vmem>>, %arg9: memref<1x8x32xf32, #tpu.memory_space<vmem>>) attributes {dimension_semantics = [#tpu.dimension_semantics<parallel>], iteration_bounds = array<i64: 2>, scalar_prefetch = 0 : i64, scratch_operands = 0 : i64, tpu.core_type = #tpu.core_type<tc>, window_params = [{transform_indices = @transform_0, window_bounds = array<i64: 1, 8, 32>}, {transform_indices = @transform_1, window_bounds = array<i64: 1, 8, 1>}, {pipeline_mode = #tpu.pipeline_mode<synchronous>, transform_indices = @transform_2, window_bounds = array<i64: 3, 32, 64>}, {pipeline_mode = #tpu.pipeline_mode<synchronous>, transform_indices = @transform_3, window_bounds = array<i64: 1, 64>}, {pipeline_mode = #tpu.pipeline_mode<synchronous>, transform_indices = @transform_4, window_bounds = array<i64: 3, 64, 32>}, {pipeline_mode = #tpu.pipeline_mode<synchronous>, transform_indices = @transform_5, window_bounds = array<i64: 1, 32>}, {pipeline_mode = #tpu.pipeline_mode<synchronous>, transform_indices = @transform_6, window_bounds = array<i64: 1, 32>}, {pipeline_mode = #tpu.pipeline_mode<synchronous>, transform_indices = @transform_7, window_bounds = array<i64: 1, 32>}, {transform_indices = @transform_8, window_bounds = array<i64: 1, 8, 32>}]} {
    %c0 = arith.constant 0 : index
    %c0_0 = arith.constant 0 : index
    %c0_1 = arith.constant 0 : index
    %0 = vector.load %arg2[%c0, %c0_0, %c0_1] : memref<1x8x1xf32, #tpu.memory_space<vmem>>, vector<1x8x1xf32>
    %1 = vector.shape_cast %0 : vector<1x8x1xf32> to vector<8x1xf32>
    %c0_2 = arith.constant 0 : index
    %c0_3 = arith.constant 0 : index
    %c0_4 = arith.constant 0 : index
    %2 = vector.load %arg1[%c0_2, %c0_3, %c0_4] : memref<1x8x32xf32, #tpu.memory_space<vmem>>, vector<1x8x32xf32>
    %3 = vector.shape_cast %2 : vector<1x8x32xf32> to vector<8x32xf32>
    %4 = vector.broadcast %1 : vector<8x1xf32> to vector<8x32xf32>
    %5 = arith.mulf %3, %4 : vector<8x32xf32>
    %c1_i32 = arith.constant 1 : i32
    %6 = tpu.dynamic_rotate %5 by %c1_i32 dim 0 : vector<8x32xf32>, i32 -> vector<8x32xf32>
    %7 = tpu.iota {dimensions = array<i32: 0>} : vector<8x32xi32>
    %c1_i32_5 = arith.constant 1 : i32
    %8 = vector.broadcast %c1_i32_5 : i32 to vector<8x32xi32>
    %9 = arith.cmpi sge, %7, %8 : vector<8x32xi32>
    %cst = arith.constant 0.000000e+00 : f32
    %10 = vector.broadcast %cst : f32 to vector<8x32xf32>
    %11 = arith.select %9, %6, %10 : vector<8x32xi1>, vector<8x32xf32>
    %12 = arith.truncf %11 : vector<8x32xf32> to vector<8x32xbf16>
    %c0_6 = arith.constant 0 : index
    %c0_7 = arith.constant 0 : index
    %c0_8 = arith.constant 0 : index
    %13 = vector.load %arg3[%c0_6, %c0_7, %c0_8] : memref<3x32x64xbf16, #tpu.memory_space<vmem>>, vector<1x32x64xbf16>
    %14 = vector.shape_cast %13 : vector<1x32x64xbf16> to vector<32x64xbf16>
    %cst_9 = arith.constant dense<0.000000e+00> : vector<8x64xf32>
    %15 = tpu.matmul %12, %14, %cst_9 {dimension_numbers = #tpu.dot_dimension_numbers<[1], [0], [0], [1], [0, 0, 1, 1], [], []>} : vector<8x32xbf16>, vector<32x64xbf16>, vector<8x64xf32> -> vector<8x64xf32>
    %16 = arith.truncf %5 : vector<8x32xf32> to vector<8x32xbf16>
    %c1 = arith.constant 1 : index
    %c0_10 = arith.constant 0 : index
    %c0_11 = arith.constant 0 : index
    %17 = vector.load %arg3[%c1, %c0_10, %c0_11] : memref<3x32x64xbf16, #tpu.memory_space<vmem>>, vector<1x32x64xbf16>
    %18 = vector.shape_cast %17 : vector<1x32x64xbf16> to vector<32x64xbf16>
    %cst_12 = arith.constant dense<0.000000e+00> : vector<8x64xf32>
    %19 = tpu.matmul %16, %18, %cst_12 {dimension_numbers = #tpu.dot_dimension_numbers<[1], [0], [0], [1], [0, 0, 1, 1], [], []>} : vector<8x32xbf16>, vector<32x64xbf16>, vector<8x64xf32> -> vector<8x64xf32>
    %20 = arith.addf %15, %19 : vector<8x64xf32>
    %c7_i32 = arith.constant 7 : i32
    %21 = tpu.dynamic_rotate %5 by %c7_i32 dim 0 : vector<8x32xf32>, i32 -> vector<8x32xf32>
    %22 = tpu.iota {dimensions = array<i32: 0>} : vector<8x32xi32>
    %c7_i32_13 = arith.constant 7 : i32
    %23 = vector.broadcast %c7_i32_13 : i32 to vector<8x32xi32>
    %24 = arith.cmpi slt, %22, %23 : vector<8x32xi32>
    %cst_14 = arith.constant 0.000000e+00 : f32
    %25 = vector.broadcast %cst_14 : f32 to vector<8x32xf32>
    %26 = arith.select %24, %21, %25 : vector<8x32xi1>, vector<8x32xf32>
    %27 = arith.truncf %26 : vector<8x32xf32> to vector<8x32xbf16>
    %c2 = arith.constant 2 : index
    %c0_15 = arith.constant 0 : index
    %c0_16 = arith.constant 0 : index
    %28 = vector.load %arg3[%c2, %c0_15, %c0_16] : memref<3x32x64xbf16, #tpu.memory_space<vmem>>, vector<1x32x64xbf16>
    %29 = vector.shape_cast %28 : vector<1x32x64xbf16> to vector<32x64xbf16>
    %cst_17 = arith.constant dense<0.000000e+00> : vector<8x64xf32>
    %30 = tpu.matmul %27, %29, %cst_17 {dimension_numbers = #tpu.dot_dimension_numbers<[1], [0], [0], [1], [0, 0, 1, 1], [], []>} : vector<8x32xbf16>, vector<32x64xbf16>, vector<8x64xf32> -> vector<8x64xf32>
    %31 = arith.addf %20, %30 : vector<8x64xf32>
    %c0_18 = arith.constant 0 : index
    %c0_19 = arith.constant 0 : index
    %32 = vector.load %arg4[%c0_18, %c0_19] : memref<1x64xf32, #tpu.memory_space<vmem>>, vector<1x64xf32>
    %33 = vector.broadcast %32 : vector<1x64xf32> to vector<8x64xf32>
    %34 = arith.addf %31, %33 : vector<8x64xf32>
    %cst_20 = arith.constant 0.000000e+00 : f32
    %35 = vector.broadcast %cst_20 : f32 to vector<8x64xf32>
    %36 = arith.maximumf %34, %35 : vector<8x64xf32>
    %37 = vector.broadcast %1 : vector<8x1xf32> to vector<8x64xf32>
    %38 = arith.mulf %36, %37 : vector<8x64xf32>
    %c1_i32_21 = arith.constant 1 : i32
    %39 = tpu.dynamic_rotate %38 by %c1_i32_21 dim 0 : vector<8x64xf32>, i32 -> vector<8x64xf32>
    %40 = tpu.iota {dimensions = array<i32: 0>} : vector<8x64xi32>
    %c1_i32_22 = arith.constant 1 : i32
    %41 = vector.broadcast %c1_i32_22 : i32 to vector<8x64xi32>
    %42 = arith.cmpi sge, %40, %41 : vector<8x64xi32>
    %cst_23 = arith.constant 0.000000e+00 : f32
    %43 = vector.broadcast %cst_23 : f32 to vector<8x64xf32>
    %44 = arith.select %42, %39, %43 : vector<8x64xi1>, vector<8x64xf32>
    %45 = arith.truncf %44 : vector<8x64xf32> to vector<8x64xbf16>
    %c0_24 = arith.constant 0 : index
    %c0_25 = arith.constant 0 : index
    %c0_26 = arith.constant 0 : index
    %46 = vector.load %arg5[%c0_24, %c0_25, %c0_26] : memref<3x64x32xbf16, #tpu.memory_space<vmem>>, vector<1x64x32xbf16>
    %47 = vector.shape_cast %46 : vector<1x64x32xbf16> to vector<64x32xbf16>
    %cst_27 = arith.constant dense<0.000000e+00> : vector<8x32xf32>
    %48 = tpu.matmul %45, %47, %cst_27 {dimension_numbers = #tpu.dot_dimension_numbers<[1], [0], [0], [1], [0, 0, 1, 1], [], []>} : vector<8x64xbf16>, vector<64x32xbf16>, vector<8x32xf32> -> vector<8x32xf32>
    %49 = arith.truncf %38 : vector<8x64xf32> to vector<8x64xbf16>
    %c1_28 = arith.constant 1 : index
    %c0_29 = arith.constant 0 : index
    %c0_30 = arith.constant 0 : index
    %50 = vector.load %arg5[%c1_28, %c0_29, %c0_30] : memref<3x64x32xbf16, #tpu.memory_space<vmem>>, vector<1x64x32xbf16>
    %51 = vector.shape_cast %50 : vector<1x64x32xbf16> to vector<64x32xbf16>
    %cst_31 = arith.constant dense<0.000000e+00> : vector<8x32xf32>
    %52 = tpu.matmul %49, %51, %cst_31 {dimension_numbers = #tpu.dot_dimension_numbers<[1], [0], [0], [1], [0, 0, 1, 1], [], []>} : vector<8x64xbf16>, vector<64x32xbf16>, vector<8x32xf32> -> vector<8x32xf32>
    %53 = arith.addf %48, %52 : vector<8x32xf32>
    %c7_i32_32 = arith.constant 7 : i32
    %54 = tpu.dynamic_rotate %38 by %c7_i32_32 dim 0 : vector<8x64xf32>, i32 -> vector<8x64xf32>
    %55 = tpu.iota {dimensions = array<i32: 0>} : vector<8x64xi32>
    %c7_i32_33 = arith.constant 7 : i32
    %56 = vector.broadcast %c7_i32_33 : i32 to vector<8x64xi32>
    %57 = arith.cmpi slt, %55, %56 : vector<8x64xi32>
    %cst_34 = arith.constant 0.000000e+00 : f32
    %58 = vector.broadcast %cst_34 : f32 to vector<8x64xf32>
    %59 = arith.select %57, %54, %58 : vector<8x64xi1>, vector<8x64xf32>
    %60 = arith.truncf %59 : vector<8x64xf32> to vector<8x64xbf16>
    %c2_35 = arith.constant 2 : index
    %c0_36 = arith.constant 0 : index
    %c0_37 = arith.constant 0 : index
    %61 = vector.load %arg5[%c2_35, %c0_36, %c0_37] : memref<3x64x32xbf16, #tpu.memory_space<vmem>>, vector<1x64x32xbf16>
    %62 = vector.shape_cast %61 : vector<1x64x32xbf16> to vector<64x32xbf16>
    %cst_38 = arith.constant dense<0.000000e+00> : vector<8x32xf32>
    %63 = tpu.matmul %60, %62, %cst_38 {dimension_numbers = #tpu.dot_dimension_numbers<[1], [0], [0], [1], [0, 0, 1, 1], [], []>} : vector<8x64xbf16>, vector<64x32xbf16>, vector<8x32xf32> -> vector<8x32xf32>
    %64 = arith.addf %53, %63 : vector<8x32xf32>
    %c0_39 = arith.constant 0 : index
    %c0_40 = arith.constant 0 : index
    %65 = vector.load %arg6[%c0_39, %c0_40] : memref<1x32xf32, #tpu.memory_space<vmem>>, vector<1x32xf32>
    %66 = vector.broadcast %65 : vector<1x32xf32> to vector<8x32xf32>
    %67 = arith.addf %64, %66 : vector<8x32xf32>
    %68 = vector.broadcast %1 : vector<8x1xf32> to vector<8x32xf32>
    %69 = arith.mulf %67, %68 : vector<8x32xf32>
    %70 = arith.addf %3, %69 : vector<8x32xf32>
    %cst_41 = arith.constant dense<0.000000e+00> : vector<8xf32>
    %71 = vector.multi_reduction <add>, %70, %cst_41 [1] : vector<8x32xf32> to vector<8xf32>
    %72 = vector.shape_cast %71 : vector<8xf32> to vector<8x1xf32>
    %cst_42 = arith.constant 3.200000e+01 : f32
    %73 = vector.broadcast %cst_42 : f32 to vector<8x1xf32>
    %74 = arith.divf %72, %73 : vector<8x1xf32>
    %75 = vector.broadcast %74 : vector<8x1xf32> to vector<8x32xf32>
    %76 = arith.subf %70, %75 : vector<8x32xf32>
    %77 = arith.mulf %76, %76 : vector<8x32xf32>
    %cst_43 = arith.constant dense<0.000000e+00> : vector<8xf32>
    %78 = vector.multi_reduction <add>, %77, %cst_43 [1] : vector<8x32xf32> to vector<8xf32>
    %79 = vector.shape_cast %78 : vector<8xf32> to vector<8x1xf32>
    %cst_44 = arith.constant 3.200000e+01 : f32
    %80 = vector.broadcast %cst_44 : f32 to vector<8x1xf32>
    %81 = arith.divf %79, %80 : vector<8x1xf32>
    %82 = vector.broadcast %74 : vector<8x1xf32> to vector<8x32xf32>
    %83 = arith.subf %70, %82 : vector<8x32xf32>
    %cst_45 = arith.constant 9.99999974E-6 : f32
    %84 = vector.broadcast %cst_45 : f32 to vector<8x1xf32>
    %85 = arith.addf %81, %84 : vector<8x1xf32>
    %86 = math.rsqrt %85 : vector<8x1xf32>
    %87 = vector.broadcast %86 : vector<8x1xf32> to vector<8x32xf32>
    %88 = arith.mulf %83, %87 : vector<8x32xf32>
    %c0_46 = arith.constant 0 : index
    %c0_47 = arith.constant 0 : index
    %89 = vector.load %arg7[%c0_46, %c0_47] : memref<1x32xf32, #tpu.memory_space<vmem>>, vector<1x32xf32>
    %90 = vector.broadcast %89 : vector<1x32xf32> to vector<8x32xf32>
    %91 = arith.mulf %88, %90 : vector<8x32xf32>
    %c0_48 = arith.constant 0 : index
    %c0_49 = arith.constant 0 : index
    %92 = vector.load %arg8[%c0_48, %c0_49] : memref<1x32xf32, #tpu.memory_space<vmem>>, vector<1x32xf32>
    %93 = vector.broadcast %92 : vector<1x32xf32> to vector<8x32xf32>
    %94 = arith.addf %91, %93 : vector<8x32xf32>
    %c0_50 = arith.constant 0 : index
    %c0_51 = arith.constant 0 : index
    %c0_52 = arith.constant 0 : index
    %95 = vector.load %arg9[%c0_50, %c0_51, %c0_52] : memref<1x8x32xf32, #tpu.memory_space<vmem>>, vector<1x8x32xf32>
    %96 = vector.shape_cast %95 : vector<1x8x32xf32> to vector<8x32xf32>
    %97 = vector.shape_cast %94 : vector<8x32xf32> to vector<1x8x32xf32>
    tpu.vector_store %arg9[%c0_50, %c0_51, %c0_52], %97 {strides = array<i32>} : memref<1x8x32xf32, #tpu.memory_space<vmem>>, vector<1x8x32xf32>,
    return
  }
  func.func @transform_0(%arg0: i32) -> (i32, i32, i32) {
    %c0_i32 = arith.constant 0 : i32
    %c0_i32_0 = arith.constant 0 : i32
    %c0_i32_1 = arith.constant 0 : i32
    return %arg0, %c0_i32, %c0_i32_0 : i32, i32, i32
  }
  func.func @transform_1(%arg0: i32) -> (i32, i32, i32) {
    %c0_i32 = arith.constant 0 : i32
    %c0_i32_0 = arith.constant 0 : i32
    %c0_i32_1 = arith.constant 0 : i32
    return %arg0, %c0_i32, %c0_i32_0 : i32, i32, i32
  }
  func.func @transform_2(%arg0: i32) -> (i32, i32, i32) {
    %c0_i32 = arith.constant 0 : i32
    %c0_i32_0 = arith.constant 0 : i32
    %c0_i32_1 = arith.constant 0 : i32
    %c0_i32_2 = arith.constant 0 : i32
    return %c0_i32, %c0_i32_0, %c0_i32_1 : i32, i32, i32
  }
  func.func @transform_3(%arg0: i32) -> (i32, i32) {
    %c0_i32 = arith.constant 0 : i32
    %c0_i32_0 = arith.constant 0 : i32
    %c0_i32_1 = arith.constant 0 : i32
    return %c0_i32, %c0_i32_0 : i32, i32
  }
  func.func @transform_4(%arg0: i32) -> (i32, i32, i32) {
    %c0_i32 = arith.constant 0 : i32
    %c0_i32_0 = arith.constant 0 : i32
    %c0_i32_1 = arith.constant 0 : i32
    %c0_i32_2 = arith.constant 0 : i32
    return %c0_i32, %c0_i32_0, %c0_i32_1 : i32, i32, i32
  }
  func.func @transform_5(%arg0: i32) -> (i32, i32) {
    %c0_i32 = arith.constant 0 : i32
    %c0_i32_0 = arith.constant 0 : i32
    %c0_i32_1 = arith.constant 0 : i32
    return %c0_i32, %c0_i32_0 : i32, i32
  }
  func.func @transform_6(%arg0: i32) -> (i32, i32) {
    %c0_i32 = arith.constant 0 : i32
    %c0_i32_0 = arith.constant 0 : i32
    %c0_i32_1 = arith.constant 0 : i32
    return %c0_i32, %c0_i32_0 : i32, i32
  }
  func.func @transform_7(%arg0: i32) -> (i32, i32) {
    %c0_i32 = arith.constant 0 : i32
    %c0_i32_0 = arith.constant 0 : i32
    %c0_i32_1 = arith.constant 0 : i32
    return %c0_i32, %c0_i32_0 : i32, i32
  }
  func.func @transform_8(%arg0: i32) -> (i32, i32, i32) {
    %c0_i32 = arith.constant 0 : i32
    %c0_i32_0 = arith.constant 0 : i32
    %c0_i32_1 = arith.constant 0 : i32
    return %arg0, %c0_i32, %c0_i32_0 : i32, i32, i32
  }
}

module attributes {stable_mosaic.version = 11 : i64} {
  func.func @_attn_layer_kernel(%arg0: i32, %arg1: memref<1x8x32xf32, #tpu.memory_space<vmem>>, %arg2: memref<1x8x1xf32, #tpu.memory_space<vmem>>, %arg3: memref<1x1x8xf32, #tpu.memory_space<vmem>>, %arg4: memref<32x96xbf16, #tpu.memory_space<vmem>>, %arg5: memref<1x96xf32, #tpu.memory_space<vmem>>, %arg6: memref<9x16xbf16, #tpu.memory_space<vmem>>, %arg7: memref<9x16xbf16, #tpu.memory_space<vmem>>, %arg8: memref<32x32xbf16, #tpu.memory_space<vmem>>, %arg9: memref<1x32xf32, #tpu.memory_space<vmem>>, %arg10: memref<1x32xf32, #tpu.memory_space<vmem>>, %arg11: memref<1x32xf32, #tpu.memory_space<vmem>>, %arg12: memref<1x8x32xf32, #tpu.memory_space<vmem>>) attributes {dimension_semantics = [#tpu.dimension_semantics<parallel>], iteration_bounds = array<i64: 2>, scalar_prefetch = 0 : i64, scratch_operands = 0 : i64, tpu.core_type = #tpu.core_type<tc>, window_params = [{transform_indices = @transform_0, window_bounds = array<i64: 1, 8, 32>}, {transform_indices = @transform_1, window_bounds = array<i64: 1, 8, 1>}, {transform_indices = @transform_2, window_bounds = array<i64: 1, 1, 8>}, {pipeline_mode = #tpu.pipeline_mode<synchronous>, transform_indices = @transform_3, window_bounds = array<i64: 32, 96>}, {pipeline_mode = #tpu.pipeline_mode<synchronous>, transform_indices = @transform_4, window_bounds = array<i64: 1, 96>}, {pipeline_mode = #tpu.pipeline_mode<synchronous>, transform_indices = @transform_5, window_bounds = array<i64: 9, 16>}, {pipeline_mode = #tpu.pipeline_mode<synchronous>, transform_indices = @transform_6, window_bounds = array<i64: 9, 16>}, {pipeline_mode = #tpu.pipeline_mode<synchronous>, transform_indices = @transform_7, window_bounds = array<i64: 32, 32>}, {pipeline_mode = #tpu.pipeline_mode<synchronous>, transform_indices = @transform_8, window_bounds = array<i64: 1, 32>}, {pipeline_mode = #tpu.pipeline_mode<synchronous>, transform_indices = @transform_9, window_bounds = array<i64: 1, 32>}, {pipeline_mode = #tpu.pipeline_mode<synchronous>, transform_indices = @transform_10, window_bounds = array<i64: 1, 32>}, {transform_indices = @transform_11, window_bounds = array<i64: 1, 8, 32>}]} {
    %c0 = arith.constant 0 : index
    %c0_0 = arith.constant 0 : index
    %c0_1 = arith.constant 0 : index
    %0 = vector.load %arg1[%c0, %c0_0, %c0_1] : memref<1x8x32xf32, #tpu.memory_space<vmem>>, vector<1x8x32xf32>
    %1 = vector.shape_cast %0 : vector<1x8x32xf32> to vector<8x32xf32>
    %c0_2 = arith.constant 0 : index
    %c0_3 = arith.constant 0 : index
    %c0_4 = arith.constant 0 : index
    %2 = vector.load %arg2[%c0_2, %c0_3, %c0_4] : memref<1x8x1xf32, #tpu.memory_space<vmem>>, vector<1x8x1xf32>
    %3 = vector.shape_cast %2 : vector<1x8x1xf32> to vector<8x1xf32>
    %c0_5 = arith.constant 0 : index
    %c0_6 = arith.constant 0 : index
    %c0_7 = arith.constant 0 : index
    %4 = vector.load %arg3[%c0_5, %c0_6, %c0_7] : memref<1x1x8xf32, #tpu.memory_space<vmem>>, vector<1x1x8xf32>
    %5 = vector.shape_cast %4 : vector<1x1x8xf32> to vector<1x8xf32>
    %c0_8 = arith.constant 0 : index
    %c0_9 = arith.constant 0 : index
    %6 = vector.load %arg6[%c0_8, %c0_9] : memref<9x16xbf16, #tpu.memory_space<vmem>>, vector<9x16xbf16>
    %c0_10 = arith.constant 0 : index
    %c0_11 = arith.constant 0 : index
    %7 = vector.load %arg7[%c0_10, %c0_11] : memref<9x16xbf16, #tpu.memory_space<vmem>>, vector<9x16xbf16>
    %c0_12 = arith.constant 0 : index
    %c0_13 = arith.constant 0 : index
    %c0_14 = arith.constant 0 : index
    %8 = vector.load %arg1[%c0_12, %c0_13, %c0_14] : memref<1x8x32xf32, #tpu.memory_space<vmem>>, vector<1x8x32xf32>
    %9 = vector.shape_cast %8 : vector<1x8x32xf32> to vector<8x32xf32>
    %10 = arith.truncf %9 : vector<8x32xf32> to vector<8x32xbf16>
    %c0_15 = arith.constant 0 : index
    %c0_16 = arith.constant 0 : index
    %11 = vector.load %arg4[%c0_15, %c0_16] : memref<32x96xbf16, #tpu.memory_space<vmem>>, vector<32x96xbf16>
    %cst = arith.constant dense<0.000000e+00> : vector<8x96xf32>
    %12 = tpu.matmul %10, %11, %cst {dimension_numbers = #tpu.dot_dimension_numbers<[1], [0], [0], [1], [0, 0, 1, 1], [], []>} : vector<8x32xbf16>, vector<32x96xbf16>, vector<8x96xf32> -> vector<8x96xf32>
    %c0_17 = arith.constant 0 : index
    %c0_18 = arith.constant 0 : index
    %13 = vector.load %arg5[%c0_17, %c0_18] : memref<1x96xf32, #tpu.memory_space<vmem>>, vector<1x96xf32>
    %14 = vector.broadcast %13 : vector<1x96xf32> to vector<8x96xf32>
    %15 = arith.addf %12, %14 : vector<8x96xf32>
    %16 = tpu.iota {dimensions = array<i32: 0>} : vector<8x8xi32>
    %17 = tpu.iota {dimensions = array<i32: 1>} : vector<8x8xi32>
    %18 = arith.subi %17, %16 : vector<8x8xi32>
    %19 = vector.broadcast %3 : vector<8x1xf32> to vector<8x8xf32>
    %20 = vector.broadcast %5 : vector<1x8xf32> to vector<8x8xf32>
    %21 = arith.mulf %19, %20 : vector<8x8xf32>
    %cst_19 = arith.constant 0.000000e+00 : f32
    %22 = vector.broadcast %cst_19 : f32 to vector<8x8xf32>
    %23 = arith.cmpf oeq, %21, %22 : vector<8x8xf32>
    %c-4_i32 = arith.constant -4 : i32
    %24 = vector.broadcast %c-4_i32 : i32 to vector<8x8xi32>
    %25 = arith.cmpi eq, %18, %24 : vector<8x8xi32>
    %26 = arith.extui %25 : vector<8x8xi1> to vector<8x8xi32>
    %27 = arith.sitofp %26 : vector<8x8xi32> to vector<8x8xf32>
    %c-3_i32 = arith.constant -3 : i32
    %28 = vector.broadcast %c-3_i32 : i32 to vector<8x8xi32>
    %29 = arith.cmpi eq, %18, %28 : vector<8x8xi32>
    %30 = arith.extui %29 : vector<8x8xi1> to vector<8x8xi32>
    %31 = arith.sitofp %30 : vector<8x8xi32> to vector<8x8xf32>
    %c-2_i32 = arith.constant -2 : i32
    %32 = vector.broadcast %c-2_i32 : i32 to vector<8x8xi32>
    %33 = arith.cmpi eq, %18, %32 : vector<8x8xi32>
    %34 = arith.extui %33 : vector<8x8xi1> to vector<8x8xi32>
    %35 = arith.sitofp %34 : vector<8x8xi32> to vector<8x8xf32>
    %c-1_i32 = arith.constant -1 : i32
    %36 = vector.broadcast %c-1_i32 : i32 to vector<8x8xi32>
    %37 = arith.cmpi eq, %18, %36 : vector<8x8xi32>
    %38 = arith.extui %37 : vector<8x8xi1> to vector<8x8xi32>
    %39 = arith.sitofp %38 : vector<8x8xi32> to vector<8x8xf32>
    %c0_i32 = arith.constant 0 : i32
    %40 = vector.broadcast %c0_i32 : i32 to vector<8x8xi32>
    %41 = arith.cmpi eq, %18, %40 : vector<8x8xi32>
    %42 = arith.extui %41 : vector<8x8xi1> to vector<8x8xi32>
    %43 = arith.sitofp %42 : vector<8x8xi32> to vector<8x8xf32>
    %c1_i32 = arith.constant 1 : i32
    %44 = vector.broadcast %c1_i32 : i32 to vector<8x8xi32>
    %45 = arith.cmpi eq, %18, %44 : vector<8x8xi32>
    %46 = arith.extui %45 : vector<8x8xi1> to vector<8x8xi32>
    %47 = arith.sitofp %46 : vector<8x8xi32> to vector<8x8xf32>
    %c2_i32 = arith.constant 2 : i32
    %48 = vector.broadcast %c2_i32 : i32 to vector<8x8xi32>
    %49 = arith.cmpi eq, %18, %48 : vector<8x8xi32>
    %50 = arith.extui %49 : vector<8x8xi1> to vector<8x8xi32>
    %51 = arith.sitofp %50 : vector<8x8xi32> to vector<8x8xf32>
    %c3_i32 = arith.constant 3 : i32
    %52 = vector.broadcast %c3_i32 : i32 to vector<8x8xi32>
    %53 = arith.cmpi eq, %18, %52 : vector<8x8xi32>
    %54 = arith.extui %53 : vector<8x8xi1> to vector<8x8xi32>
    %55 = arith.sitofp %54 : vector<8x8xi32> to vector<8x8xf32>
    %c4_i32 = arith.constant 4 : i32
    %56 = vector.broadcast %c4_i32 : i32 to vector<8x8xi32>
    %57 = arith.cmpi eq, %18, %56 : vector<8x8xi32>
    %58 = arith.extui %57 : vector<8x8xi1> to vector<8x8xi32>
    %59 = arith.sitofp %58 : vector<8x8xi32> to vector<8x8xf32>
    %c0_20 = arith.constant 0 : index
    %c0_21 = arith.constant 0 : index
    %60 = vector.load %arg9[%c0_20, %c0_21] : memref<1x32xf32, #tpu.memory_space<vmem>>, vector<1x32xf32>
    %61 = vector.extract_strided_slice %15 {offsets = [0, 0], sizes = [8, 16], strides = [1, 1]} : vector<8x96xf32> to vector<8x16xf32>
    %62 = vector.extract_strided_slice %15 {offsets = [0, 32], sizes = [8, 16], strides = [1, 1]} : vector<8x96xf32> to vector<8x16xf32>
    %63 = vector.extract_strided_slice %15 {offsets = [0, 64], sizes = [8, 16], strides = [1, 1]} : vector<8x96xf32> to vector<8x16xf32>
    %64 = arith.truncf %61 : vector<8x16xf32> to vector<8x16xbf16>
    %65 = arith.truncf %62 : vector<8x16xf32> to vector<8x16xbf16>
    %cst_22 = arith.constant dense<0.000000e+00> : vector<8x8xf32>
    %66 = tpu.matmul %64, %65, %cst_22 {dimension_numbers = #tpu.dot_dimension_numbers<[1], [1], [0], [0], [0, 0, 1, 0], [], []>} : vector<8x16xbf16>, vector<8x16xbf16>, vector<8x8xf32> -> vector<8x8xf32>
    %cst_23 = arith.constant dense<0.000000e+00> : vector<8x9xf32>
    %67 = tpu.matmul %64, %6, %cst_23 {dimension_numbers = #tpu.dot_dimension_numbers<[1], [1], [0], [0], [0, 0, 1, 0], [], []>} : vector<8x16xbf16>, vector<9x16xbf16>, vector<8x9xf32> -> vector<8x9xf32>
    %68 = vector.extract_strided_slice %67 {offsets = [0, 0], sizes = [8, 1], strides = [1, 1]} : vector<8x9xf32> to vector<8x1xf32>
    %69 = vector.broadcast %68 : vector<8x1xf32> to vector<8x8xf32>
    %70 = arith.mulf %27, %69 : vector<8x8xf32>
    %71 = arith.addf %66, %70 : vector<8x8xf32>
    %72 = vector.extract_strided_slice %67 {offsets = [0, 1], sizes = [8, 1], strides = [1, 1]} : vector<8x9xf32> to vector<8x1xf32>
    %73 = vector.broadcast %72 : vector<8x1xf32> to vector<8x8xf32>
    %74 = arith.mulf %31, %73 : vector<8x8xf32>
    %75 = arith.addf %71, %74 : vector<8x8xf32>
    %76 = vector.extract_strided_slice %67 {offsets = [0, 2], sizes = [8, 1], strides = [1, 1]} : vector<8x9xf32> to vector<8x1xf32>
    %77 = vector.broadcast %76 : vector<8x1xf32> to vector<8x8xf32>
    %78 = arith.mulf %35, %77 : vector<8x8xf32>
    %79 = arith.addf %75, %78 : vector<8x8xf32>
    %80 = vector.extract_strided_slice %67 {offsets = [0, 3], sizes = [8, 1], strides = [1, 1]} : vector<8x9xf32> to vector<8x1xf32>
    %81 = vector.broadcast %80 : vector<8x1xf32> to vector<8x8xf32>
    %82 = arith.mulf %39, %81 : vector<8x8xf32>
    %83 = arith.addf %79, %82 : vector<8x8xf32>
    %84 = vector.extract_strided_slice %67 {offsets = [0, 4], sizes = [8, 1], strides = [1, 1]} : vector<8x9xf32> to vector<8x1xf32>
    %85 = vector.broadcast %84 : vector<8x1xf32> to vector<8x8xf32>
    %86 = arith.mulf %43, %85 : vector<8x8xf32>
    %87 = arith.addf %83, %86 : vector<8x8xf32>
    %88 = vector.extract_strided_slice %67 {offsets = [0, 5], sizes = [8, 1], strides = [1, 1]} : vector<8x9xf32> to vector<8x1xf32>
    %89 = vector.broadcast %88 : vector<8x1xf32> to vector<8x8xf32>
    %90 = arith.mulf %47, %89 : vector<8x8xf32>
    %91 = arith.addf %87, %90 : vector<8x8xf32>
    %92 = vector.extract_strided_slice %67 {offsets = [0, 6], sizes = [8, 1], strides = [1, 1]} : vector<8x9xf32> to vector<8x1xf32>
    %93 = vector.broadcast %92 : vector<8x1xf32> to vector<8x8xf32>
    %94 = arith.mulf %51, %93 : vector<8x8xf32>
    %95 = arith.addf %91, %94 : vector<8x8xf32>
    %96 = vector.extract_strided_slice %67 {offsets = [0, 7], sizes = [8, 1], strides = [1, 1]} : vector<8x9xf32> to vector<8x1xf32>
    %97 = vector.broadcast %96 : vector<8x1xf32> to vector<8x8xf32>
    %98 = arith.mulf %55, %97 : vector<8x8xf32>
    %99 = arith.addf %95, %98 : vector<8x8xf32>
    %100 = vector.extract_strided_slice %67 {offsets = [0, 8], sizes = [8, 1], strides = [1, 1]} : vector<8x9xf32> to vector<8x1xf32>
    %101 = vector.broadcast %100 : vector<8x1xf32> to vector<8x8xf32>
    %102 = arith.mulf %59, %101 : vector<8x8xf32>
    %103 = arith.addf %99, %102 : vector<8x8xf32>
    %cst_24 = arith.constant -1.000000e+04 : f32
    %104 = vector.broadcast %cst_24 : f32 to vector<8x8xf32>
    %105 = arith.select %23, %104, %103 : vector<8x8xi1>, vector<8x8xf32>
    %cst_25 = arith.constant dense<0xFF800000> : vector<8xf32>
    %106 = vector.multi_reduction <maximumf>, %105, %cst_25 [1] : vector<8x8xf32> to vector<8xf32>
    %107 = vector.shape_cast %106 : vector<8xf32> to vector<8x1xf32>
    %108 = vector.broadcast %107 : vector<8x1xf32> to vector<8x8xf32>
    %109 = arith.subf %105, %108 : vector<8x8xf32>
    %110 = math.exp %109 : vector<8x8xf32>
    %cst_26 = arith.constant dense<0.000000e+00> : vector<8xf32>
    %111 = vector.multi_reduction <add>, %110, %cst_26 [1] : vector<8x8xf32> to vector<8xf32>
    %112 = vector.shape_cast %111 : vector<8xf32> to vector<8x1xf32>
    %113 = tpu.reciprocal %112 : vector<8x1xf32> -> vector<8x1xf32>
    %114 = vector.broadcast %113 : vector<8x1xf32> to vector<8x8xf32>
    %115 = arith.mulf %110, %114 : vector<8x8xf32>
    %116 = arith.truncf %115 : vector<8x8xf32> to vector<8x8xbf16>
    %117 = arith.truncf %63 : vector<8x16xf32> to vector<8x16xbf16>
    %cst_27 = arith.constant dense<0.000000e+00> : vector<8x16xf32>
    %118 = tpu.matmul %116, %117, %cst_27 {dimension_numbers = #tpu.dot_dimension_numbers<[1], [0], [0], [1], [0, 0, 1, 1], [], []>} : vector<8x8xbf16>, vector<8x16xbf16>, vector<8x16xf32> -> vector<8x16xf32>
    %119 = arith.mulf %27, %115 : vector<8x8xf32>
    %cst_28 = arith.constant dense<0.000000e+00> : vector<8xf32>
    %120 = vector.multi_reduction <add>, %119, %cst_28 [1] : vector<8x8xf32> to vector<8xf32>
    %121 = vector.shape_cast %120 : vector<8xf32> to vector<8x1xf32>
    %122 = arith.mulf %31, %115 : vector<8x8xf32>
    %cst_29 = arith.constant dense<0.000000e+00> : vector<8xf32>
    %123 = vector.multi_reduction <add>, %122, %cst_29 [1] : vector<8x8xf32> to vector<8xf32>
    %124 = vector.shape_cast %123 : vector<8xf32> to vector<8x1xf32>
    %125 = arith.mulf %35, %115 : vector<8x8xf32>
    %cst_30 = arith.constant dense<0.000000e+00> : vector<8xf32>
    %126 = vector.multi_reduction <add>, %125, %cst_30 [1] : vector<8x8xf32> to vector<8xf32>
    %127 = vector.shape_cast %126 : vector<8xf32> to vector<8x1xf32>
    %128 = arith.mulf %39, %115 : vector<8x8xf32>
    %cst_31 = arith.constant dense<0.000000e+00> : vector<8xf32>
    %129 = vector.multi_reduction <add>, %128, %cst_31 [1] : vector<8x8xf32> to vector<8xf32>
    %130 = vector.shape_cast %129 : vector<8xf32> to vector<8x1xf32>
    %131 = arith.mulf %43, %115 : vector<8x8xf32>
    %cst_32 = arith.constant dense<0.000000e+00> : vector<8xf32>
    %132 = vector.multi_reduction <add>, %131, %cst_32 [1] : vector<8x8xf32> to vector<8xf32>
    %133 = vector.shape_cast %132 : vector<8xf32> to vector<8x1xf32>
    %134 = arith.mulf %47, %115 : vector<8x8xf32>
    %cst_33 = arith.constant dense<0.000000e+00> : vector<8xf32>
    %135 = vector.multi_reduction <add>, %134, %cst_33 [1] : vector<8x8xf32> to vector<8xf32>
    %136 = vector.shape_cast %135 : vector<8xf32> to vector<8x1xf32>
    %137 = arith.mulf %51, %115 : vector<8x8xf32>
    %cst_34 = arith.constant dense<0.000000e+00> : vector<8xf32>
    %138 = vector.multi_reduction <add>, %137, %cst_34 [1] : vector<8x8xf32> to vector<8xf32>
    %139 = vector.shape_cast %138 : vector<8xf32> to vector<8x1xf32>
    %140 = arith.mulf %55, %115 : vector<8x8xf32>
    %cst_35 = arith.constant dense<0.000000e+00> : vector<8xf32>
    %141 = vector.multi_reduction <add>, %140, %cst_35 [1] : vector<8x8xf32> to vector<8xf32>
    %142 = vector.shape_cast %141 : vector<8xf32> to vector<8x1xf32>
    %143 = arith.mulf %59, %115 : vector<8x8xf32>
    %cst_36 = arith.constant dense<0.000000e+00> : vector<8xf32>
    %144 = vector.multi_reduction <add>, %143, %cst_36 [1] : vector<8x8xf32> to vector<8xf32>
    %145 = vector.shape_cast %144 : vector<8xf32> to vector<8x1xf32>
    %146 = tpu.concatenate %121, %124, %127, %130, %133, %136, %139, %142, %145 in 1 : vector<8x1xf32>, vector<8x1xf32>, vector<8x1xf32>, vector<8x1xf32>, vector<8x1xf32>, vector<8x1xf32>, vector<8x1xf32>, vector<8x1xf32>, vector<8x1xf32> -> vector<8x9xf32>
    %147 = arith.truncf %146 : vector<8x9xf32> to vector<8x9xbf16>
    %cst_37 = arith.constant dense<0.000000e+00> : vector<8x16xf32>
    %148 = tpu.matmul %147, %7, %cst_37 {dimension_numbers = #tpu.dot_dimension_numbers<[1], [0], [0], [1], [0, 0, 1, 1], [], []>} : vector<8x9xbf16>, vector<9x16xbf16>, vector<8x16xf32> -> vector<8x16xf32>
    %149 = arith.addf %118, %148 : vector<8x16xf32>
    %150 = arith.truncf %149 : vector<8x16xf32> to vector<8x16xbf16>
    %c0_38 = arith.constant 0 : index
    %c0_39 = arith.constant 0 : index
    %151 = vector.load %arg8[%c0_38, %c0_39] : memref<32x32xbf16, #tpu.memory_space<vmem>>, vector<16x32xbf16>
    %cst_40 = arith.constant dense<0.000000e+00> : vector<8x32xf32>
    %152 = tpu.matmul %150, %151, %cst_40 {dimension_numbers = #tpu.dot_dimension_numbers<[1], [0], [0], [1], [0, 0, 1, 1], [], []>} : vector<8x16xbf16>, vector<16x32xbf16>, vector<8x32xf32> -> vector<8x32xf32>
    %153 = vector.broadcast %60 : vector<1x32xf32> to vector<8x32xf32>
    %154 = arith.addf %153, %152 : vector<8x32xf32>
    %155 = vector.extract_strided_slice %15 {offsets = [0, 16], sizes = [8, 16], strides = [1, 1]} : vector<8x96xf32> to vector<8x16xf32>
    %156 = vector.extract_strided_slice %15 {offsets = [0, 48], sizes = [8, 16], strides = [1, 1]} : vector<8x96xf32> to vector<8x16xf32>
    %157 = vector.extract_strided_slice %15 {offsets = [0, 80], sizes = [8, 16], strides = [1, 1]} : vector<8x96xf32> to vector<8x16xf32>
    %158 = arith.truncf %155 : vector<8x16xf32> to vector<8x16xbf16>
    %159 = arith.truncf %156 : vector<8x16xf32> to vector<8x16xbf16>
    %cst_41 = arith.constant dense<0.000000e+00> : vector<8x8xf32>
    %160 = tpu.matmul %158, %159, %cst_41 {dimension_numbers = #tpu.dot_dimension_numbers<[1], [1], [0], [0], [0, 0, 1, 0], [], []>} : vector<8x16xbf16>, vector<8x16xbf16>, vector<8x8xf32> -> vector<8x8xf32>
    %cst_42 = arith.constant dense<0.000000e+00> : vector<8x9xf32>
    %161 = tpu.matmul %158, %6, %cst_42 {dimension_numbers = #tpu.dot_dimension_numbers<[1], [1], [0], [0], [0, 0, 1, 0], [], []>} : vector<8x16xbf16>, vector<9x16xbf16>, vector<8x9xf32> -> vector<8x9xf32>
    %162 = vector.extract_strided_slice %161 {offsets = [0, 0], sizes = [8, 1], strides = [1, 1]} : vector<8x9xf32> to vector<8x1xf32>
    %163 = vector.broadcast %162 : vector<8x1xf32> to vector<8x8xf32>
    %164 = arith.mulf %27, %163 : vector<8x8xf32>
    %165 = arith.addf %160, %164 : vector<8x8xf32>
    %166 = vector.extract_strided_slice %161 {offsets = [0, 1], sizes = [8, 1], strides = [1, 1]} : vector<8x9xf32> to vector<8x1xf32>
    %167 = vector.broadcast %166 : vector<8x1xf32> to vector<8x8xf32>
    %168 = arith.mulf %31, %167 : vector<8x8xf32>
    %169 = arith.addf %165, %168 : vector<8x8xf32>
    %170 = vector.extract_strided_slice %161 {offsets = [0, 2], sizes = [8, 1], strides = [1, 1]} : vector<8x9xf32> to vector<8x1xf32>
    %171 = vector.broadcast %170 : vector<8x1xf32> to vector<8x8xf32>
    %172 = arith.mulf %35, %171 : vector<8x8xf32>
    %173 = arith.addf %169, %172 : vector<8x8xf32>
    %174 = vector.extract_strided_slice %161 {offsets = [0, 3], sizes = [8, 1], strides = [1, 1]} : vector<8x9xf32> to vector<8x1xf32>
    %175 = vector.broadcast %174 : vector<8x1xf32> to vector<8x8xf32>
    %176 = arith.mulf %39, %175 : vector<8x8xf32>
    %177 = arith.addf %173, %176 : vector<8x8xf32>
    %178 = vector.extract_strided_slice %161 {offsets = [0, 4], sizes = [8, 1], strides = [1, 1]} : vector<8x9xf32> to vector<8x1xf32>
    %179 = vector.broadcast %178 : vector<8x1xf32> to vector<8x8xf32>
    %180 = arith.mulf %43, %179 : vector<8x8xf32>
    %181 = arith.addf %177, %180 : vector<8x8xf32>
    %182 = vector.extract_strided_slice %161 {offsets = [0, 5], sizes = [8, 1], strides = [1, 1]} : vector<8x9xf32> to vector<8x1xf32>
    %183 = vector.broadcast %182 : vector<8x1xf32> to vector<8x8xf32>
    %184 = arith.mulf %47, %183 : vector<8x8xf32>
    %185 = arith.addf %181, %184 : vector<8x8xf32>
    %186 = vector.extract_strided_slice %161 {offsets = [0, 6], sizes = [8, 1], strides = [1, 1]} : vector<8x9xf32> to vector<8x1xf32>
    %187 = vector.broadcast %186 : vector<8x1xf32> to vector<8x8xf32>
    %188 = arith.mulf %51, %187 : vector<8x8xf32>
    %189 = arith.addf %185, %188 : vector<8x8xf32>
    %190 = vector.extract_strided_slice %161 {offsets = [0, 7], sizes = [8, 1], strides = [1, 1]} : vector<8x9xf32> to vector<8x1xf32>
    %191 = vector.broadcast %190 : vector<8x1xf32> to vector<8x8xf32>
    %192 = arith.mulf %55, %191 : vector<8x8xf32>
    %193 = arith.addf %189, %192 : vector<8x8xf32>
    %194 = vector.extract_strided_slice %161 {offsets = [0, 8], sizes = [8, 1], strides = [1, 1]} : vector<8x9xf32> to vector<8x1xf32>
    %195 = vector.broadcast %194 : vector<8x1xf32> to vector<8x8xf32>
    %196 = arith.mulf %59, %195 : vector<8x8xf32>
    %197 = arith.addf %193, %196 : vector<8x8xf32>
    %cst_43 = arith.constant -1.000000e+04 : f32
    %198 = vector.broadcast %cst_43 : f32 to vector<8x8xf32>
    %199 = arith.select %23, %198, %197 : vector<8x8xi1>, vector<8x8xf32>
    %cst_44 = arith.constant dense<0xFF800000> : vector<8xf32>
    %200 = vector.multi_reduction <maximumf>, %199, %cst_44 [1] : vector<8x8xf32> to vector<8xf32>
    %201 = vector.shape_cast %200 : vector<8xf32> to vector<8x1xf32>
    %202 = vector.broadcast %201 : vector<8x1xf32> to vector<8x8xf32>
    %203 = arith.subf %199, %202 : vector<8x8xf32>
    %204 = math.exp %203 : vector<8x8xf32>
    %cst_45 = arith.constant dense<0.000000e+00> : vector<8xf32>
    %205 = vector.multi_reduction <add>, %204, %cst_45 [1] : vector<8x8xf32> to vector<8xf32>
    %206 = vector.shape_cast %205 : vector<8xf32> to vector<8x1xf32>
    %207 = tpu.reciprocal %206 : vector<8x1xf32> -> vector<8x1xf32>
    %208 = vector.broadcast %207 : vector<8x1xf32> to vector<8x8xf32>
    %209 = arith.mulf %204, %208 : vector<8x8xf32>
    %210 = arith.truncf %209 : vector<8x8xf32> to vector<8x8xbf16>
    %211 = arith.truncf %157 : vector<8x16xf32> to vector<8x16xbf16>
    %cst_46 = arith.constant dense<0.000000e+00> : vector<8x16xf32>
    %212 = tpu.matmul %210, %211, %cst_46 {dimension_numbers = #tpu.dot_dimension_numbers<[1], [0], [0], [1], [0, 0, 1, 1], [], []>} : vector<8x8xbf16>, vector<8x16xbf16>, vector<8x16xf32> -> vector<8x16xf32>
    %213 = arith.mulf %27, %209 : vector<8x8xf32>
    %cst_47 = arith.constant dense<0.000000e+00> : vector<8xf32>
    %214 = vector.multi_reduction <add>, %213, %cst_47 [1] : vector<8x8xf32> to vector<8xf32>
    %215 = vector.shape_cast %214 : vector<8xf32> to vector<8x1xf32>
    %216 = arith.mulf %31, %209 : vector<8x8xf32>
    %cst_48 = arith.constant dense<0.000000e+00> : vector<8xf32>
    %217 = vector.multi_reduction <add>, %216, %cst_48 [1] : vector<8x8xf32> to vector<8xf32>
    %218 = vector.shape_cast %217 : vector<8xf32> to vector<8x1xf32>
    %219 = arith.mulf %35, %209 : vector<8x8xf32>
    %cst_49 = arith.constant dense<0.000000e+00> : vector<8xf32>
    %220 = vector.multi_reduction <add>, %219, %cst_49 [1] : vector<8x8xf32> to vector<8xf32>
    %221 = vector.shape_cast %220 : vector<8xf32> to vector<8x1xf32>
    %222 = arith.mulf %39, %209 : vector<8x8xf32>
    %cst_50 = arith.constant dense<0.000000e+00> : vector<8xf32>
    %223 = vector.multi_reduction <add>, %222, %cst_50 [1] : vector<8x8xf32> to vector<8xf32>
    %224 = vector.shape_cast %223 : vector<8xf32> to vector<8x1xf32>
    %225 = arith.mulf %43, %209 : vector<8x8xf32>
    %cst_51 = arith.constant dense<0.000000e+00> : vector<8xf32>
    %226 = vector.multi_reduction <add>, %225, %cst_51 [1] : vector<8x8xf32> to vector<8xf32>
    %227 = vector.shape_cast %226 : vector<8xf32> to vector<8x1xf32>
    %228 = arith.mulf %47, %209 : vector<8x8xf32>
    %cst_52 = arith.constant dense<0.000000e+00> : vector<8xf32>
    %229 = vector.multi_reduction <add>, %228, %cst_52 [1] : vector<8x8xf32> to vector<8xf32>
    %230 = vector.shape_cast %229 : vector<8xf32> to vector<8x1xf32>
    %231 = arith.mulf %51, %209 : vector<8x8xf32>
    %cst_53 = arith.constant dense<0.000000e+00> : vector<8xf32>
    %232 = vector.multi_reduction <add>, %231, %cst_53 [1] : vector<8x8xf32> to vector<8xf32>
    %233 = vector.shape_cast %232 : vector<8xf32> to vector<8x1xf32>
    %234 = arith.mulf %55, %209 : vector<8x8xf32>
    %cst_54 = arith.constant dense<0.000000e+00> : vector<8xf32>
    %235 = vector.multi_reduction <add>, %234, %cst_54 [1] : vector<8x8xf32> to vector<8xf32>
    %236 = vector.shape_cast %235 : vector<8xf32> to vector<8x1xf32>
    %237 = arith.mulf %59, %209 : vector<8x8xf32>
    %cst_55 = arith.constant dense<0.000000e+00> : vector<8xf32>
    %238 = vector.multi_reduction <add>, %237, %cst_55 [1] : vector<8x8xf32> to vector<8xf32>
    %239 = vector.shape_cast %238 : vector<8xf32> to vector<8x1xf32>
    %240 = tpu.concatenate %215, %218, %221, %224, %227, %230, %233, %236, %239 in 1 : vector<8x1xf32>, vector<8x1xf32>, vector<8x1xf32>, vector<8x1xf32>, vector<8x1xf32>, vector<8x1xf32>, vector<8x1xf32>, vector<8x1xf32>, vector<8x1xf32> -> vector<8x9xf32>
    %241 = arith.truncf %240 : vector<8x9xf32> to vector<8x9xbf16>
    %cst_56 = arith.constant dense<0.000000e+00> : vector<8x16xf32>
    %242 = tpu.matmul %241, %7, %cst_56 {dimension_numbers = #tpu.dot_dimension_numbers<[1], [0], [0], [1], [0, 0, 1, 1], [], []>} : vector<8x9xbf16>, vector<9x16xbf16>, vector<8x16xf32> -> vector<8x16xf32>
    %243 = arith.addf %212, %242 : vector<8x16xf32>
    %244 = arith.truncf %243 : vector<8x16xf32> to vector<8x16xbf16>
    %c16 = arith.constant 16 : index
    %c0_57 = arith.constant 0 : index
    %245 = vector.load %arg8[%c16, %c0_57] : memref<32x32xbf16, #tpu.memory_space<vmem>>, vector<16x32xbf16>
    %cst_58 = arith.constant dense<0.000000e+00> : vector<8x32xf32>
    %246 = tpu.matmul %244, %245, %cst_58 {dimension_numbers = #tpu.dot_dimension_numbers<[1], [0], [0], [1], [0, 0, 1, 1], [], []>} : vector<8x16xbf16>, vector<16x32xbf16>, vector<8x32xf32> -> vector<8x32xf32>
    %247 = arith.addf %154, %246 : vector<8x32xf32>
    %248 = arith.addf %1, %247 : vector<8x32xf32>
    %cst_59 = arith.constant dense<0.000000e+00> : vector<8xf32>
    %249 = vector.multi_reduction <add>, %248, %cst_59 [1] : vector<8x32xf32> to vector<8xf32>
    %250 = vector.shape_cast %249 : vector<8xf32> to vector<8x1xf32>
    %cst_60 = arith.constant 3.200000e+01 : f32
    %251 = vector.broadcast %cst_60 : f32 to vector<8x1xf32>
    %252 = arith.divf %250, %251 : vector<8x1xf32>
    %253 = vector.broadcast %252 : vector<8x1xf32> to vector<8x32xf32>
    %254 = arith.subf %248, %253 : vector<8x32xf32>
    %255 = arith.mulf %254, %254 : vector<8x32xf32>
    %cst_61 = arith.constant dense<0.000000e+00> : vector<8xf32>
    %256 = vector.multi_reduction <add>, %255, %cst_61 [1] : vector<8x32xf32> to vector<8xf32>
    %257 = vector.shape_cast %256 : vector<8xf32> to vector<8x1xf32>
    %cst_62 = arith.constant 3.200000e+01 : f32
    %258 = vector.broadcast %cst_62 : f32 to vector<8x1xf32>
    %259 = arith.divf %257, %258 : vector<8x1xf32>
    %260 = vector.broadcast %252 : vector<8x1xf32> to vector<8x32xf32>
    %261 = arith.subf %248, %260 : vector<8x32xf32>
    %cst_63 = arith.constant 9.99999974E-6 : f32
    %262 = vector.broadcast %cst_63 : f32 to vector<8x1xf32>
    %263 = arith.addf %259, %262 : vector<8x1xf32>
    %264 = math.rsqrt %263 : vector<8x1xf32>
    %265 = vector.broadcast %264 : vector<8x1xf32> to vector<8x32xf32>
    %266 = arith.mulf %261, %265 : vector<8x32xf32>
    %c0_64 = arith.constant 0 : index
    %c0_65 = arith.constant 0 : index
    %267 = vector.load %arg10[%c0_64, %c0_65] : memref<1x32xf32, #tpu.memory_space<vmem>>, vector<1x32xf32>
    %268 = vector.broadcast %267 : vector<1x32xf32> to vector<8x32xf32>
    %269 = arith.mulf %266, %268 : vector<8x32xf32>
    %c0_66 = arith.constant 0 : index
    %c0_67 = arith.constant 0 : index
    %270 = vector.load %arg11[%c0_66, %c0_67] : memref<1x32xf32, #tpu.memory_space<vmem>>, vector<1x32xf32>
    %271 = vector.broadcast %270 : vector<1x32xf32> to vector<8x32xf32>
    %272 = arith.addf %269, %271 : vector<8x32xf32>
    %c0_68 = arith.constant 0 : index
    %c0_69 = arith.constant 0 : index
    %c0_70 = arith.constant 0 : index
    %273 = vector.load %arg12[%c0_68, %c0_69, %c0_70] : memref<1x8x32xf32, #tpu.memory_space<vmem>>, vector<1x8x32xf32>
    %274 = vector.shape_cast %273 : vector<1x8x32xf32> to vector<8x32xf32>
    %275 = vector.shape_cast %272 : vector<8x32xf32> to vector<1x8x32xf32>
    tpu.vector_store %arg12[%c0_68, %c0_69, %c0_70], %275 {strides = array<i32>} : memref<1x8x32xf32, #tpu.memory_space<vmem>>, vector<1x8x32xf32>,
    return
  }
  func.func @transform_0(%arg0: i32) -> (i32, i32, i32) {
    %c0_i32 = arith.constant 0 : i32
    %c0_i32_0 = arith.constant 0 : i32
    %c0_i32_1 = arith.constant 0 : i32
    return %arg0, %c0_i32, %c0_i32_0 : i32, i32, i32
  }
  func.func @transform_1(%arg0: i32) -> (i32, i32, i32) {
    %c0_i32 = arith.constant 0 : i32
    %c0_i32_0 = arith.constant 0 : i32
    %c0_i32_1 = arith.constant 0 : i32
    return %arg0, %c0_i32, %c0_i32_0 : i32, i32, i32
  }
  func.func @transform_2(%arg0: i32) -> (i32, i32, i32) {
    %c0_i32 = arith.constant 0 : i32
    %c0_i32_0 = arith.constant 0 : i32
    %c0_i32_1 = arith.constant 0 : i32
    return %arg0, %c0_i32, %c0_i32_0 : i32, i32, i32
  }
  func.func @transform_3(%arg0: i32) -> (i32, i32) {
    %c0_i32 = arith.constant 0 : i32
    %c0_i32_0 = arith.constant 0 : i32
    %c0_i32_1 = arith.constant 0 : i32
    return %c0_i32, %c0_i32_0 : i32, i32
  }
  func.func @transform_4(%arg0: i32) -> (i32, i32) {
    %c0_i32 = arith.constant 0 : i32
    %c0_i32_0 = arith.constant 0 : i32
    %c0_i32_1 = arith.constant 0 : i32
    return %c0_i32, %c0_i32_0 : i32, i32
  }
  func.func @transform_5(%arg0: i32) -> (i32, i32) {
    %c0_i32 = arith.constant 0 : i32
    %c0_i32_0 = arith.constant 0 : i32
    %c0_i32_1 = arith.constant 0 : i32
    return %c0_i32, %c0_i32_0 : i32, i32
  }
  func.func @transform_6(%arg0: i32) -> (i32, i32) {
    %c0_i32 = arith.constant 0 : i32
    %c0_i32_0 = arith.constant 0 : i32
    %c0_i32_1 = arith.constant 0 : i32
    return %c0_i32, %c0_i32_0 : i32, i32
  }
  func.func @transform_7(%arg0: i32) -> (i32, i32) {
    %c0_i32 = arith.constant 0 : i32
    %c0_i32_0 = arith.constant 0 : i32
    %c0_i32_1 = arith.constant 0 : i32
    return %c0_i32, %c0_i32_0 : i32, i32
  }
  func.func @transform_8(%arg0: i32) -> (i32, i32) {
    %c0_i32 = arith.constant 0 : i32
    %c0_i32_0 = arith.constant 0 : i32
    %c0_i32_1 = arith.constant 0 : i32
    return %c0_i32, %c0_i32_0 : i32, i32
  }
  func.func @transform_9(%arg0: i32) -> (i32, i32) {
    %c0_i32 = arith.constant 0 : i32
    %c0_i32_0 = arith.constant 0 : i32
    %c0_i32_1 = arith.constant 0 : i32
    return %c0_i32, %c0_i32_0 : i32, i32
  }
  func.func @transform_10(%arg0: i32) -> (i32, i32) {
    %c0_i32 = arith.constant 0 : i32
    %c0_i32_0 = arith.constant 0 : i32
    %c0_i32_1 = arith.constant 0 : i32
    return %c0_i32, %c0_i32_0 : i32, i32
  }
  func.func @transform_11(%arg0: i32) -> (i32, i32, i32) {
    %c0_i32 = arith.constant 0 : i32
    %c0_i32_0 = arith.constant 0 : i32
    %c0_i32_1 = arith.constant 0 : i32
    return %arg0, %c0_i32, %c0_i32_0 : i32, i32, i32
  }
}

module attributes {stable_mosaic.version = 11 : i64} {
  func.func @_dense_kernel(%arg0: i32, %arg1: memref<16x32xf32, #tpu.memory_space<vmem>>, %arg2: memref<32x16xbf16, #tpu.memory_space<vmem>>, %arg3: memref<1x16xf32, #tpu.memory_space<vmem>>, %arg4: memref<16x16xf32, #tpu.memory_space<vmem>>) attributes {dimension_semantics = [#tpu.dimension_semantics<parallel>], iteration_bounds = array<i64: 1>, scalar_prefetch = 0 : i64, scratch_operands = 0 : i64, tpu.core_type = #tpu.core_type<tc>, window_params = [{transform_indices = @transform_0, window_bounds = array<i64: 16, 32>}, {pipeline_mode = #tpu.pipeline_mode<synchronous>, transform_indices = @transform_1, window_bounds = array<i64: 32, 16>}, {pipeline_mode = #tpu.pipeline_mode<synchronous>, transform_indices = @transform_2, window_bounds = array<i64: 1, 16>}, {transform_indices = @transform_3, window_bounds = array<i64: 16, 16>}]} {
    %c0 = arith.constant 0 : index
    %c0_0 = arith.constant 0 : index
    %0 = vector.load %arg1[%c0, %c0_0] : memref<16x32xf32, #tpu.memory_space<vmem>>, vector<16x32xf32>
    %1 = arith.truncf %0 : vector<16x32xf32> to vector<16x32xbf16>
    %c0_1 = arith.constant 0 : index
    %c0_2 = arith.constant 0 : index
    %2 = vector.load %arg2[%c0_1, %c0_2] : memref<32x16xbf16, #tpu.memory_space<vmem>>, vector<32x16xbf16>
    %cst = arith.constant dense<0.000000e+00> : vector<16x16xf32>
    %3 = tpu.matmul %1, %2, %cst {dimension_numbers = #tpu.dot_dimension_numbers<[1], [0], [0], [1], [0, 0, 1, 1], [], []>} : vector<16x32xbf16>, vector<32x16xbf16>, vector<16x16xf32> -> vector<16x16xf32>
    %c0_3 = arith.constant 0 : index
    %c0_4 = arith.constant 0 : index
    %4 = vector.load %arg3[%c0_3, %c0_4] : memref<1x16xf32, #tpu.memory_space<vmem>>, vector<1x16xf32>
    %5 = vector.broadcast %4 : vector<1x16xf32> to vector<16x16xf32>
    %6 = arith.addf %3, %5 : vector<16x16xf32>
    %c0_5 = arith.constant 0 : index
    %c0_6 = arith.constant 0 : index
    %7 = vector.load %arg4[%c0_5, %c0_6] : memref<16x16xf32, #tpu.memory_space<vmem>>, vector<16x16xf32>
    tpu.vector_store %arg4[%c0_5, %c0_6], %6 {strides = array<i32>} : memref<16x16xf32, #tpu.memory_space<vmem>>, vector<16x16xf32>,
    return
  }
  func.func @transform_0(%arg0: i32) -> (i32, i32) {
    %c0_i32 = arith.constant 0 : i32
    %c0_i32_0 = arith.constant 0 : i32
    return %arg0, %c0_i32 : i32, i32
  }
  func.func @transform_1(%arg0: i32) -> (i32, i32) {
    %c0_i32 = arith.constant 0 : i32
    %c0_i32_0 = arith.constant 0 : i32
    %c0_i32_1 = arith.constant 0 : i32
    return %c0_i32, %c0_i32_0 : i32, i32
  }
  func.func @transform_2(%arg0: i32) -> (i32, i32) {
    %c0_i32 = arith.constant 0 : i32
    %c0_i32_0 = arith.constant 0 : i32
    %c0_i32_1 = arith.constant 0 : i32
    return %c0_i32, %c0_i32_0 : i32, i32
  }
  func.func @transform_3(%arg0: i32) -> (i32, i32) {
    %c0_i32 = arith.constant 0 : i32
    %c0_i32_0 = arith.constant 0 : i32
    return %arg0, %c0_i32 : i32, i32
  }
}

</mosaic_0001>

<llo_original>
// kernel: text_encoder_forward.9
$region0: #{text_encoder_forward.9}
  #allocation0 [shape = 'u32[]', space=smem, size = 0x4, offset = 0x4, fixed_abs, tag = 'smem constant byte address 0x4 - core index']
  #allocation1 [shape = 'u32[144,128]{1,0:T(1,128)}', space=vmem, size = 0x12000, scoped, tag = 'internal scratch']
  %s0 = inlined_call_operand.vmem [shape: f32[16,32], index: 0, kind: input, shape index: {}]
  %s1 = inlined_call_operand.vmem [shape: bf16[32,16], index: 1, kind: input, shape index: {}]
  %s2 = inlined_call_operand.vmem [shape: f32[1,16], index: 2, kind: input, shape index: {}]
  %s3 = inlined_call_operand.vmem [shape: f32[16,16], index: 3, kind: output, shape index: {}]
  %s4 = sld [smem:[#allocation0]]
  $region22: #{text_encoder_forward.9} parent=0
    _
  %s6 = ssub.s32 1, %s4
  %s7 = scalar_select 0, %s6, %s4
  // Predicated region
  $region2: #{text_encoder_forward.9} parent=0 // pred_check
    _
  $region3: #{text_encoder_forward.9} parent=0 // pred_check_branch
    %9 = sbr.rel (0) target = $region5
  $region4: #{text_encoder_forward.9} parent=0 // pred_region
    _
  $region5: #{text_encoder_forward.9} parent=0 // pred_fallthru
    _
  // Predicated region
  $region6: #{text_encoder_forward.9} parent=0 // pred_check
    _
  $region7: #{text_encoder_forward.9} parent=0 // pred_check_branch
    %11 = sbr.rel (0) target = $region9
  $region8: #{text_encoder_forward.9} parent=0 // pred_region
    _
  $region9: #{text_encoder_forward.9} parent=0 // pred_fallthru
    _
  // Predicated region
  $region10: #{text_encoder_forward.9} parent=0 // pred_check
    _
  $region11: #{text_encoder_forward.9} parent=0 // pred_check_branch
    %13 = sbr.rel (0) target = $region13
  $region12: #{text_encoder_forward.9} parent=0 // pred_region
    _
  $region13: #{text_encoder_forward.9} parent=0 // pred_fallthru
    _
  %v15 = vld [vmem:[%s0] sm:$0xff]
  %v16 = vld [vmem:[%s0 + $0x8] sm:$0xff]
  %v17 = vpack.c.bf16 %v16, %v15
  %v18 = vld [vmem:[%s1] sm:$0xf]
  %v19 = vld [vmem:[%s1 + $0x4] sm:$0xf]
  %v20 = vld [vmem:[%s1 + $0x8] sm:$0xf]
  %v21 = vld [vmem:[%s1 + $0xc] sm:$0xf]
  %v22 = vld [vmem:[%s2] sm:$0x1]
  %v24 = vlaneseq
  %v25 = vshrl.u32 %v24, 7
  %v26 = vsub.s32 0, %v25
  %v27 = vrot.slane %v22, %v26
  %v33 = vunpack.c.l.b16 %v18
  %v34 = vunpack.c.l.b16 %v19
  %v35 = vunpack.c.l.b16 %v20
  %v36 = vunpack.c.l.b16 %v21
  %v37 = vpack.c.b16 %v34, %v33
  %v38 = vpack.c.b16 %v36, %v35
  %vm41 = vcmask 261120
  %v43 = vsel %vm41, %v17, 0
  %45 = vmatprep.subr.bf16.mxu0 0
  %46 = vmatpush1.bf16.msra.mxu0 %v37
  %47 = vmatprep.subr.bf16.mxu0 0
  %48 = vmatpush1.bf16.msra.mxu0 %v38
  %49 = vmatprep.subr.bf16.mxu0 0
  %50 = vmatpush1.bf16.msra.mxu0 0
  %51 = vmatprep.subr.bf16.mxu0 0
  %52 = vmatpush1.bf16.msra.mxu0 0
  %53 = vmatprep.subr.bf16.mxu0 0
  %54 = vmatpush1.bf16.msra.mxu0 0
  %55 = vmatprep.subr.bf16.mxu0 0
  %56 = vmatpush1.bf16.msra.mxu0 0
  %57 = vmatprep.subr.bf16.mxu0 0
  %58 = vmatpush1.bf16.msra.mxu0 0
  %59 = vmatprep.subr.bf16.mxu0 0
  %60 = vmatpush1.bf16.msra.mxu0 0
  %61 = vmatprep.subr.bf16.mxu0 0
  %62 = vmatpush1.bf16.msra.mxu0 0
  %63 = vmatprep.subr.bf16.mxu0 0
  %64 = vmatpush1.bf16.msra.mxu0 0
  %65 = vmatprep.subr.bf16.mxu0 0
  %66 = vmatpush1.bf16.msra.mxu0 0
  %67 = vmatprep.subr.bf16.mxu0 0
  %68 = vmatpush1.bf16.msra.mxu0 0
  %69 = vmatprep.subr.bf16.mxu0 0
  %70 = vmatpush1.bf16.msra.mxu0 0
  %71 = vmatprep.subr.bf16.mxu0 0
  %72 = vmatpush1.bf16.msra.mxu0 0
  %73 = vmatprep.subr.bf16.mxu0 0
  %74 = vmatpush1.bf16.msra.mxu0 0
  %75 = vmatprep.subr.bf16.mxu0 0
  %76 = vmatpush1.bf16.msra.mxu0 0
  %77 = vmatprep.mubr.bf16.mxu0 0
  %78 = vmatmul.mubr.bf16.gmra.mrb[0].mxu0 %v43
  %v79 = vpop.f32.mrb[0].mxu0
  %v80 = vadd.f32 %v27, %v79
  %v81 = vpop.f32.mrb[0].mxu0
  %v82 = vpop.f32.mrb[0].mxu0
  %v83 = vadd.f32 %v27, %v82
  %v84 = vpop.f32.mrb[0].mxu0
  %85 = vdwg.mxu0
  %vm86 = vcmask 130048
  %87 = vst.msk [vmem:[%s3] sm:$0xff] %vm86, %v80
  %88 = vst.msk [vmem:[%s3 + $0x8] sm:$0xff] %vm86, %v83
  // Predicated region
  $region14: #{text_encoder_forward.9} parent=0 // pred_check
    _
  $region15: #{text_encoder_forward.9} parent=0 // pred_check_branch
    %90 = sbr.rel (0) target = $region17
  $region16: #{text_encoder_forward.9} parent=0 // pred_region
    _
  $region17: #{text_encoder_forward.9} parent=0 // pred_fallthru
    _
  // Predicated region
  $region18: #{text_encoder_forward.9} parent=0 // pred_check
    _
  $region19: #{text_encoder_forward.9} parent=0 // pred_check_branch
    %92 = sbr.rel (0) target = $region21
  $region20: #{text_encoder_forward.9} parent=0 // pred_region
    _
  $region21: #{text_encoder_forward.9} parent=0 // pred_fallthru
    _

// kernel: text_encoder_forward.6
$region0: #{text_encoder_forward.6}
  #allocation0 [shape = 'u32[]', space=smem, size = 0x4, offset = 0x4, fixed_abs, tag = 'smem constant byte address 0x4 - core index']
  #allocation1 [shape = 'u32[144,128]{1,0:T(1,128)}', space=vmem, size = 0x12000, scoped, tag = 'internal scratch']
  %s0 = inlined_call_operand.vmem [shape: f32[2,8,32], index: 0, kind: input, shape index: {}]
  %s1 = inlined_call_operand.vmem [shape: f32[2,8,1], index: 1, kind: input, shape index: {}]
  %s2 = inlined_call_operand.vmem [shape: bf16[3,32,64], index: 2, kind: input, shape index: {}]
  %s3 = inlined_call_operand.vmem [shape: f32[1,64], index: 3, kind: input, shape index: {}]
  %s4 = inlined_call_operand.vmem [shape: bf16[3,64,32], index: 4, kind: input, shape index: {}]
  %s5 = inlined_call_operand.vmem [shape: f32[1,32], index: 5, kind: input, shape index: {}]
  %s6 = inlined_call_operand.vmem [shape: f32[1,32], index: 6, kind: input, shape index: {}]
  %s7 = inlined_call_operand.vmem [shape: f32[1,32], index: 7, kind: input, shape index: {}]
  %s8 = inlined_call_operand.vmem [shape: f32[2,8,32], index: 8, kind: output, shape index: {}]
  %s9 = sld [smem:[#allocation0]]
  $region65: #{text_encoder_forward.6} parent=0
    _
  %s11 = ssub.s32 1, %s9
  %s12 = scalar_select 0, %s11, %s9
  loop: start=0, step=1, limit=4
  $region2: #{text_encoder_forward.6} parent=0 // loop_pre_header
    _
  $region3: #{text_encoder_forward.6} parent=0 // loop_header
    %s14 = sphi 0, %s18
    %p15 = scmp.ge.s32.totalorder %s14, 4
    %s24 = sphi 0, %s26
    %s27 = sphi 0, %s24
    %s28 = sphi 0, %s27
    %s44 = sphi 0, %s28
    %s50 = sphi 0, %s52
    %s53 = sphi 0, %s50
    %s54 = sphi 0, %s53
    %s70 = sphi 0, %s54
    %s74 = sphi 0, %s74
    %s76 = sphi 0, %s74
    %s77 = sphi 0, %s76
    %s91 = sphi 0, %s77
    %s95 = sphi 0, %s95
    %s97 = sphi 0, %s95
    %s98 = sphi 0, %s97
    %s112 = sphi 0, %s98
    %s116 = sphi 0, %s116
    %s118 = sphi 0, %s116
    %s119 = sphi 0, %s118
    %s133 = sphi 0, %s119
    %s137 = sphi 0, %s137
    %s139 = sphi 0, %s137
    %s140 = sphi 0, %s139
    %s154 = sphi 0, %s140
    %s158 = sphi 0, %s158
    %s160 = sphi 0, %s158
    %s161 = sphi 0, %s160
    %s175 = sphi 0, %s161
    %s179 = sphi 0, %s179
    %s181 = sphi 0, %s179
    %s182 = sphi 0, %s181
    %s196 = sphi 0, %s182
    %s202 = sphi 0, %s204
    %s205 = sphi 0, %s202
    %s206 = sphi 0, %s205
    %s222 = sphi 0, %s206
  $region4: #{text_encoder_forward.6} parent=0 // loop_header_branch
    %17 = sbr.rel (%p15) target = $region8
  $region5: #{text_encoder_forward.6} parent=0 // loop_body
    %s19 = ssub.s32 %s14, 1
    %s20 = ssub.s32 %s14, 2
    %s21 = sadd.s32 %s14, 1
    %s22 = ssub.s32 %s14, %s21
    %p23 = scmp.eq.s32.totalorder %s22, 0
    %s25 = sadd.s32 %s24, 1
    %s26 = scalar_select %p23, %s24, %s25
    %p29 = pneg %p23
    %p30 = scmp.eq.s32.totalorder %s14, 1
    %p31 = por %p29, %p30
    %p32 = scmp.ne.s32.totalorder %s24, %s27
    %p33 = scmp.eq.s32.totalorder %s14, 0
    %p34 = por %p32, %p33
    %p35 = scmp.ne.s32.totalorder %s24, %s27
    %p36 = scmp.eq.s32.totalorder %s19, 1
    %p37 = por %p35, %p36
    %p38 = scmp.ne.s32.totalorder %s27, %s28
    %p39 = scmp.eq.s32.totalorder %s19, 0
    %p40 = por %p38, %p39
    %p41 = scmp.ne.s32.totalorder %s27, %s28
    %p42 = scmp.eq.s32.totalorder %s20, 1
    %p43 = por %p41, %p42
    %p45 = scmp.ne.s32.totalorder %s28, %s44
    %p46 = scmp.eq.s32.totalorder %s20, 0
    %p47 = por %p45, %p46
    %s48 = ssub.s32 %s14, %s21
    %p49 = scmp.eq.s32.totalorder %s48, 0
    %s51 = sadd.s32 %s50, 1
    %s52 = scalar_select %p49, %s50, %s51
    %p55 = pneg %p49
    %p56 = scmp.eq.s32.totalorder %s14, 1
    %p57 = por %p55, %p56
    %p58 = scmp.ne.s32.totalorder %s50, %s53
    %p59 = scmp.eq.s32.totalorder %s14, 0
    %p60 = por %p58, %p59
    %p61 = scmp.ne.s32.totalorder %s50, %s53
    %p62 = scmp.eq.s32.totalorder %s19, 1
    %p63 = por %p61, %p62
    %p64 = scmp.ne.s32.totalorder %s53, %s54
    %p65 = scmp.eq.s32.totalorder %s19, 0
    %p66 = por %p64, %p65
    %p67 = scmp.ne.s32.totalorder %s53, %s54
    %p68 = scmp.eq.s32.totalorder %s20, 1
    %p69 = por %p67, %p68
    %p71 = scmp.ne.s32.totalorder %s54, %s70
    %p72 = scmp.eq.s32.totalorder %s20, 0
    %p73 = por %p71, %p72
    %s75 = sadd.s32 %s74, 1
    %p78 = scmp.eq.s32.totalorder %s14, 1
    %p79 = scmp.ne.s32.totalorder %s74, %s76
    %p80 = scmp.eq.s32.totalorder %s14, 0
    %p81 = por %p79, %p80
    %p82 = scmp.ne.s32.totalorder %s74, %s76
    %p83 = scmp.eq.s32.totalorder %s19, 1
    %p84 = por %p82, %p83
    %p85 = scmp.ne.s32.totalorder %s76, %s77
    %p86 = scmp.eq.s32.totalorder %s19, 0
    %p87 = por %p85, %p86
    %p88 = scmp.ne.s32.totalorder %s76, %s77
    %p89 = scmp.eq.s32.totalorder %s20, 1
    %p90 = por %p88, %p89
    %p92 = scmp.ne.s32.totalorder %s77, %s91
    %p93 = scmp.eq.s32.totalorder %s20, 0
    %p94 = por %p92, %p93
    %s96 = sadd.s32 %s95, 1
    %p99 = scmp.eq.s32.totalorder %s14, 1
    %p100 = scmp.ne.s32.totalorder %s95, %s97
    %p101 = scmp.eq.s32.totalorder %s14, 0
    %p102 = por %p100, %p101
    %p103 = scmp.ne.s32.totalorder %s95, %s97
    %p104 = scmp.eq.s32.totalorder %s19, 1
    %p105 = por %p103, %p104
    %p106 = scmp.ne.s32.totalorder %s97, %s98
    %p107 = scmp.eq.s32.totalorder %s19, 0
    %p108 = por %p106, %p107
    %p109 = scmp.ne.s32.totalorder %s97, %s98
    %p110 = scmp.eq.s32.totalorder %s20, 1
    %p111 = por %p109, %p110
    %p113 = scmp.ne.s32.totalorder %s98, %s112
    %p114 = scmp.eq.s32.totalorder %s20, 0
    %p115 = por %p113, %p114
    %s117 = sadd.s32 %s116, 1
    %p120 = scmp.eq.s32.totalorder %s14, 1
    %p121 = scmp.ne.s32.totalorder %s116, %s118
    %p122 = scmp.eq.s32.totalorder %s14, 0
    %p123 = por %p121, %p122
    %p124 = scmp.ne.s32.totalorder %s116, %s118
    %p125 = scmp.eq.s32.totalorder %s19, 1
    %p126 = por %p124, %p125
    %p127 = scmp.ne.s32.totalorder %s118, %s119
    %p128 = scmp.eq.s32.totalorder %s19, 0
    %p129 = por %p127, %p128
    %p130 = scmp.ne.s32.totalorder %s118, %s119
    %p131 = scmp.eq.s32.totalorder %s20, 1
    %p132 = por %p130, %p131
    %p134 = scmp.ne.s32.totalorder %s119, %s133
    %p135 = scmp.eq.s32.totalorder %s20, 0
    %p136 = por %p134, %p135
    %s138 = sadd.s32 %s137, 1
    %p141 = scmp.eq.s32.totalorder %s14, 1
    %p142 = scmp.ne.s32.totalorder %s137, %s139
    %p143 = scmp.eq.s32.totalorder %s14, 0
    %p144 = por %p142, %p143
    %p145 = scmp.ne.s32.totalorder %s137, %s139
    %p146 = scmp.eq.s32.totalorder %s19, 1
    %p147 = por %p145, %p146
    %p148 = scmp.ne.s32.totalorder %s139, %s140
    %p149 = scmp.eq.s32.totalorder %s19, 0
    %p150 = por %p148, %p149
    %p151 = scmp.ne.s32.totalorder %s139, %s140
    %p152 = scmp.eq.s32.totalorder %s20, 1
    %p153 = por %p151, %p152
    %p155 = scmp.ne.s32.totalorder %s140, %s154
    %p156 = scmp.eq.s32.totalorder %s20, 0
    %p157 = por %p155, %p156
    %s159 = sadd.s32 %s158, 1
    %p162 = scmp.eq.s32.totalorder %s14, 1
    %p163 = scmp.ne.s32.totalorder %s158, %s160
    %p164 = scmp.eq.s32.totalorder %s14, 0
    %p165 = por %p163, %p164
    %p166 = scmp.ne.s32.totalorder %s158, %s160
    %p167 = scmp.eq.s32.totalorder %s19, 1
    %p168 = por %p166, %p167
    %p169 = scmp.ne.s32.totalorder %s160, %s161
    %p170 = scmp.eq.s32.totalorder %s19, 0
    %p171 = por %p169, %p170
    %p172 = scmp.ne.s32.totalorder %s160, %s161
    %p173 = scmp.eq.s32.totalorder %s20, 1
    %p174 = por %p172, %p173
    %p176 = scmp.ne.s32.totalorder %s161, %s175
    %p177 = scmp.eq.s32.totalorder %s20, 0
    %p178 = por %p176, %p177
    %s180 = sadd.s32 %s179, 1
    %p183 = scmp.eq.s32.totalorder %s14, 1
    %p184 = scmp.ne.s32.totalorder %s179, %s181
    %p185 = scmp.eq.s32.totalorder %s14, 0
    %p186 = por %p184, %p185
    %p187 = scmp.ne.s32.totalorder %s179, %s181
    %p188 = scmp.eq.s32.totalorder %s19, 1
    %p189 = por %p187, %p188
    %p190 = scmp.ne.s32.totalorder %s181, %s182
    %p191 = scmp.eq.s32.totalorder %s19, 0
    %p192 = por %p190, %p191
    %p193 = scmp.ne.s32.totalorder %s181, %s182
    %p194 = scmp.eq.s32.totalorder %s20, 1
    %p195 = por %p193, %p194
    %p197 = scmp.ne.s32.totalorder %s182, %s196
    %p198 = scmp.eq.s32.totalorder %s20, 0
    %p199 = por %p197, %p198
    %s200 = ssub.s32 %s14, %s21
    %p201 = scmp.eq.s32.totalorder %s200, 0
    %s203 = sadd.s32 %s202, 1
    %s204 = scalar_select %p201, %s202, %s203
    %p207 = pneg %p201
    %p208 = scmp.eq.s32.totalorder %s14, 1
    %p209 = por %p207, %p208
    %p210 = scmp.ne.s32.totalorder %s202, %s205
    %p211 = scmp.eq.s32.totalorder %s14, 0
    %p212 = por %p210, %p211
    %p213 = scmp.ne.s32.totalorder %s202, %s205
    %p214 = scmp.eq.s32.totalorder %s19, 1
    %p215 = por %p213, %p214
    %p216 = scmp.ne.s32.totalorder %s205, %s206
    %p217 = scmp.eq.s32.totalorder %s19, 0
    %p218 = por %p216, %p217
    %p219 = scmp.ne.s32.totalorder %s205, %s206
    %p220 = scmp.eq.s32.totalorder %s20, 1
    %p221 = por %p219, %p220
    %p223 = scmp.ne.s32.totalorder %s206, %s222
    %p224 = scmp.eq.s32.totalorder %s20, 0
    %p225 = por %p223, %p224
    %p226 = scmp.le.s32.totalorder 1, %s14
    %p227 = scmp.lt.s32.totalorder %s14, 3
    %p228 = pnand %p226, %p227
    %p229 = pneg %p228
    // Predicated region
    $region9: #{text_encoder_forward.6} parent=5 // pred_check
      _
    $region10: #{text_encoder_forward.6} parent=5 // pred_check_branch
      %231 = sbr.rel (%p228) target = $region12
    $region11: #{text_encoder_forward.6} parent=5 // pred_region
      %s232 = ssub.s32 %s14, 1
      // Predicated region
      $region13: #{text_encoder_forward.6} parent=11 // pred_check
        %p233 = pneg %p87
      $region14: #{text_encoder_forward.6} parent=11 // pred_check_branch
        %235 = sbr.rel (%p233) target = $region16
      $region15: #{text_encoder_forward.6} parent=11 // pred_region
        _
      $region16: #{text_encoder_forward.6} parent=11 // pred_fallthru
        _
      // Predicated region
      $region17: #{text_encoder_forward.6} parent=11 // pred_check
        %p236 = pneg %p108
      $region18: #{text_encoder_forward.6} parent=11 // pred_check_branch
        %238 = sbr.rel (%p236) target = $region20
      $region19: #{text_encoder_forward.6} parent=11 // pred_region
        _
      $region20: #{text_encoder_forward.6} parent=11 // pred_fallthru
        _
      // Predicated region
      $region21: #{text_encoder_forward.6} parent=11 // pred_check
        %p239 = pneg %p129
      $region22: #{text_encoder_forward.6} parent=11 // pred_check_branch
        %241 = sbr.rel (%p239) target = $region24
      $region23: #{text_encoder_forward.6} parent=11 // pred_region
        _
      $region24: #{text_encoder_forward.6} parent=11 // pred_fallthru
        _
      // Predicated region
      $region25: #{text_encoder_forward.6} parent=11 // pred_check
        %p242 = pneg %p150
      $region26: #{text_encoder_forward.6} parent=11 // pred_check_branch
        %244 = sbr.rel (%p242) target = $region28
      $region27: #{text_encoder_forward.6} parent=11 // pred_region
        _
      $region28: #{text_encoder_forward.6} parent=11 // pred_fallthru
        _
      // Predicated region
      $region29: #{text_encoder_forward.6} parent=11 // pred_check
        %p245 = pneg %p171
      $region30: #{text_encoder_forward.6} parent=11 // pred_check_branch
        %247 = sbr.rel (%p245) target = $region32
      $region31: #{text_encoder_forward.6} parent=11 // pred_region
        _
      $region32: #{text_encoder_forward.6} parent=11 // pred_fallthru
        _
      // Predicated region
      $region33: #{text_encoder_forward.6} parent=11 // pred_check
        %p248 = pneg %p192
      $region34: #{text_encoder_forward.6} parent=11 // pred_check_branch
        %250 = sbr.rel (%p248) target = $region36
      $region35: #{text_encoder_forward.6} parent=11 // pred_region
        _
      $region36: #{text_encoder_forward.6} parent=11 // pred_fallthru
        _
    $region12: #{text_encoder_forward.6} parent=5 // pred_fallthru
      _
    %p251 = scmp.lt.s32.totalorder %s14, 2
    // Predicated region
    $region37: #{text_encoder_forward.6} parent=5 // pred_check
      %p252 = pneg %p251
    $region38: #{text_encoder_forward.6} parent=5 // pred_check_branch
      %254 = sbr.rel (%p252) target = $region40
    $region39: #{text_encoder_forward.6} parent=5 // pred_region
      // Predicated region
      $region41: #{text_encoder_forward.6} parent=39 // pred_check
        %p255 = pneg %p34
      $region42: #{text_encoder_forward.6} parent=39 // pred_check_branch
        %257 = sbr.rel (%p255) target = $region44
      $region43: #{text_encoder_forward.6} parent=39 // pred_region
        %p258 = scmp.lt.s32.totalorder %s14, 1
        %s259 = scalar_select %p258, %s14, 1
        %s260 = smul.addr %s259, 8
        %s261 = scalar_lea.vmem %s0, %s260
      $region44: #{text_encoder_forward.6} parent=39 // pred_fallthru
        _
      // Predicated region
      $region45: #{text_encoder_forward.6} parent=39 // pred_check
        %p262 = pneg %p60
      $region46: #{text_encoder_forward.6} parent=39 // pred_check_branch
        %264 = sbr.rel (%p262) target = $region48
      $region47: #{text_encoder_forward.6} parent=39 // pred_region
        %p265 = scmp.lt.s32.totalorder %s14, 1
        %s266 = scalar_select %p265, %s14, 1
        %s267 = smul.addr %s266, 8
        %s268 = scalar_lea.vmem %s1, %s267
      $region48: #{text_encoder_forward.6} parent=39 // pred_fallthru
        _
    $region40: #{text_encoder_forward.6} parent=5 // pred_fallthru
      _
    %p269 = scmp.le.s32.totalorder 1, %s14
    %p270 = scmp.lt.s32.totalorder %s14, 3
    %p271 = pnand %p269, %p270
    %p272 = pneg %p271
    // Predicated region
    $region49: #{text_encoder_forward.6} parent=5 // pred_check
      _
    $region50: #{text_encoder_forward.6} parent=5 // pred_check_branch
      %274 = sbr.rel (%p271) target = $region52
    $region51: #{text_encoder_forward.6} parent=5 // pred_region
      %s275 = ssub.s32 %s14, 1
      %p276 = scmp.lt.s32.totalorder %s19, 1
      %s277 = scalar_select %p276, %s19, 1
      %s278 = smul.addr %s277, 8
      %s279 = scalar_lea.vmem %s0, %s278
      %p280 = pneg %p40
      %p281 = pneg %p37
      %p282 = scmp.lt.s32.totalorder %s19, 1
      %s283 = scalar_select %p282, %s19, 1
      %s284 = smul.addr %s283, 8
      %s285 = scalar_lea.vmem %s1, %s284
      %p286 = pneg %p66
      %p287 = pneg %p63
      %p288 = pneg %p87
      %p289 = pneg %p84
      %p290 = pneg %p108
      %p291 = pneg %p105
      %p292 = pneg %p129
      %p293 = pneg %p126
      %p294 = pneg %p150
      %p295 = pneg %p147
      %p296 = pneg %p171
      %p297 = pneg %p168
      %p298 = pneg %p192
      %p299 = pneg %p189
      %p300 = pneg %p218
      %p301 = pneg %p215
      %p302 = scmp.lt.s32.totalorder %s19, 1
      %s303 = scalar_select %p302, %s19, 1
      %s304 = smul.addr %s303, 8
      %s305 = scalar_lea.vmem %s8, %s304
      %p306 = scmp.lt.s32.totalorder %s19, 1
      %s307 = scalar_select %p306, %s19, 1
      %s308 = smul.addr %s307, 8
      %s309 = scalar_lea.vmem %s0, %s308
      %p310 = scmp.lt.s32.totalorder %s19, 1
      %s311 = scalar_select %p310, %s19, 1
      %s312 = smul.addr %s311, 8
      %s313 = scalar_lea.vmem %s1, %s312
      %p314 = scmp.lt.s32.totalorder %s19, 1
      %s315 = scalar_select %p314, %s19, 1
      %s316 = smul.addr %s315, 8
      %s317 = scalar_lea.vmem %s8, %s316
      %v319 = vld [vmem:[%s313] sm:$0xff]
      %v320 = vld [vmem:[%s309] sm:$0xff]
      %322 = vset.pattern.permute.xlu0 0
      %323 = vperm.xlu0 %322, %v319
      %v324 = vpop.permute.xlu0 %323
      %v326 = vmul.f32 %v320, %v324
      %v327 = vrot.slane %v326, 7
      %v328 = vlaneseq
      %v329 = vshrl.u32 %v328, 7
      %vm330 = vcmp.ge.s32.totalorder %v329, 1
      %v331 = vsel %vm330, %v327, 0.0
      %v332 = vpack.c.bf16 %v331, %v331
      %v333 = vld [vmem:[%s2] sm:$0xf]
      %v334 = vld [vmem:[%s2 + $0x4] sm:$0xf]
      %v335 = vld [vmem:[%s2 + $0x8] sm:$0xf]
      %v336 = vld [vmem:[%s2 + $0xc] sm:$0xf]
      %v337 = vpack.c.bf16 %v326, %v326
      %s338 = scalar_lea.vmem %s2, 16
      %v339 = vld [vmem:[%s338] sm:$0xf]
      %v340 = vld [vmem:[%s338 + $0x4] sm:$0xf]
      %v341 = vld [vmem:[%s338 + $0x8] sm:$0xf]
      %v342 = vld [vmem:[%s338 + $0xc] sm:$0xf]
      %v347 = vunpack.c.l.b16 %v339
      %v348 = vunpack.c.l.b16 %v340
      %v349 = vunpack.c.l.b16 %v341
      %v350 = vunpack.c.l.b16 %v342
      %v351 = vpack.c.b16 %v348, %v347
      %v352 = vpack.c.b16 %v350, %v349
      %vm355 = vcmask 261120
      %v357 = vsel %vm355, %v337, 0
      %359 = vmatprep.subr.bf16.mxu0 0
      %360 = vmatpush1.bf16.msra.mxu0 %v351
      %361 = vmatprep.subr.bf16.mxu0 0
      %362 = vmatpush1.bf16.msra.mxu0 %v352
      %363 = vmatprep.subr.bf16.mxu0 0
      %364 = vmatpush1.bf16.msra.mxu0 0
      %365 = vmatprep.subr.bf16.mxu0 0
      %366 = vmatpush1.bf16.msra.mxu0 0
      %367 = vmatprep.subr.bf16.mxu0 0
      %368 = vmatpush1.bf16.msra.mxu0 0
      %369 = vmatprep.subr.bf16.mxu0 0
      %370 = vmatpush1.bf16.msra.mxu0 0
      %371 = vmatprep.subr.bf16.mxu0 0
      %372 = vmatpush1.bf16.msra.mxu0 0
      %373 = vmatprep.subr.bf16.mxu0 0
      %374 = vmatpush1.bf16.msra.mxu0 0
      %375 = vmatprep.subr.bf16.mxu0 0
      %376 = vmatpush1.bf16.msra.mxu0 0
      %377 = vmatprep.subr.bf16.mxu0 0
      %378 = vmatpush1.bf16.msra.mxu0 0
      %379 = vmatprep.subr.bf16.mxu0 0
      %380 = vmatpush1.bf16.msra.mxu0 0
      %381 = vmatprep.subr.bf16.mxu0 0
      %382 = vmatpush1.bf16.msra.mxu0 0
      %383 = vmatprep.subr.bf16.mxu0 0
      %384 = vmatpush1.bf16.msra.mxu0 0
      %385 = vmatprep.subr.bf16.mxu0 0
      %386 = vmatpush1.bf16.msra.mxu0 0
      %387 = vmatprep.subr.bf16.mxu0 0
      %388 = vmatpush1.bf16.msra.mxu0 0
      %389 = vmatprep.subr.bf16.mxu0 0
      %390 = vmatpush1.bf16.msra.mxu0 0
      %391 = vmatprep.mubr.bf16.mxu0 0
      %392 = vmatmul.mubr.bf16.gmra.mrb[0].mxu0 %v357
      %v393 = vpop.f32.mrb[0].mxu0
      %v394 = vadd.f32 0.0, %v393
      %v395 = vpop.f32.mrb[0].mxu0
      %v396 = vpop.f32.mrb[0].mxu0
      %v397 = vpop.f32.mrb[0].mxu0
      %398 = vdwg.mxu0
      %v403 = vunpack.c.l.b16 %v333
      %v404 = vunpack.c.l.b16 %v334
      %v405 = vunpack.c.l.b16 %v335
      %v406 = vunpack.c.l.b16 %v336
      %v407 = vpack.c.b16 %v404, %v403
      %v408 = vpack.c.b16 %v406, %v405
      %v412 = vsel %vm355, %v332, 0
      %414 = vmatprep.subr.bf16.mxu0 0
      %415 = vmatpush1.bf16.msra.mxu0 %v407
      %416 = vmatprep.subr.bf16.mxu0 0
      %417 = vmatpush1.bf16.msra.mxu0 %v408
      %418 = vmatprep.subr.bf16.mxu0 0
      %419 = vmatpush1.bf16.msra.mxu0 0
      %420 = vmatprep.subr.bf16.mxu0 0
      %421 = vmatpush1.bf16.msra.mxu0 0
      %422 = vmatprep.subr.bf16.mxu0 0
      %423 = vmatpush1.bf16.msra.mxu0 0
      %424 = vmatprep.subr.bf16.mxu0 0
      %425 = vmatpush1.bf16.msra.mxu0 0
      %426 = vmatprep.subr.bf16.mxu0 0
      %427 = vmatpush1.bf16.msra.mxu0 0
      %428 = vmatprep.subr.bf16.mxu0 0
      %429 = vmatpush1.bf16.msra.mxu0 0
      %430 = vmatprep.subr.bf16.mxu0 0
      %431 = vmatpush1.bf16.msra.mxu0 0
      %432 = vmatprep.subr.bf16.mxu0 0
      %433 = vmatpush1.bf16.msra.mxu0 0
      %434 = vmatprep.subr.bf16.mxu0 0
      %435 = vmatpush1.bf16.msra.mxu0 0
      %436 = vmatprep.subr.bf16.mxu0 0
      %437 = vmatpush1.bf16.msra.mxu0 0
      %438 = vmatprep.subr.bf16.mxu0 0
      %439 = vmatpush1.bf16.msra.mxu0 0
      %440 = vmatprep.subr.bf16.mxu0 0
      %441 = vmatpush1.bf16.msra.mxu0 0
      %442 = vmatprep.subr.bf16.mxu0 0
      %443 = vmatpush1.bf16.msra.mxu0 0
      %444 = vmatprep.subr.bf16.mxu0 0
      %445 = vmatpush1.bf16.msra.mxu0 0
      %446 = vmatprep.mubr.bf16.mxu0 0
      %447 = vmatmul.mubr.bf16.gmra.mrb[0].mxu0 %v412
      %v448 = vpop.f32.mrb[0].mxu0
      %v449 = vadd.f32 %v394, %v448
      %v450 = vpop.f32.mrb[0].mxu0
      %v451 = vpop.f32.mrb[0].mxu0
      %v452 = vpop.f32.mrb[0].mxu0
      %453 = vdwg.mxu0
      %v454 = vrot.slane %v326, 1
      %vm455 = vcmp.lt.s32.totalorder %v329, 7
      %v456 = vsel %vm455, %v454, 0.0
      %v457 = vpack.c.bf16 %v456, %v456
      %s458 = scalar_lea.vmem %s2, 32
      %v459 = vld [vmem:[%s458] sm:$0xf]
      %v460 = vld [vmem:[%s458 + $0x4] sm:$0xf]
      %v461 = vld [vmem:[%s458 + $0x8] sm:$0xf]
      %v462 = vld [vmem:[%s458 + $0xc] sm:$0xf]
      %v467 = vunpack.c.l.b16 %v459
      %v468 = vunpack.c.l.b16 %v460
      %v469 = vunpack.c.l.b16 %v461
      %v470 = vunpack.c.l.b16 %v462
      %v471 = vpack.c.b16 %v468, %v467
      %v472 = vpack.c.b16 %v470, %v469
      %v476 = vsel %vm355, %v457, 0
      %478 = vmatprep.subr.bf16.mxu0 0
      %479 = vmatpush1.bf16.msra.mxu0 %v471
      %480 = vmatprep.subr.bf16.mxu0 0
      %481 = vmatpush1.bf16.msra.mxu0 %v472
      %482 = vmatprep.subr.bf16.mxu0 0
      %483 = vmatpush1.bf16.msra.mxu0 0
      %484 = vmatprep.subr.bf16.mxu0 0
      %485 = vmatpush1.bf16.msra.mxu0 0
      %486 = vmatprep.subr.bf16.mxu0 0
      %487 = vmatpush1.bf16.msra.mxu0 0
      %488 = vmatprep.subr.bf16.mxu0 0
      %489 = vmatpush1.bf16.msra.mxu0 0
      %490 = vmatprep.subr.bf16.mxu0 0
      %491 = vmatpush1.bf16.msra.mxu0 0
      %492 = vmatprep.subr.bf16.mxu0 0
      %493 = vmatpush1.bf16.msra.mxu0 0
      %494 = vmatprep.subr.bf16.mxu0 0
      %495 = vmatpush1.bf16.msra.mxu0 0
      %496 = vmatprep.subr.bf16.mxu0 0
      %497 = vmatpush1.bf16.msra.mxu0 0
      %498 = vmatprep.subr.bf16.mxu0 0
      %499 = vmatpush1.bf16.msra.mxu0 0
      %500 = vmatprep.subr.bf16.mxu0 0
      %501 = vmatpush1.bf16.msra.mxu0 0
      %502 = vmatprep.subr.bf16.mxu0 0
      %503 = vmatpush1.bf16.msra.mxu0 0
      %504 = vmatprep.subr.bf16.mxu0 0
      %505 = vmatpush1.bf16.msra.mxu0 0
      %506 = vmatprep.subr.bf16.mxu0 0
      %507 = vmatpush1.bf16.msra.mxu0 0
      %508 = vmatprep.subr.bf16.mxu0 0
      %509 = vmatpush1.bf16.msra.mxu0 0
      %510 = vmatprep.mubr.bf16.mxu0 0
      %511 = vmatmul.mubr.bf16.gmra.mrb[0].mxu0 %v476
      %v512 = vpop.f32.mrb[0].mxu0
      %v513 = vadd.f32 0.0, %v512
      %v514 = vpop.f32.mrb[0].mxu0
      %v515 = vpop.f32.mrb[0].mxu0
      %v516 = vpop.f32.mrb[0].mxu0
      %517 = vdwg.mxu0
      %v518 = vadd.f32 %v449, %v513
      %v519 = vld [vmem:[%s3] sm:$0x1]
      %v521 = vlaneseq
      %v522 = vshrl.u32 %v521, 7
      %v523 = vsub.s32 0, %v522
      %v524 = vrot.slane %v519, %v523
      %v526 = vadd.f32 %v518, %v524
      %v527 = vmax.f32 %v526, 0.0
      %v528 = vmul.f32 %v527, %v324
      %v529 = vrot.slane %v528, 7
      %v530 = vsel %vm330, %v529, 0.0
      %v531 = vpack.c.bf16 %v530, %v530
      %v532 = vld [vmem:[%s4] sm:$0xf]
      %v533 = vld [vmem:[%s4 + $0x4] sm:$0xf]
      %v534 = vld [vmem:[%s4 + $0x8] sm:$0xf]
      %v535 = vld [vmem:[%s4 + $0xc] sm:$0xf]
      %v536 = vld [vmem:[%s4 + $0x10] sm:$0xf]
      %v537 = vld [vmem:[%s4 + $0x14] sm:$0xf]
      %v538 = vld [vmem:[%s4 + $0x18] sm:$0xf]
      %v539 = vld [vmem:[%s4 + $0x1c] sm:$0xf]
      %v540 = vpack.c.bf16 %v528, %v528
      %s541 = scalar_lea.vmem %s4, 32
      %v542 = vld [vmem:[%s541] sm:$0xf]
      %v543 = vld [vmem:[%s541 + $0x4] sm:$0xf]
      %v544 = vld [vmem:[%s541 + $0x8] sm:$0xf]
      %v545 = vld [vmem:[%s541 + $0xc] sm:$0xf]
      %v546 = vld [vmem:[%s541 + $0x10] sm:$0xf]
      %v547 = vld [vmem:[%s541 + $0x14] sm:$0xf]
      %v548 = vld [vmem:[%s541 + $0x18] sm:$0xf]
      %v549 = vld [vmem:[%s541 + $0x1c] sm:$0xf]
      %v558 = vunpack.c.l.b16 %v542
      %v559 = vunpack.c.l.b16 %v543
      %v560 = vunpack.c.l.b16 %v544
      %v561 = vunpack.c.l.b16 %v545
      %v562 = vunpack.c.l.b16 %v546
      %v563 = vunpack.c.l.b16 %v547
      %v564 = vunpack.c.l.b16 %v548
      %v565 = vunpack.c.l.b16 %v549
      %v566 = vpack.c.b16 %v559, %v558
      %v567 = vpack.c.b16 %v561, %v560
      %v568 = vpack.c.b16 %v563, %v562
      %v569 = vpack.c.b16 %v565, %v564
      %vm574 = vcmask 523264
      %v576 = vsel %vm574, %v540, 0
      %578 = vmatprep.subr.bf16.mxu0 0
      %579 = vmatpush1.bf16.msra.mxu0 %v566
      %580 = vmatprep.subr.bf16.mxu0 0
      %581 = vmatpush1.bf16.msra.mxu0 %v567
      %582 = vmatprep.subr.bf16.mxu0 0
      %583 = vmatpush1.bf16.msra.mxu0 %v568
      %584 = vmatprep.subr.bf16.mxu0 0
      %585 = vmatpush1.bf16.msra.mxu0 %v569
      %586 = vmatprep.subr.bf16.mxu0 0
      %587 = vmatpush1.bf16.msra.mxu0 0
      %588 = vmatprep.subr.bf16.mxu0 0
      %589 = vmatpush1.bf16.msra.mxu0 0
      %590 = vmatprep.subr.bf16.mxu0 0
      %591 = vmatpush1.bf16.msra.mxu0 0
      %592 = vmatprep.subr.bf16.mxu0 0
      %593 = vmatpush1.bf16.msra.mxu0 0
      %594 = vmatprep.subr.bf16.mxu0 0
      %595 = vmatpush1.bf16.msra.mxu0 0
      %596 = vmatprep.subr.bf16.mxu0 0
      %597 = vmatpush1.bf16.msra.mxu0 0
      %598 = vmatprep.subr.bf16.mxu0 0
      %599 = vmatpush1.bf16.msra.mxu0 0
      %600 = vmatprep.subr.bf16.mxu0 0
      %601 = vmatpush1.bf16.msra.mxu0 0
      %602 = vmatprep.subr.bf16.mxu0 0
      %603 = vmatpush1.bf16.msra.mxu0 0
      %604 = vmatprep.subr.bf16.mxu0 0
      %605 = vmatpush1.bf16.msra.mxu0 0
      %606 = vmatprep.subr.bf16.mxu0 0
      %607 = vmatpush1.bf16.msra.mxu0 0
      %608 = vmatprep.subr.bf16.mxu0 0
      %609 = vmatpush1.bf16.msra.mxu0 0
      %610 = vmatprep.mubr.bf16.mxu0 0
      %611 = vmatmul.mubr.bf16.gmra.mrb[0].mxu0 %v576
      %v612 = vpop.f32.mrb[0].mxu0
      %v613 = vadd.f32 0.0, %v612
      %v614 = vpop.f32.mrb[0].mxu0
      %v615 = vpop.f32.mrb[0].mxu0
      %v616 = vpop.f32.mrb[0].mxu0
      %617 = vdwg.mxu0
      %v626 = vunpack.c.l.b16 %v532
      %v627 = vunpack.c.l.b16 %v533
      %v628 = vunpack.c.l.b16 %v534
      %v629 = vunpack.c.l.b16 %v535
      %v630 = vunpack.c.l.b16 %v536
      %v631 = vunpack.c.l.b16 %v537
      %v632 = vunpack.c.l.b16 %v538
      %v633 = vunpack.c.l.b16 %v539
      %v634 = vpack.c.b16 %v627, %v626
      %v635 = vpack.c.b16 %v629, %v628
      %v636 = vpack.c.b16 %v631, %v630
      %v637 = vpack.c.b16 %v633, %v632
      %v643 = vsel %vm574, %v531, 0
      %645 = vmatprep.subr.bf16.mxu0 0
      %646 = vmatpush1.bf16.msra.mxu0 %v634
      %647 = vmatprep.subr.bf16.mxu0 0
      %648 = vmatpush1.bf16.msra.mxu0 %v635
      %649 = vmatprep.subr.bf16.mxu0 0
      %650 = vmatpush1.bf16.msra.mxu0 %v636
      %651 = vmatprep.subr.bf16.mxu0 0
      %652 = vmatpush1.bf16.msra.mxu0 %v637
      %653 = vmatprep.subr.bf16.mxu0 0
      %654 = vmatpush1.bf16.msra.mxu0 0
      %655 = vmatprep.subr.bf16.mxu0 0
      %656 = vmatpush1.bf16.msra.mxu0 0
      %657 = vmatprep.subr.bf16.mxu0 0
      %658 = vmatpush1.bf16.msra.mxu0 0
      %659 = vmatprep.subr.bf16.mxu0 0
      %660 = vmatpush1.bf16.msra.mxu0 0
      %661 = vmatprep.subr.bf16.mxu0 0
      %662 = vmatpush1.bf16.msra.mxu0 0
      %663 = vmatprep.subr.bf16.mxu0 0
      %664 = vmatpush1.bf16.msra.mxu0 0
      %665 = vmatprep.subr.bf16.mxu0 0
      %666 = vmatpush1.bf16.msra.mxu0 0
      %667 = vmatprep.subr.bf16.mxu0 0
      %668 = vmatpush1.bf16.msra.mxu0 0
      %669 = vmatprep.subr.bf16.mxu0 0
      %670 = vmatpush1.bf16.msra.mxu0 0
      %671 = vmatprep.subr.bf16.mxu0 0
      %672 = vmatpush1.bf16.msra.mxu0 0
      %673 = vmatprep.subr.bf16.mxu0 0
      %674 = vmatpush1.bf16.msra.mxu0 0
      %675 = vmatprep.subr.bf16.mxu0 0
      %676 = vmatpush1.bf16.msra.mxu0 0
      %677 = vmatprep.mubr.bf16.mxu0 0
      %678 = vmatmul.mubr.bf16.gmra.mrb[0].mxu0 %v643
      %v679 = vpop.f32.mrb[0].mxu0
      %v680 = vadd.f32 %v613, %v679
      %v681 = vpop.f32.mrb[0].mxu0
      %v682 = vpop.f32.mrb[0].mxu0
      %v683 = vpop.f32.mrb[0].mxu0
      %684 = vdwg.mxu0
      %v685 = vrot.slane %v528, 1
      %v686 = vsel %vm455, %v685, 0.0
      %v687 = vpack.c.bf16 %v686, %v686
      %s688 = scalar_lea.vmem %s4, 64
      %v689 = vld [vmem:[%s688] sm:$0xf]
      %v690 = vld [vmem:[%s688 + $0x4] sm:$0xf]
      %v691 = vld [vmem:[%s688 + $0x8] sm:$0xf]
      %v692 = vld [vmem:[%s688 + $0xc] sm:$0xf]
      %v693 = vld [vmem:[%s688 + $0x10] sm:$0xf]
      %v694 = vld [vmem:[%s688 + $0x14] sm:$0xf]
      %v695 = vld [vmem:[%s688 + $0x18] sm:$0xf]
      %v696 = vld [vmem:[%s688 + $0x1c] sm:$0xf]
      %v705 = vunpack.c.l.b16 %v689
      %v706 = vunpack.c.l.b16 %v690
      %v707 = vunpack.c.l.b16 %v691
      %v708 = vunpack.c.l.b16 %v692
      %v709 = vunpack.c.l.b16 %v693
      %v710 = vunpack.c.l.b16 %v694
      %v711 = vunpack.c.l.b16 %v695
      %v712 = vunpack.c.l.b16 %v696
      %v713 = vpack.c.b16 %v706, %v705
      %v714 = vpack.c.b16 %v708, %v707
      %v715 = vpack.c.b16 %v710, %v709
      %v716 = vpack.c.b16 %v712, %v711
      %v722 = vsel %vm574, %v687, 0
      %724 = vmatprep.subr.bf16.mxu0 0
      %725 = vmatpush1.bf16.msra.mxu0 %v713
      %726 = vmatprep.subr.bf16.mxu0 0
      %727 = vmatpush1.bf16.msra.mxu0 %v714
      %728 = vmatprep.subr.bf16.mxu0 0
      %729 = vmatpush1.bf16.msra.mxu0 %v715
      %730 = vmatprep.subr.bf16.mxu0 0
      %731 = vmatpush1.bf16.msra.mxu0 %v716
      %732 = vmatprep.subr.bf16.mxu0 0
      %733 = vmatpush1.bf16.msra.mxu0 0
      %734 = vmatprep.subr.bf16.mxu0 0
      %735 = vmatpush1.bf16.msra.mxu0 0
      %736 = vmatprep.subr.bf16.mxu0 0
      %737 = vmatpush1.bf16.msra.mxu0 0
      %738 = vmatprep.subr.bf16.mxu0 0
      %739 = vmatpush1.bf16.msra.mxu0 0
      %740 = vmatprep.subr.bf16.mxu0 0
      %741 = vmatpush1.bf16.msra.mxu0 0
      %742 = vmatprep.subr.bf16.mxu0 0
      %743 = vmatpush1.bf16.msra.mxu0 0
      %744 = vmatprep.subr.bf16.mxu0 0
      %745 = vmatpush1.bf16.msra.mxu0 0
      %746 = vmatprep.subr.bf16.mxu0 0
      %747 = vmatpush1.bf16.msra.mxu0 0
      %748 = vmatprep.subr.bf16.mxu0 0
      %749 = vmatpush1.bf16.msra.mxu0 0
      %750 = vmatprep.subr.bf16.mxu0 0
      %751 = vmatpush1.bf16.msra.mxu0 0
      %752 = vmatprep.subr.bf16.mxu0 0
      %753 = vmatpush1.bf16.msra.mxu0 0
      %754 = vmatprep.subr.bf16.mxu0 0
      %755 = vmatpush1.bf16.msra.mxu0 0
      %756 = vmatprep.mubr.bf16.mxu0 0
      %757 = vmatmul.mubr.bf16.gmra.mrb[0].mxu0 %v722
      %v758 = vpop.f32.mrb[0].mxu0
      %v759 = vadd.f32 0.0, %v758
      %v760 = vpop.f32.mrb[0].mxu0
      %v761 = vpop.f32.mrb[0].mxu0
      %v762 = vpop.f32.mrb[0].mxu0
      %763 = vdwg.mxu0
      %v764 = vadd.f32 %v680, %v759
      %v765 = vld [vmem:[%s5] sm:$0x1]
      %v767 = vlaneseq
      %v768 = vshrl.u32 %v767, 7
      %v769 = vsub.s32 0, %v768
      %v770 = vrot.slane %v765, %v769
      %v772 = vadd.f32 %v764, %v770
      %v773 = vmul.f32 %v772, %v324
      %v774 = vadd.f32 %v320, %v773
      %v775 = vsel %vm355, %v774, 0.0
      %776 = vadd.xlane.f32.xlu0 %v775
      %v777 = vpop.xlane.xlu0 %776
      %v778 = vrcp.pop 32.0
      %v779 = vmul.f32 %v777, %v778
      %v780 = vsub.f32 %v774, %v779
      %v781 = vmul.f32 %v780, %v780
      %v782 = vsel %vm355, %v781, 0.0
      %783 = vadd.xlane.f32.xlu0 %v782
      %v784 = vpop.xlane.xlu0 %783
      %v785 = vmul.f32 %v784, %v778
      %v786 = vadd.f32 %v785, 1e-05
      %v787 = vrsqrt.pop %v786
      %v788 = vmul.f32 %v780, %v787
      %v789 = vld [vmem:[%s6] sm:$0x1]
      %v791 = vlaneseq
      %v792 = vshrl.u32 %v791, 7
      %v793 = vsub.s32 0, %v792
      %v794 = vrot.slane %v789, %v793
      %v796 = vmul.f32 %v788, %v794
      %v797 = vld [vmem:[%s7] sm:$0x1]
      %v799 = vlaneseq
      %v800 = vshrl.u32 %v799, 7
      %v801 = vsub.s32 0, %v800
      %v802 = vrot.slane %v797, %v801
      %v804 = vadd.f32 %v796, %v802
      %805 = vst.msk [vmem:[%s317] sm:$0xff] %vm355, %v804
      %p806 = scmp.lt.s32.totalorder %s19, 1
      %s807 = scalar_select %p806, %s19, 1
      %s808 = smul.addr %s807, 8
      %s809 = scalar_lea.vmem %s8, %s808
      // Predicated region
      $region53: #{text_encoder_forward.6} parent=51 // pred_check
        %p810 = pneg %p215
      $region54: #{text_encoder_forward.6} parent=51 // pred_check_branch
        %812 = sbr.rel (%p810) target = $region56
      $region55: #{text_encoder_forward.6} parent=51 // pred_region
        _
      $region56: #{text_encoder_forward.6} parent=51 // pred_fallthru
        _
    $region52: #{text_encoder_forward.6} parent=5 // pred_fallthru
      _
    %p813 = scmp.le.s32.totalorder 2, %s14
    // Predicated region
    $region57: #{text_encoder_forward.6} parent=5 // pred_check
      %p814 = pneg %p813
    $region58: #{text_encoder_forward.6} parent=5 // pred_check_branch
      %816 = sbr.rel (%p814) target = $region60
    $region59: #{text_encoder_forward.6} parent=5 // pred_region
      %s817 = ssub.s32 %s14, 2
      // Predicated region
      $region61: #{text_encoder_forward.6} parent=59 // pred_check
        %p818 = pneg %p221
      $region62: #{text_encoder_forward.6} parent=59 // pred_check_branch
        %820 = sbr.rel (%p818) target = $region64
      $region63: #{text_encoder_forward.6} parent=59 // pred_region
        %p821 = scmp.lt.s32.totalorder %s20, 1
        %s822 = scalar_select %p821, %s20, 1
        %s823 = smul.addr %s822, 8
        %s824 = scalar_lea.vmem %s8, %s823
      $region64: #{text_encoder_forward.6} parent=59 // pred_fallthru
        _
    $region60: #{text_encoder_forward.6} parent=5 // pred_fallthru
      _
  $region6: #{text_encoder_forward.6} parent=0 // loop_footer
    %s18 = sadd.s32 1, %s14
  $region7: #{text_encoder_forward.6} parent=0 // loop_footer_branch
    %13 = sbr.rel target = $region3
  $region8: #{text_encoder_forward.6} parent=0 // loop_exit
    _

// kernel: text_encoder_forward.5
$region0: #{text_encoder_forward.5}
  #allocation0 [shape = 'u32[]', space=smem, size = 0x4, offset = 0x4, fixed_abs, tag = 'smem constant byte address 0x4 - core index']
  #allocation1 [shape = 'u32[144,128]{1,0:T(1,128)}', space=vmem, size = 0x12000, scoped, tag = 'internal scratch']
  %s0 = inlined_call_operand.vmem [shape: f32[2,8,32], index: 0, kind: input, shape index: {}]
  %s1 = inlined_call_operand.vmem [shape: f32[2,8,1], index: 1, kind: input, shape index: {}]
  %s2 = inlined_call_operand.vmem [shape: f32[2,1,8], index: 2, kind: input, shape index: {}]
  %s3 = inlined_call_operand.vmem [shape: bf16[32,96], index: 3, kind: input, shape index: {}]
  %s4 = inlined_call_operand.vmem [shape: f32[1,96], index: 4, kind: input, shape index: {}]
  %s5 = inlined_call_operand.vmem [shape: bf16[9,16], index: 5, kind: input, shape index: {}]
  %s6 = inlined_call_operand.vmem [shape: bf16[9,16], index: 6, kind: input, shape index: {}]
  %s7 = inlined_call_operand.vmem [shape: bf16[32,32], index: 7, kind: input, shape index: {}]
  %s8 = inlined_call_operand.vmem [shape: f32[1,32], index: 8, kind: input, shape index: {}]
  %s9 = inlined_call_operand.vmem [shape: f32[1,32], index: 9, kind: input, shape index: {}]
  %s10 = inlined_call_operand.vmem [shape: f32[1,32], index: 10, kind: input, shape index: {}]
  %s11 = inlined_call_operand.vmem [shape: f32[2,8,32], index: 11, kind: output, shape index: {}]
  %s12 = sld [smem:[#allocation0]]
  $region77: #{text_encoder_forward.5} parent=0
    _
  %s14 = ssub.s32 1, %s12
  %s15 = scalar_select 0, %s14, %s12
  loop: start=0, step=1, limit=4
  $region2: #{text_encoder_forward.5} parent=0 // loop_pre_header
    _
  $region3: #{text_encoder_forward.5} parent=0 // loop_header
    %s17 = sphi 0, %s21
    %p18 = scmp.ge.s32.totalorder %s17, 4
    %s27 = sphi 0, %s29
    %s30 = sphi 0, %s27
    %s31 = sphi 0, %s30
    %s47 = sphi 0, %s31
    %s53 = sphi 0, %s55
    %s56 = sphi 0, %s53
    %s57 = sphi 0, %s56
    %s73 = sphi 0, %s57
    %s79 = sphi 0, %s81
    %s82 = sphi 0, %s79
    %s83 = sphi 0, %s82
    %s99 = sphi 0, %s83
    %s103 = sphi 0, %s103
    %s105 = sphi 0, %s103
    %s106 = sphi 0, %s105
    %s120 = sphi 0, %s106
    %s124 = sphi 0, %s124
    %s126 = sphi 0, %s124
    %s127 = sphi 0, %s126
    %s141 = sphi 0, %s127
    %s145 = sphi 0, %s145
    %s147 = sphi 0, %s145
    %s148 = sphi 0, %s147
    %s162 = sphi 0, %s148
    %s166 = sphi 0, %s166
    %s168 = sphi 0, %s166
    %s169 = sphi 0, %s168
    %s183 = sphi 0, %s169
    %s187 = sphi 0, %s187
    %s189 = sphi 0, %s187
    %s190 = sphi 0, %s189
    %s204 = sphi 0, %s190
    %s208 = sphi 0, %s208
    %s210 = sphi 0, %s208
    %s211 = sphi 0, %s210
    %s225 = sphi 0, %s211
    %s229 = sphi 0, %s229
    %s231 = sphi 0, %s229
    %s232 = sphi 0, %s231
    %s246 = sphi 0, %s232
    %s250 = sphi 0, %s250
    %s252 = sphi 0, %s250
    %s253 = sphi 0, %s252
    %s267 = sphi 0, %s253
    %s273 = sphi 0, %s275
    %s276 = sphi 0, %s273
    %s277 = sphi 0, %s276
    %s293 = sphi 0, %s277
  $region4: #{text_encoder_forward.5} parent=0 // loop_header_branch
    %20 = sbr.rel (%p18) target = $region8
  $region5: #{text_encoder_forward.5} parent=0 // loop_body
    %s22 = ssub.s32 %s17, 1
    %s23 = ssub.s32 %s17, 2
    %s24 = sadd.s32 %s17, 1
    %s25 = ssub.s32 %s17, %s24
    %p26 = scmp.eq.s32.totalorder %s25, 0
    %s28 = sadd.s32 %s27, 1
    %s29 = scalar_select %p26, %s27, %s28
    %p32 = pneg %p26
    %p33 = scmp.eq.s32.totalorder %s17, 1
    %p34 = por %p32, %p33
    %p35 = scmp.ne.s32.totalorder %s27, %s30
    %p36 = scmp.eq.s32.totalorder %s17, 0
    %p37 = por %p35, %p36
    %p38 = scmp.ne.s32.totalorder %s27, %s30
    %p39 = scmp.eq.s32.totalorder %s22, 1
    %p40 = por %p38, %p39
    %p41 = scmp.ne.s32.totalorder %s30, %s31
    %p42 = scmp.eq.s32.totalorder %s22, 0
    %p43 = por %p41, %p42
    %p44 = scmp.ne.s32.totalorder %s30, %s31
    %p45 = scmp.eq.s32.totalorder %s23, 1
    %p46 = por %p44, %p45
    %p48 = scmp.ne.s32.totalorder %s31, %s47
    %p49 = scmp.eq.s32.totalorder %s23, 0
    %p50 = por %p48, %p49
    %s51 = ssub.s32 %s17, %s24
    %p52 = scmp.eq.s32.totalorder %s51, 0
    %s54 = sadd.s32 %s53, 1
    %s55 = scalar_select %p52, %s53, %s54
    %p58 = pneg %p52
    %p59 = scmp.eq.s32.totalorder %s17, 1
    %p60 = por %p58, %p59
    %p61 = scmp.ne.s32.totalorder %s53, %s56
    %p62 = scmp.eq.s32.totalorder %s17, 0
    %p63 = por %p61, %p62
    %p64 = scmp.ne.s32.totalorder %s53, %s56
    %p65 = scmp.eq.s32.totalorder %s22, 1
    %p66 = por %p64, %p65
    %p67 = scmp.ne.s32.totalorder %s56, %s57
    %p68 = scmp.eq.s32.totalorder %s22, 0
    %p69 = por %p67, %p68
    %p70 = scmp.ne.s32.totalorder %s56, %s57
    %p71 = scmp.eq.s32.totalorder %s23, 1
    %p72 = por %p70, %p71
    %p74 = scmp.ne.s32.totalorder %s57, %s73
    %p75 = scmp.eq.s32.totalorder %s23, 0
    %p76 = por %p74, %p75
    %s77 = ssub.s32 %s17, %s24
    %p78 = scmp.eq.s32.totalorder %s77, 0
    %s80 = sadd.s32 %s79, 1
    %s81 = scalar_select %p78, %s79, %s80
    %p84 = pneg %p78
    %p85 = scmp.eq.s32.totalorder %s17, 1
    %p86 = por %p84, %p85
    %p87 = scmp.ne.s32.totalorder %s79, %s82
    %p88 = scmp.eq.s32.totalorder %s17, 0
    %p89 = por %p87, %p88
    %p90 = scmp.ne.s32.totalorder %s79, %s82
    %p91 = scmp.eq.s32.totalorder %s22, 1
    %p92 = por %p90, %p91
    %p93 = scmp.ne.s32.totalorder %s82, %s83
    %p94 = scmp.eq.s32.totalorder %s22, 0
    %p95 = por %p93, %p94
    %p96 = scmp.ne.s32.totalorder %s82, %s83
    %p97 = scmp.eq.s32.totalorder %s23, 1
    %p98 = por %p96, %p97
    %p100 = scmp.ne.s32.totalorder %s83, %s99
    %p101 = scmp.eq.s32.totalorder %s23, 0
    %p102 = por %p100, %p101
    %s104 = sadd.s32 %s103, 1
    %p107 = scmp.eq.s32.totalorder %s17, 1
    %p108 = scmp.ne.s32.totalorder %s103, %s105
    %p109 = scmp.eq.s32.totalorder %s17, 0
    %p110 = por %p108, %p109
    %p111 = scmp.ne.s32.totalorder %s103, %s105
    %p112 = scmp.eq.s32.totalorder %s22, 1
    %p113 = por %p111, %p112
    %p114 = scmp.ne.s32.totalorder %s105, %s106
    %p115 = scmp.eq.s32.totalorder %s22, 0
    %p116 = por %p114, %p115
    %p117 = scmp.ne.s32.totalorder %s105, %s106
    %p118 = scmp.eq.s32.totalorder %s23, 1
    %p119 = por %p117, %p118
    %p121 = scmp.ne.s32.totalorder %s106, %s120
    %p122 = scmp.eq.s32.totalorder %s23, 0
    %p123 = por %p121, %p122
    %s125 = sadd.s32 %s124, 1
    %p128 = scmp.eq.s32.totalorder %s17, 1
    %p129 = scmp.ne.s32.totalorder %s124, %s126
    %p130 = scmp.eq.s32.totalorder %s17, 0
    %p131 = por %p129, %p130
    %p132 = scmp.ne.s32.totalorder %s124, %s126
    %p133 = scmp.eq.s32.totalorder %s22, 1
    %p134 = por %p132, %p133
    %p135 = scmp.ne.s32.totalorder %s126, %s127
    %p136 = scmp.eq.s32.totalorder %s22, 0
    %p137 = por %p135, %p136
    %p138 = scmp.ne.s32.totalorder %s126, %s127
    %p139 = scmp.eq.s32.totalorder %s23, 1
    %p140 = por %p138, %p139
    %p142 = scmp.ne.s32.totalorder %s127, %s141
    %p143 = scmp.eq.s32.totalorder %s23, 0
    %p144 = por %p142, %p143
    %s146 = sadd.s32 %s145, 1
    %p149 = scmp.eq.s32.totalorder %s17, 1
    %p150 = scmp.ne.s32.totalorder %s145, %s147
    %p151 = scmp.eq.s32.totalorder %s17, 0
    %p152 = por %p150, %p151
    %p153 = scmp.ne.s32.totalorder %s145, %s147
    %p154 = scmp.eq.s32.totalorder %s22, 1
    %p155 = por %p153, %p154
    %p156 = scmp.ne.s32.totalorder %s147, %s148
    %p157 = scmp.eq.s32.totalorder %s22, 0
    %p158 = por %p156, %p157
    %p159 = scmp.ne.s32.totalorder %s147, %s148
    %p160 = scmp.eq.s32.totalorder %s23, 1
    %p161 = por %p159, %p160
    %p163 = scmp.ne.s32.totalorder %s148, %s162
    %p164 = scmp.eq.s32.totalorder %s23, 0
    %p165 = por %p163, %p164
    %s167 = sadd.s32 %s166, 1
    %p170 = scmp.eq.s32.totalorder %s17, 1
    %p171 = scmp.ne.s32.totalorder %s166, %s168
    %p172 = scmp.eq.s32.totalorder %s17, 0
    %p173 = por %p171, %p172
    %p174 = scmp.ne.s32.totalorder %s166, %s168
    %p175 = scmp.eq.s32.totalorder %s22, 1
    %p176 = por %p174, %p175
    %p177 = scmp.ne.s32.totalorder %s168, %s169
    %p178 = scmp.eq.s32.totalorder %s22, 0
    %p179 = por %p177, %p178
    %p180 = scmp.ne.s32.totalorder %s168, %s169
    %p181 = scmp.eq.s32.totalorder %s23, 1
    %p182 = por %p180, %p181
    %p184 = scmp.ne.s32.totalorder %s169, %s183
    %p185 = scmp.eq.s32.totalorder %s23, 0
    %p186 = por %p184, %p185
    %s188 = sadd.s32 %s187, 1
    %p191 = scmp.eq.s32.totalorder %s17, 1
    %p192 = scmp.ne.s32.totalorder %s187, %s189
    %p193 = scmp.eq.s32.totalorder %s17, 0
    %p194 = por %p192, %p193
    %p195 = scmp.ne.s32.totalorder %s187, %s189
    %p196 = scmp.eq.s32.totalorder %s22, 1
    %p197 = por %p195, %p196
    %p198 = scmp.ne.s32.totalorder %s189, %s190
    %p199 = scmp.eq.s32.totalorder %s22, 0
    %p200 = por %p198, %p199
    %p201 = scmp.ne.s32.totalorder %s189, %s190
    %p202 = scmp.eq.s32.totalorder %s23, 1
    %p203 = por %p201, %p202
    %p205 = scmp.ne.s32.totalorder %s190, %s204
    %p206 = scmp.eq.s32.totalorder %s23, 0
    %p207 = por %p205, %p206
    %s209 = sadd.s32 %s208, 1
    %p212 = scmp.eq.s32.totalorder %s17, 1
    %p213 = scmp.ne.s32.totalorder %s208, %s210
    %p214 = scmp.eq.s32.totalorder %s17, 0
    %p215 = por %p213, %p214
    %p216 = scmp.ne.s32.totalorder %s208, %s210
    %p217 = scmp.eq.s32.totalorder %s22, 1
    %p218 = por %p216, %p217
    %p219 = scmp.ne.s32.totalorder %s210, %s211
    %p220 = scmp.eq.s32.totalorder %s22, 0
    %p221 = por %p219, %p220
    %p222 = scmp.ne.s32.totalorder %s210, %s211
    %p223 = scmp.eq.s32.totalorder %s23, 1
    %p224 = por %p222, %p223
    %p226 = scmp.ne.s32.totalorder %s211, %s225
    %p227 = scmp.eq.s32.totalorder %s23, 0
    %p228 = por %p226, %p227
    %s230 = sadd.s32 %s229, 1
    %p233 = scmp.eq.s32.totalorder %s17, 1
    %p234 = scmp.ne.s32.totalorder %s229, %s231
    %p235 = scmp.eq.s32.totalorder %s17, 0
    %p236 = por %p234, %p235
    %p237 = scmp.ne.s32.totalorder %s229, %s231
    %p238 = scmp.eq.s32.totalorder %s22, 1
    %p239 = por %p237, %p238
    %p240 = scmp.ne.s32.totalorder %s231, %s232
    %p241 = scmp.eq.s32.totalorder %s22, 0
    %p242 = por %p240, %p241
    %p243 = scmp.ne.s32.totalorder %s231, %s232
    %p244 = scmp.eq.s32.totalorder %s23, 1
    %p245 = por %p243, %p244
    %p247 = scmp.ne.s32.totalorder %s232, %s246
    %p248 = scmp.eq.s32.totalorder %s23, 0
    %p249 = por %p247, %p248
    %s251 = sadd.s32 %s250, 1
    %p254 = scmp.eq.s32.totalorder %s17, 1
    %p255 = scmp.ne.s32.totalorder %s250, %s252
    %p256 = scmp.eq.s32.totalorder %s17, 0
    %p257 = por %p255, %p256
    %p258 = scmp.ne.s32.totalorder %s250, %s252
    %p259 = scmp.eq.s32.totalorder %s22, 1
    %p260 = por %p258, %p259
    %p261 = scmp.ne.s32.totalorder %s252, %s253
    %p262 = scmp.eq.s32.totalorder %s22, 0
    %p263 = por %p261, %p262
    %p264 = scmp.ne.s32.totalorder %s252, %s253
    %p265 = scmp.eq.s32.totalorder %s23, 1
    %p266 = por %p264, %p265
    %p268 = scmp.ne.s32.totalorder %s253, %s267
    %p269 = scmp.eq.s32.totalorder %s23, 0
    %p270 = por %p268, %p269
    %s271 = ssub.s32 %s17, %s24
    %p272 = scmp.eq.s32.totalorder %s271, 0
    %s274 = sadd.s32 %s273, 1
    %s275 = scalar_select %p272, %s273, %s274
    %p278 = pneg %p272
    %p279 = scmp.eq.s32.totalorder %s17, 1
    %p280 = por %p278, %p279
    %p281 = scmp.ne.s32.totalorder %s273, %s276
    %p282 = scmp.eq.s32.totalorder %s17, 0
    %p283 = por %p281, %p282
    %p284 = scmp.ne.s32.totalorder %s273, %s276
    %p285 = scmp.eq.s32.totalorder %s22, 1
    %p286 = por %p284, %p285
    %p287 = scmp.ne.s32.totalorder %s276, %s277
    %p288 = scmp.eq.s32.totalorder %s22, 0
    %p289 = por %p287, %p288
    %p290 = scmp.ne.s32.totalorder %s276, %s277
    %p291 = scmp.eq.s32.totalorder %s23, 1
    %p292 = por %p290, %p291
    %p294 = scmp.ne.s32.totalorder %s277, %s293
    %p295 = scmp.eq.s32.totalorder %s23, 0
    %p296 = por %p294, %p295
    %p297 = scmp.le.s32.totalorder 1, %s17
    %p298 = scmp.lt.s32.totalorder %s17, 3
    %p299 = pnand %p297, %p298
    %p300 = pneg %p299
    // Predicated region
    $region9: #{text_encoder_forward.5} parent=5 // pred_check
      _
    $region10: #{text_encoder_forward.5} parent=5 // pred_check_branch
      %302 = sbr.rel (%p299) target = $region12
    $region11: #{text_encoder_forward.5} parent=5 // pred_region
      %s303 = ssub.s32 %s17, 1
      // Predicated region
      $region13: #{text_encoder_forward.5} parent=11 // pred_check
        %p304 = pneg %p116
      $region14: #{text_encoder_forward.5} parent=11 // pred_check_branch
        %306 = sbr.rel (%p304) target = $region16
      $region15: #{text_encoder_forward.5} parent=11 // pred_region
        _
      $region16: #{text_encoder_forward.5} parent=11 // pred_fallthru
        _
      // Predicated region
      $region17: #{text_encoder_forward.5} parent=11 // pred_check
        %p307 = pneg %p137
      $region18: #{text_encoder_forward.5} parent=11 // pred_check_branch
        %309 = sbr.rel (%p307) target = $region20
      $region19: #{text_encoder_forward.5} parent=11 // pred_region
        _
      $region20: #{text_encoder_forward.5} parent=11 // pred_fallthru
        _
      // Predicated region
      $region21: #{text_encoder_forward.5} parent=11 // pred_check
        %p310 = pneg %p158
      $region22: #{text_encoder_forward.5} parent=11 // pred_check_branch
        %312 = sbr.rel (%p310) target = $region24
      $region23: #{text_encoder_forward.5} parent=11 // pred_region
        _
      $region24: #{text_encoder_forward.5} parent=11 // pred_fallthru
        _
      // Predicated region
      $region25: #{text_encoder_forward.5} parent=11 // pred_check
        %p313 = pneg %p179
      $region26: #{text_encoder_forward.5} parent=11 // pred_check_branch
        %315 = sbr.rel (%p313) target = $region28
      $region27: #{text_encoder_forward.5} parent=11 // pred_region
        _
      $region28: #{text_encoder_forward.5} parent=11 // pred_fallthru
        _
      // Predicated region
      $region29: #{text_encoder_forward.5} parent=11 // pred_check
        %p316 = pneg %p200
      $region30: #{text_encoder_forward.5} parent=11 // pred_check_branch
        %318 = sbr.rel (%p316) target = $region32
      $region31: #{text_encoder_forward.5} parent=11 // pred_region
        _
      $region32: #{text_encoder_forward.5} parent=11 // pred_fallthru
        _
      // Predicated region
      $region33: #{text_encoder_forward.5} parent=11 // pred_check
        %p319 = pneg %p221
      $region34: #{text_encoder_forward.5} parent=11 // pred_check_branch
        %321 = sbr.rel (%p319) target = $region36
      $region35: #{text_encoder_forward.5} parent=11 // pred_region
        _
      $region36: #{text_encoder_forward.5} parent=11 // pred_fallthru
        _
      // Predicated region
      $region37: #{text_encoder_forward.5} parent=11 // pred_check
        %p322 = pneg %p242
      $region38: #{text_encoder_forward.5} parent=11 // pred_check_branch
        %324 = sbr.rel (%p322) target = $region40
      $region39: #{text_encoder_forward.5} parent=11 // pred_region
        _
      $region40: #{text_encoder_forward.5} parent=11 // pred_fallthru
        _
      // Predicated region
      $region41: #{text_encoder_forward.5} parent=11 // pred_check
        %p325 = pneg %p263
      $region42: #{text_encoder_forward.5} parent=11 // pred_check_branch
        %327 = sbr.rel (%p325) target = $region44
      $region43: #{text_encoder_forward.5} parent=11 // pred_region
        _
      $region44: #{text_encoder_forward.5} parent=11 // pred_fallthru
        _
    $region12: #{text_encoder_forward.5} parent=5 // pred_fallthru
      _
    %p328 = scmp.lt.s32.totalorder %s17, 2
    // Predicated region
    $region45: #{text_encoder_forward.5} parent=5 // pred_check
      %p329 = pneg %p328
    $region46: #{text_encoder_forward.5} parent=5 // pred_check_branch
      %331 = sbr.rel (%p329) target = $region48
    $region47: #{text_encoder_forward.5} parent=5 // pred_region
      // Predicated region
      $region49: #{text_encoder_forward.5} parent=47 // pred_check
        %p332 = pneg %p37
      $region50: #{text_encoder_forward.5} parent=47 // pred_check_branch
        %334 = sbr.rel (%p332) target = $region52
      $region51: #{text_encoder_forward.5} parent=47 // pred_region
        %p335 = scmp.lt.s32.totalorder %s17, 1
        %s336 = scalar_select %p335, %s17, 1
        %s337 = smul.addr %s336, 8
        %s338 = scalar_lea.vmem %s0, %s337
      $region52: #{text_encoder_forward.5} parent=47 // pred_fallthru
        _
      // Predicated region
      $region53: #{text_encoder_forward.5} parent=47 // pred_check
        %p339 = pneg %p63
      $region54: #{text_encoder_forward.5} parent=47 // pred_check_branch
        %341 = sbr.rel (%p339) target = $region56
      $region55: #{text_encoder_forward.5} parent=47 // pred_region
        %p342 = scmp.lt.s32.totalorder %s17, 1
        %s343 = scalar_select %p342, %s17, 1
        %s344 = smul.addr %s343, 8
        %s345 = scalar_lea.vmem %s1, %s344
      $region56: #{text_encoder_forward.5} parent=47 // pred_fallthru
        _
      // Predicated region
      $region57: #{text_encoder_forward.5} parent=47 // pred_check
        %p346 = pneg %p89
      $region58: #{text_encoder_forward.5} parent=47 // pred_check_branch
        %348 = sbr.rel (%p346) target = $region60
      $region59: #{text_encoder_forward.5} parent=47 // pred_region
        %p349 = scmp.lt.s32.totalorder %s17, 1
        %s350 = scalar_select %p349, %s17, 1
        %s351 = scalar_lea.vmem %s2, %s350
      $region60: #{text_encoder_forward.5} parent=47 // pred_fallthru
        _
    $region48: #{text_encoder_forward.5} parent=5 // pred_fallthru
      _
    %p352 = scmp.le.s32.totalorder 1, %s17
    %p353 = scmp.lt.s32.totalorder %s17, 3
    %p354 = pnand %p352, %p353
    %p355 = pneg %p354
    // Predicated region
    $region61: #{text_encoder_forward.5} parent=5 // pred_check
      _
    $region62: #{text_encoder_forward.5} parent=5 // pred_check_branch
      %357 = sbr.rel (%p354) target = $region64
    $region63: #{text_encoder_forward.5} parent=5 // pred_region
      %s358 = ssub.s32 %s17, 1
      %p359 = scmp.lt.s32.totalorder %s22, 1
      %s360 = scalar_select %p359, %s22, 1
      %s361 = smul.addr %s360, 8
      %s362 = scalar_lea.vmem %s0, %s361
      %p363 = pneg %p43
      %p364 = pneg %p40
      %p365 = scmp.lt.s32.totalorder %s22, 1
      %s366 = scalar_select %p365, %s22, 1
      %s367 = smul.addr %s366, 8
      %s368 = scalar_lea.vmem %s1, %s367
      %p369 = pneg %p69
      %p370 = pneg %p66
      %p371 = scmp.lt.s32.totalorder %s22, 1
      %s372 = scalar_select %p371, %s22, 1
      %s373 = scalar_lea.vmem %s2, %s372
      %p374 = pneg %p95
      %p375 = pneg %p92
      %p376 = pneg %p116
      %p377 = pneg %p113
      %p378 = pneg %p137
      %p379 = pneg %p134
      %p380 = pneg %p158
      %p381 = pneg %p155
      %p382 = pneg %p179
      %p383 = pneg %p176
      %p384 = pneg %p200
      %p385 = pneg %p197
      %p386 = pneg %p221
      %p387 = pneg %p218
      %p388 = pneg %p242
      %p389 = pneg %p239
      %p390 = pneg %p263
      %p391 = pneg %p260
      %p392 = pneg %p289
      %p393 = pneg %p286
      %p394 = scmp.lt.s32.totalorder %s22, 1
      %s395 = scalar_select %p394, %s22, 1
      %s396 = smul.addr %s395, 8
      %s397 = scalar_lea.vmem %s11, %s396
      %p398 = scmp.lt.s32.totalorder %s22, 1
      %s399 = scalar_select %p398, %s22, 1
      %s400 = smul.addr %s399, 8
      %s401 = scalar_lea.vmem %s0, %s400
      %p402 = scmp.lt.s32.totalorder %s22, 1
      %s403 = scalar_select %p402, %s22, 1
      %s404 = smul.addr %s403, 8
      %s405 = scalar_lea.vmem %s1, %s404
      %p406 = scmp.lt.s32.totalorder %s22, 1
      %s407 = scalar_select %p406, %s22, 1
      %s408 = scalar_lea.vmem %s2, %s407
      %p409 = scmp.lt.s32.totalorder %s22, 1
      %s410 = scalar_select %p409, %s22, 1
      %s411 = smul.addr %s410, 8
      %s412 = scalar_lea.vmem %s11, %s411
      %v414 = vld [vmem:[%s401] sm:$0xff]
      %v415 = vld [vmem:[%s405] sm:$0xff]
      %v416 = vld [vmem:[%s408] sm:$0x1]
      %v417 = vld [vmem:[%s5] sm:$0xf]
      %v418 = vld [vmem:[%s5 + $0x4] sm:$0x1]
      %v419 = vld [vmem:[%s6] sm:$0xf]
      %v420 = vld [vmem:[%s6 + $0x4] sm:$0x1]
      %v421 = vpack.c.bf16 %v414, %v414
      %v422 = vld [vmem:[%s3] sm:$0xf]
      %v423 = vld [vmem:[%s3 + $0x4] sm:$0xf]
      %v424 = vld [vmem:[%s3 + $0x8] sm:$0xf]
      %v425 = vld [vmem:[%s3 + $0xc] sm:$0xf]
      %v426 = vld [vmem:[%s4] sm:$0x1]
      %v428 = vlaneseq
      %v429 = vshrl.u32 %v428, 7
      %v430 = vsub.s32 0, %v429
      %v431 = vrot.slane %v426, %v430
      %v437 = vunpack.c.l.b16 %v422
      %v438 = vunpack.c.l.b16 %v423
      %v439 = vunpack.c.l.b16 %v424
      %v440 = vunpack.c.l.b16 %v425
      %v441 = vpack.c.b16 %v438, %v437
      %v442 = vpack.c.b16 %v440, %v439
      %vm445 = vcmask 261120
      %v447 = vsel %vm445, %v421, 0
      %449 = vmatprep.subr.bf16.mxu0 0
      %450 = vmatpush1.bf16.msra.mxu0 %v441
      %451 = vmatprep.subr.bf16.mxu0 0
      %452 = vmatpush1.bf16.msra.mxu0 %v442
      %453 = vmatprep.subr.bf16.mxu0 0
      %454 = vmatpush1.bf16.msra.mxu0 0
      %455 = vmatprep.subr.bf16.mxu0 0
      %456 = vmatpush1.bf16.msra.mxu0 0
      %457 = vmatprep.subr.bf16.mxu0 0
      %458 = vmatpush1.bf16.msra.mxu0 0
      %459 = vmatprep.subr.bf16.mxu0 0
      %460 = vmatpush1.bf16.msra.mxu0 0
      %461 = vmatprep.subr.bf16.mxu0 0
      %462 = vmatpush1.bf16.msra.mxu0 0
      %463 = vmatprep.subr.bf16.mxu0 0
      %464 = vmatpush1.bf16.msra.mxu0 0
      %465 = vmatprep.subr.bf16.mxu0 0
      %466 = vmatpush1.bf16.msra.mxu0 0
      %467 = vmatprep.subr.bf16.mxu0 0
      %468 = vmatpush1.bf16.msra.mxu0 0
      %469 = vmatprep.subr.bf16.mxu0 0
      %470 = vmatpush1.bf16.msra.mxu0 0
      %471 = vmatprep.subr.bf16.mxu0 0
      %472 = vmatpush1.bf16.msra.mxu0 0
      %473 = vmatprep.subr.bf16.mxu0 0
      %474 = vmatpush1.bf16.msra.mxu0 0
      %475 = vmatprep.subr.bf16.mxu0 0
      %476 = vmatpush1.bf16.msra.mxu0 0
      %477 = vmatprep.subr.bf16.mxu0 0
      %478 = vmatpush1.bf16.msra.mxu0 0
      %479 = vmatprep.subr.bf16.mxu0 0
      %480 = vmatpush1.bf16.msra.mxu0 0
      %481 = vmatprep.mubr.bf16.mxu0 0
      %482 = vmatmul.mubr.bf16.gmra.mrb[0].mxu0 %v447
      %v483 = vpop.f32.mrb[0].mxu0
      %v484 = vadd.f32 %v431, %v483
      %v485 = vpop.f32.mrb[0].mxu0
      %v486 = vpop.f32.mrb[0].mxu0
      %v487 = vpop.f32.mrb[0].mxu0
      %488 = vdwg.mxu0
      %v489 = vlaneseq
      %v490 = vshrl.u32 %v489, 7
      %v491 = vlaneseq
      %v492 = vand.u32 %v491, 127
      %v493 = vsub.s32 %v492, %v490
      %495 = vset.pattern.permute.xlu0 0
      %496 = vperm.xlu0 %495, %v415
      %v497 = vpop.permute.xlu0 %496
      %v500 = vlaneseq
      %v501 = vshrl.u32 %v500, 7
      %v502 = vsub.s32 0, %v501
      %v503 = vrot.slane %v416, %v502
      %v505 = vmul.f32 %v497, %v503
      %vm506 = vcmp.eq.f32.partialorder %v505, 0.0
      %vm507 = vcmp.eq.s32.totalorder %v493, 4294967292
      %v508 = vsel %vm507, 1, 0
      %v509 = vcvt.s32.f32 %v508
      %vm510 = vcmp.eq.s32.totalorder %v493, 4294967293
      %v511 = vsel %vm510, 1, 0
      %v512 = vcvt.s32.f32 %v511
      %vm513 = vcmp.eq.s32.totalorder %v493, 4294967294
      %v514 = vsel %vm513, 1, 0
      %v515 = vcvt.s32.f32 %v514
      %vm516 = vcmp.eq.s32.totalorder %v493, 4294967295
      %v517 = vsel %vm516, 1, 0
      %v518 = vcvt.s32.f32 %v517
      %vm519 = vcmp.eq.s32.totalorder %v493, 0
      %v520 = vsel %vm519, 1, 0
      %v521 = vcvt.s32.f32 %v520
      %vm522 = vcmp.eq.s32.totalorder %v493, 1
      %v523 = vsel %vm522, 1, 0
      %v524 = vcvt.s32.f32 %v523
      %vm525 = vcmp.eq.s32.totalorder %v493, 2
      %v526 = vsel %vm525, 1, 0
      %v527 = vcvt.s32.f32 %v526
      %vm528 = vcmp.eq.s32.totalorder %v493, 3
      %v529 = vsel %vm528, 1, 0
      %v530 = vcvt.s32.f32 %v529
      %vm531 = vcmp.eq.s32.totalorder %v493, 4
      %v532 = vsel %vm531, 1, 0
      %v533 = vcvt.s32.f32 %v532
      %v534 = vld [vmem:[%s8] sm:$0x1]
      %v535 = vpack.c.bf16 %v484, %v484
      %v538 = vunpack.c.l.b16 %v417
      %v539 = vunpack.c.l.b16 %v418
      %v540 = vpack.c.b16 %v539, %v538
      %vm541 = vcmask 130048
      %v543 = vsel %vm541, %v535, 0
      %v546 = vsel %vm541, %v540, 0
      %548 = vmatprep.subr.bf16.mxu0 0
      %549 = vmatpush1.bf16.xpose.msra.mxu0 %v546
      %550 = vmatprep.subr.bf16.mxu0 0
      %551 = vmatpush1.bf16.xpose.msra.mxu0 0
      %552 = vmatprep.subr.bf16.mxu0 0
      %553 = vmatpush1.bf16.xpose.msra.mxu0 0
      %554 = vmatprep.subr.bf16.mxu0 0
      %555 = vmatpush1.bf16.xpose.msra.mxu0 0
      %556 = vmatprep.subr.bf16.mxu0 0
      %557 = vmatpush1.bf16.xpose.msra.mxu0 0
      %558 = vmatprep.subr.bf16.mxu0 0
      %559 = vmatpush1.bf16.xpose.msra.mxu0 0
      %560 = vmatprep.subr.bf16.mxu0 0
      %561 = vmatpush1.bf16.xpose.msra.mxu0 0
      %562 = vmatprep.subr.bf16.mxu0 0
      %563 = vmatpush1.bf16.xpose.msra.mxu0 0
      %564 = vmatprep.subr.bf16.mxu0 0
      %565 = vmatpush1.bf16.xpose.msra.mxu0 0
      %566 = vmatprep.subr.bf16.mxu0 0
      %567 = vmatpush1.bf16.xpose.msra.mxu0 0
      %568 = vmatprep.subr.bf16.mxu0 0
      %569 = vmatpush1.bf16.xpose.msra.mxu0 0
      %570 = vmatprep.subr.bf16.mxu0 0
      %571 = vmatpush1.bf16.xpose.msra.mxu0 0
      %572 = vmatprep.subr.bf16.mxu0 0
      %573 = vmatpush1.bf16.xpose.msra.mxu0 0
      %574 = vmatprep.subr.bf16.mxu0 0
      %575 = vmatpush1.bf16.xpose.msra.mxu0 0
      %576 = vmatprep.subr.bf16.mxu0 0
      %577 = vmatpush1.bf16.xpose.msra.mxu0 0
      %578 = vmatprep.subr.bf16.mxu0 0
      %579 = vmatpush1.bf16.xpose.msra.mxu0 0
      %580 = vmatprep.mubr.bf16.mxu0 0
      %581 = vmatmul.mubr.bf16.gmra.mrb[0].mxu0 %v543
      %v582 = vpop.f32.mrb[0].mxu0
      %v583 = vadd.f32 0.0, %v582
      %v584 = vpop.f32.mrb[0].mxu0
      %v585 = vpop.f32.mrb[0].mxu0
      %v586 = vpop.f32.mrb[0].mxu0
      %587 = vdwg.mxu0
      %589 = vset.pattern.permute.xlu0 0
      %590 = vperm.xlu0 %589, %v583
      %v591 = vpop.permute.xlu0 %590
      %v593 = vmul.f32 %v509, %v591
      %595 = vrot.lane.b32.xlu0 %v535, 96
      %v596 = vpop.permute.xlu0 %595
      %v598 = vsel %vm541, %v596, 0
      %600 = vmatprep.subr.bf16.mxu0 0
      %601 = vmatpush1.bf16.xpose.msra.mxu0 %v598
      %602 = vmatprep.subr.bf16.mxu0 0
      %603 = vmatpush1.bf16.xpose.msra.mxu0 0
      %604 = vmatprep.subr.bf16.mxu0 0
      %605 = vmatpush1.bf16.xpose.msra.mxu0 0
      %606 = vmatprep.subr.bf16.mxu0 0
      %607 = vmatpush1.bf16.xpose.msra.mxu0 0
      %608 = vmatprep.subr.bf16.mxu0 0
      %609 = vmatpush1.bf16.xpose.msra.mxu0 0
      %610 = vmatprep.subr.bf16.mxu0 0
      %611 = vmatpush1.bf16.xpose.msra.mxu0 0
      %612 = vmatprep.subr.bf16.mxu0 0
      %613 = vmatpush1.bf16.xpose.msra.mxu0 0
      %614 = vmatprep.subr.bf16.mxu0 0
      %615 = vmatpush1.bf16.xpose.msra.mxu0 0
      %616 = vmatprep.subr.bf16.mxu0 0
      %617 = vmatpush1.bf16.xpose.msra.mxu0 0
      %618 = vmatprep.subr.bf16.mxu0 0
      %619 = vmatpush1.bf16.xpose.msra.mxu0 0
      %620 = vmatprep.subr.bf16.mxu0 0
      %621 = vmatpush1.bf16.xpose.msra.mxu0 0
      %622 = vmatprep.subr.bf16.mxu0 0
      %623 = vmatpush1.bf16.xpose.msra.mxu0 0
      %624 = vmatprep.subr.bf16.mxu0 0
      %625 = vmatpush1.bf16.xpose.msra.mxu0 0
      %626 = vmatprep.subr.bf16.mxu0 0
      %627 = vmatpush1.bf16.xpose.msra.mxu0 0
      %628 = vmatprep.subr.bf16.mxu0 0
      %629 = vmatpush1.bf16.xpose.msra.mxu0 0
      %630 = vmatprep.subr.bf16.mxu0 0
      %631 = vmatpush1.bf16.xpose.msra.mxu0 0
      %632 = vmatprep.mubr.bf16.mxu0 0
      %633 = vmatmul.mubr.bf16.gmra.mrb[0].mxu0 %v543
      %v634 = vpop.f32.mrb[0].mxu0
      %v635 = vadd.f32 %v593, %v634
      %v636 = vpop.f32.mrb[0].mxu0
      %v637 = vpop.f32.mrb[0].mxu0
      %v638 = vpop.f32.mrb[0].mxu0
      %639 = vdwg.mxu0
      %640 = vset.pattern.permute.xlu0 1
      %641 = vperm.xlu0 %640, %v583
      %v642 = vpop.permute.xlu0 %641
      %v644 = vmul.f32 %v512, %v642
      %v645 = vadd.f32 %v635, %v644
      %646 = vset.pattern.permute.xlu0 2
      %647 = vperm.xlu0 %646, %v583
      %v648 = vpop.permute.xlu0 %647
      %v650 = vmul.f32 %v515, %v648
      %v651 = vadd.f32 %v645, %v650
      %652 = vset.pattern.permute.xlu0 3
      %653 = vperm.xlu0 %652, %v583
      %v654 = vpop.permute.xlu0 %653
      %v656 = vmul.f32 %v518, %v654
      %v657 = vadd.f32 %v651, %v656
      %658 = vset.pattern.permute.xlu0 4
      %659 = vperm.xlu0 %658, %v583
      %v660 = vpop.permute.xlu0 %659
      %v662 = vmul.f32 %v521, %v660
      %v663 = vadd.f32 %v657, %v662
      %664 = vset.pattern.permute.xlu0 5
      %665 = vperm.xlu0 %664, %v583
      %v666 = vpop.permute.xlu0 %665
      %v668 = vmul.f32 %v524, %v666
      %v669 = vadd.f32 %v663, %v668
      %670 = vset.pattern.permute.xlu0 6
      %671 = vperm.xlu0 %670, %v583
      %v672 = vpop.permute.xlu0 %671
      %v674 = vmul.f32 %v527, %v672
      %v675 = vadd.f32 %v669, %v674
      %676 = vset.pattern.permute.xlu0 7
      %677 = vperm.xlu0 %676, %v583
      %v678 = vpop.permute.xlu0 %677
      %v680 = vmul.f32 %v530, %v678
      %v681 = vadd.f32 %v675, %v680
      %682 = vset.pattern.permute.xlu0 8
      %683 = vperm.xlu0 %682, %v583
      %v684 = vpop.permute.xlu0 %683
      %v686 = vmul.f32 %v533, %v684
      %v687 = vadd.f32 %v681, %v686
      %v688 = vsel %vm506, -10000.0, %v687
      %vm689 = vcmask 64512
      %v690 = vsel %vm689, %v688, -inf
      %691 = vmax.xlane.f32.xlu0 %v690
      %v692 = vpop.xlane.xlu0 %691
      %v693 = vsub.f32 %v688, %v692
      %v694 = vmul.f32 %v693, 1.442695
      %v695 = vpow.pop %v694
      %v696 = vsel %vm689, %v695, 0.0
      %697 = vadd.xlane.f32.xlu0 %v696
      %v698 = vpop.xlane.xlu0 %697
      %v699 = vrcp.pop %v698
      %v700 = vmul.f32 %v695, %v699
      %v701 = vpack.c.bf16 %v700, %v700
      %v702 = vmul.f32 %v509, %v700
      %v703 = vsel %vm689, %v702, 0.0
      %704 = vadd.xlane.f32.xlu0 %v703
      %v705 = vpop.xlane.xlu0 %704
      %v706 = vmul.f32 %v512, %v700
      %v707 = vsel %vm689, %v706, 0.0
      %708 = vadd.xlane.f32.xlu0 %v707
      %v709 = vpop.xlane.xlu0 %708
      %v710 = vmul.f32 %v515, %v700
      %v711 = vsel %vm689, %v710, 0.0
      %712 = vadd.xlane.f32.xlu0 %v711
      %v713 = vpop.xlane.xlu0 %712
      %v714 = vmul.f32 %v518, %v700
      %v715 = vsel %vm689, %v714, 0.0
      %716 = vadd.xlane.f32.xlu0 %v715
      %v717 = vpop.xlane.xlu0 %716
      %v718 = vmul.f32 %v521, %v700
      %v719 = vsel %vm689, %v718, 0.0
      %720 = vadd.xlane.f32.xlu0 %v719
      %v721 = vpop.xlane.xlu0 %720
      %v722 = vmul.f32 %v524, %v700
      %v723 = vsel %vm689, %v722, 0.0
      %724 = vadd.xlane.f32.xlu0 %v723
      %v725 = vpop.xlane.xlu0 %724
      %v726 = vmul.f32 %v527, %v700
      %v727 = vsel %vm689, %v726, 0.0
      %728 = vadd.xlane.f32.xlu0 %v727
      %v729 = vpop.xlane.xlu0 %728
      %v730 = vmul.f32 %v530, %v700
      %v731 = vsel %vm689, %v730, 0.0
      %732 = vadd.xlane.f32.xlu0 %v731
      %v733 = vpop.xlane.xlu0 %732
      %v734 = vmul.f32 %v533, %v700
      %v735 = vsel %vm689, %v734, 0.0
      %736 = vadd.xlane.f32.xlu0 %v735
      %v737 = vpop.xlane.xlu0 %736
      %vm738 = vcmask 7168
      %v739 = vsel %vm738, %v705, %v709
      %vm740 = vcmask 15360
      %v741 = vsel %vm740, %v739, %v713
      %vm742 = vcmask 23552
      %v743 = vsel %vm742, %v741, %v717
      %vm744 = vcmask 31744
      %v745 = vsel %vm744, %v743, %v721
      %vm746 = vcmask 39936
      %v747 = vsel %vm746, %v745, %v725
      %vm748 = vcmask 48128
      %v749 = vsel %vm748, %v747, %v729
      %vm750 = vcmask 56320
      %v751 = vsel %vm750, %v749, %v733
      %v752 = vsel %vm689, %v751, %v737
      %v753 = vpack.c.bf16 %v752, %v752
      %v756 = vunpack.c.l.b16 %v419
      %v757 = vunpack.c.l.b16 %v420
      %v758 = vpack.c.b16 %v757, %v756
      %vm759 = vcmask 72704
      %v761 = vsel %vm759, %v753, 0
      %vm763 = vcmask 1043456
      %vm764 = vcmask 1044480
      %v765 = vsel %vm763, 4294967295, 65535
      %v766 = vsel %vm764, %v765, 0
      %v768 = vand.u32 %v758, %v766
      %770 = vmatprep.subr.bf16.mxu0 0
      %771 = vmatpush1.bf16.msra.mxu0 %v768
      %772 = vmatprep.subr.bf16.mxu0 0
      %773 = vmatpush1.bf16.msra.mxu0 0
      %774 = vmatprep.subr.bf16.mxu0 0
      %775 = vmatpush1.bf16.msra.mxu0 0
      %776 = vmatprep.subr.bf16.mxu0 0
      %777 = vmatpush1.bf16.msra.mxu0 0
      %778 = vmatprep.subr.bf16.mxu0 0
      %779 = vmatpush1.bf16.msra.mxu0 0
      %780 = vmatprep.subr.bf16.mxu0 0
      %781 = vmatpush1.bf16.msra.mxu0 0
      %782 = vmatprep.subr.bf16.mxu0 0
      %783 = vmatpush1.bf16.msra.mxu0 0
      %784 = vmatprep.subr.bf16.mxu0 0
      %785 = vmatpush1.bf16.msra.mxu0 0
      %786 = vmatprep.subr.bf16.mxu0 0
      %787 = vmatpush1.bf16.msra.mxu0 0
      %788 = vmatprep.subr.bf16.mxu0 0
      %789 = vmatpush1.bf16.msra.mxu0 0
      %790 = vmatprep.subr.bf16.mxu0 0
      %791 = vmatpush1.bf16.msra.mxu0 0
      %792 = vmatprep.subr.bf16.mxu0 0
      %793 = vmatpush1.bf16.msra.mxu0 0
      %794 = vmatprep.subr.bf16.mxu0 0
      %795 = vmatpush1.bf16.msra.mxu0 0
      %796 = vmatprep.subr.bf16.mxu0 0
      %797 = vmatpush1.bf16.msra.mxu0 0
      %798 = vmatprep.subr.bf16.mxu0 0
      %799 = vmatpush1.bf16.msra.mxu0 0
      %800 = vmatprep.subr.bf16.mxu0 0
      %801 = vmatpush1.bf16.msra.mxu0 0
      %802 = vmatprep.mubr.bf16.mxu0 0
      %803 = vmatmul.mubr.bf16.gmra.mrb[0].mxu0 %v761
      %v804 = vpop.f32.mrb[0].mxu0
      %v805 = vadd.f32 0.0, %v804
      %v806 = vpop.f32.mrb[0].mxu0
      %v807 = vpop.f32.mrb[0].mxu0
      %v808 = vpop.f32.mrb[0].mxu0
      %809 = vdwg.mxu0
      %810 = vrot.lane.b32.xlu0 %v535, 64
      %v811 = vpop.permute.xlu0 %810
      %v813 = vsel %vm689, %v701, 0
      %v816 = vsel %vm763, %v811, 0
      %818 = vmatprep.subr.bf16.mxu0 0
      %819 = vmatpush1.bf16.msra.mxu0 %v816
      %820 = vmatprep.subr.bf16.mxu0 0
      %821 = vmatpush1.bf16.msra.mxu0 0
      %822 = vmatprep.subr.bf16.mxu0 0
      %823 = vmatpush1.bf16.msra.mxu0 0
      %824 = vmatprep.subr.bf16.mxu0 0
      %825 = vmatpush1.bf16.msra.mxu0 0
      %826 = vmatprep.subr.bf16.mxu0 0
      %827 = vmatpush1.bf16.msra.mxu0 0
      %828 = vmatprep.subr.bf16.mxu0 0
      %829 = vmatpush1.bf16.msra.mxu0 0
      %830 = vmatprep.subr.bf16.mxu0 0
      %831 = vmatpush1.bf16.msra.mxu0 0
      %832 = vmatprep.subr.bf16.mxu0 0
      %833 = vmatpush1.bf16.msra.mxu0 0
      %834 = vmatprep.subr.bf16.mxu0 0
      %835 = vmatpush1.bf16.msra.mxu0 0
      %836 = vmatprep.subr.bf16.mxu0 0
      %837 = vmatpush1.bf16.msra.mxu0 0
      %838 = vmatprep.subr.bf16.mxu0 0
      %839 = vmatpush1.bf16.msra.mxu0 0
      %840 = vmatprep.subr.bf16.mxu0 0
      %841 = vmatpush1.bf16.msra.mxu0 0
      %842 = vmatprep.subr.bf16.mxu0 0
      %843 = vmatpush1.bf16.msra.mxu0 0
      %844 = vmatprep.subr.bf16.mxu0 0
      %845 = vmatpush1.bf16.msra.mxu0 0
      %846 = vmatprep.subr.bf16.mxu0 0
      %847 = vmatpush1.bf16.msra.mxu0 0
      %848 = vmatprep.subr.bf16.mxu0 0
      %849 = vmatpush1.bf16.msra.mxu0 0
      %850 = vmatprep.mubr.bf16.mxu0 0
      %851 = vmatmul.mubr.bf16.gmra.mrb[0].mxu0 %v813
      %v852 = vpop.f32.mrb[0].mxu0
      %v853 = vadd.f32 %v805, %v852
      %v854 = vpop.f32.mrb[0].mxu0
      %v855 = vpop.f32.mrb[0].mxu0
      %v856 = vpop.f32.mrb[0].mxu0
      %857 = vdwg.mxu0
      %v858 = vpack.c.bf16 %v853, %v853
      %v859 = vld [vmem:[%s7] sm:$0xf]
      %v860 = vld [vmem:[%s7 + $0x4] sm:$0xf]
      %v863 = vunpack.c.l.b16 %v859
      %v864 = vunpack.c.l.b16 %v860
      %v865 = vpack.c.b16 %v864, %v863
      %v868 = vsel %vm541, %v858, 0
      %870 = vmatprep.subr.bf16.mxu0 0
      %871 = vmatpush1.bf16.msra.mxu0 %v865
      %872 = vmatprep.subr.bf16.mxu0 0
      %873 = vmatpush1.bf16.msra.mxu0 0
      %874 = vmatprep.subr.bf16.mxu0 0
      %875 = vmatpush1.bf16.msra.mxu0 0
      %876 = vmatprep.subr.bf16.mxu0 0
      %877 = vmatpush1.bf16.msra.mxu0 0
      %878 = vmatprep.subr.bf16.mxu0 0
      %879 = vmatpush1.bf16.msra.mxu0 0
      %880 = vmatprep.subr.bf16.mxu0 0
      %881 = vmatpush1.bf16.msra.mxu0 0
      %882 = vmatprep.subr.bf16.mxu0 0
      %883 = vmatpush1.bf16.msra.mxu0 0
      %884 = vmatprep.subr.bf16.mxu0 0
      %885 = vmatpush1.bf16.msra.mxu0 0
      %886 = vmatprep.subr.bf16.mxu0 0
      %887 = vmatpush1.bf16.msra.mxu0 0
      %888 = vmatprep.subr.bf16.mxu0 0
      %889 = vmatpush1.bf16.msra.mxu0 0
      %890 = vmatprep.subr.bf16.mxu0 0
      %891 = vmatpush1.bf16.msra.mxu0 0
      %892 = vmatprep.subr.bf16.mxu0 0
      %893 = vmatpush1.bf16.msra.mxu0 0
      %894 = vmatprep.subr.bf16.mxu0 0
      %895 = vmatpush1.bf16.msra.mxu0 0
      %896 = vmatprep.subr.bf16.mxu0 0
      %897 = vmatpush1.bf16.msra.mxu0 0
      %898 = vmatprep.subr.bf16.mxu0 0
      %899 = vmatpush1.bf16.msra.mxu0 0
      %900 = vmatprep.subr.bf16.mxu0 0
      %901 = vmatpush1.bf16.msra.mxu0 0
      %902 = vmatprep.mubr.bf16.mxu0 0
      %903 = vmatmul.mubr.bf16.gmra.mrb[0].mxu0 %v868
      %v904 = vpop.f32.mrb[0].mxu0
      %v905 = vadd.f32 0.0, %v904
      %v906 = vpop.f32.mrb[0].mxu0
      %v907 = vpop.f32.mrb[0].mxu0
      %v908 = vpop.f32.mrb[0].mxu0
      %909 = vdwg.mxu0
      %v911 = vlaneseq
      %v912 = vshrl.u32 %v911, 7
      %v913 = vsub.s32 0, %v912
      %v914 = vrot.slane %v534, %v913
      %v916 = vadd.f32 %v914, %v905
      %917 = vrot.lane.b32.xlu0 %v535, 112
      %v918 = vpop.permute.xlu0 %917
      %v920 = vsel %vm541, %v918, 0
      %922 = vmatprep.subr.bf16.mxu0 0
      %923 = vmatpush1.bf16.xpose.msra.mxu0 %v546
      %924 = vmatprep.subr.bf16.mxu0 0
      %925 = vmatpush1.bf16.xpose.msra.mxu0 0
      %926 = vmatprep.subr.bf16.mxu0 0
      %927 = vmatpush1.bf16.xpose.msra.mxu0 0
      %928 = vmatprep.subr.bf16.mxu0 0
      %929 = vmatpush1.bf16.xpose.msra.mxu0 0
      %930 = vmatprep.subr.bf16.mxu0 0
      %931 = vmatpush1.bf16.xpose.msra.mxu0 0
      %932 = vmatprep.subr.bf16.mxu0 0
      %933 = vmatpush1.bf16.xpose.msra.mxu0 0
      %934 = vmatprep.subr.bf16.mxu0 0
      %935 = vmatpush1.bf16.xpose.msra.mxu0 0
      %936 = vmatprep.subr.bf16.mxu0 0
      %937 = vmatpush1.bf16.xpose.msra.mxu0 0
      %938 = vmatprep.subr.bf16.mxu0 0
      %939 = vmatpush1.bf16.xpose.msra.mxu0 0
      %940 = vmatprep.subr.bf16.mxu0 0
      %941 = vmatpush1.bf16.xpose.msra.mxu0 0
      %942 = vmatprep.subr.bf16.mxu0 0
      %943 = vmatpush1.bf16.xpose.msra.mxu0 0
      %944 = vmatprep.subr.bf16.mxu0 0
      %945 = vmatpush1.bf16.xpose.msra.mxu0 0
      %946 = vmatprep.subr.bf16.mxu0 0
      %947 = vmatpush1.bf16.xpose.msra.mxu0 0
      %948 = vmatprep.subr.bf16.mxu0 0
      %949 = vmatpush1.bf16.xpose.msra.mxu0 0
      %950 = vmatprep.subr.bf16.mxu0 0
      %951 = vmatpush1.bf16.xpose.msra.mxu0 0
      %952 = vmatprep.subr.bf16.mxu0 0
      %953 = vmatpush1.bf16.xpose.msra.mxu0 0
      %954 = vmatprep.mubr.bf16.mxu0 0
      %955 = vmatmul.mubr.bf16.gmra.mrb[0].mxu0 %v920
      %v956 = vpop.f32.mrb[0].mxu0
      %v957 = vadd.f32 0.0, %v956
      %v958 = vpop.f32.mrb[0].mxu0
      %v959 = vpop.f32.mrb[0].mxu0
      %v960 = vpop.f32.mrb[0].mxu0
      %961 = vdwg.mxu0
      %963 = vset.pattern.permute.xlu0 0
      %964 = vperm.xlu0 %963, %v957
      %v965 = vpop.permute.xlu0 %964
      %v967 = vmul.f32 %v509, %v965
      %968 = vrot.lane.b32.xlu0 %v535, 80
      %v969 = vpop.permute.xlu0 %968
      %v971 = vsel %vm541, %v969, 0
      %973 = vmatprep.subr.bf16.mxu0 0
      %974 = vmatpush1.bf16.xpose.msra.mxu0 %v971
      %975 = vmatprep.subr.bf16.mxu0 0
      %976 = vmatpush1.bf16.xpose.msra.mxu0 0
      %977 = vmatprep.subr.bf16.mxu0 0
      %978 = vmatpush1.bf16.xpose.msra.mxu0 0
      %979 = vmatprep.subr.bf16.mxu0 0
      %980 = vmatpush1.bf16.xpose.msra.mxu0 0
      %981 = vmatprep.subr.bf16.mxu0 0
      %982 = vmatpush1.bf16.xpose.msra.mxu0 0
      %983 = vmatprep.subr.bf16.mxu0 0
      %984 = vmatpush1.bf16.xpose.msra.mxu0 0
      %985 = vmatprep.subr.bf16.mxu0 0
      %986 = vmatpush1.bf16.xpose.msra.mxu0 0
      %987 = vmatprep.subr.bf16.mxu0 0
      %988 = vmatpush1.bf16.xpose.msra.mxu0 0
      %989 = vmatprep.subr.bf16.mxu0 0
      %990 = vmatpush1.bf16.xpose.msra.mxu0 0
      %991 = vmatprep.subr.bf16.mxu0 0
      %992 = vmatpush1.bf16.xpose.msra.mxu0 0
      %993 = vmatprep.subr.bf16.mxu0 0
      %994 = vmatpush1.bf16.xpose.msra.mxu0 0
      %995 = vmatprep.subr.bf16.mxu0 0
      %996 = vmatpush1.bf16.xpose.msra.mxu0 0
      %997 = vmatprep.subr.bf16.mxu0 0
      %998 = vmatpush1.bf16.xpose.msra.mxu0 0
      %999 = vmatprep.subr.bf16.mxu0 0
      %1000 = vmatpush1.bf16.xpose.msra.mxu0 0
      %1001 = vmatprep.subr.bf16.mxu0 0
      %1002 = vmatpush1.bf16.xpose.msra.mxu0 0
      %1003 = vmatprep.subr.bf16.mxu0 0
      %1004 = vmatpush1.bf16.xpose.msra.mxu0 0
      %1005 = vmatprep.mubr.bf16.mxu0 0
      %1006 = vmatmul.mubr.bf16.gmra.mrb[0].mxu0 %v920
      %v1007 = vpop.f32.mrb[0].mxu0
      %v1008 = vadd.f32 %v967, %v1007
      %v1009 = vpop.f32.mrb[0].mxu0
      %v1010 = vpop.f32.mrb[0].mxu0
      %v1011 = vpop.f32.mrb[0].mxu0
      %1012 = vdwg.mxu0
      %1013 = vset.pattern.permute.xlu0 1
      %1014 = vperm.xlu0 %1013, %v957
      %v1015 = vpop.permute.xlu0 %1014
      %v1017 = vmul.f32 %v512, %v1015
      %v1018 = vadd.f32 %v1008, %v1017
      %1019 = vset.pattern.permute.xlu0 2
      %1020 = vperm.xlu0 %1019, %v957
      %v1021 = vpop.permute.xlu0 %1020
      %v1023 = vmul.f32 %v515, %v1021
      %v1024 = vadd.f32 %v1018, %v1023
      %1025 = vset.pattern.permute.xlu0 3
      %1026 = vperm.xlu0 %1025, %v957
      %v1027 = vpop.permute.xlu0 %1026
      %v1029 = vmul.f32 %v518, %v1027
      %v1030 = vadd.f32 %v1024, %v1029
      %1031 = vset.pattern.permute.xlu0 4
      %1032 = vperm.xlu0 %1031, %v957
      %v1033 = vpop.permute.xlu0 %1032
      %v1035 = vmul.f32 %v521, %v1033
      %v1036 = vadd.f32 %v1030, %v1035
      %1037 = vset.pattern.permute.xlu0 5
      %1038 = vperm.xlu0 %1037, %v957
      %v1039 = vpop.permute.xlu0 %1038
      %v1041 = vmul.f32 %v524, %v1039
      %v1042 = vadd.f32 %v1036, %v1041
      %1043 = vset.pattern.permute.xlu0 6
      %1044 = vperm.xlu0 %1043, %v957
      %v1045 = vpop.permute.xlu0 %1044
      %v1047 = vmul.f32 %v527, %v1045
      %v1048 = vadd.f32 %v1042, %v1047
      %1049 = vset.pattern.permute.xlu0 7
      %1050 = vperm.xlu0 %1049, %v957
      %v1051 = vpop.permute.xlu0 %1050
      %v1053 = vmul.f32 %v530, %v1051
      %v1054 = vadd.f32 %v1048, %v1053
      %1055 = vset.pattern.permute.xlu0 8
      %1056 = vperm.xlu0 %1055, %v957
      %v1057 = vpop.permute.xlu0 %1056
      %v1059 = vmul.f32 %v533, %v1057
      %v1060 = vadd.f32 %v1054, %v1059
      %v1061 = vsel %vm506, -10000.0, %v1060
      %v1062 = vsel %vm689, %v1061, -inf
      %1063 = vmax.xlane.f32.xlu0 %v1062
      %v1064 = vpop.xlane.xlu0 %1063
      %v1065 = vsub.f32 %v1061, %v1064
      %v1066 = vmul.f32 %v1065, 1.442695
      %v1067 = vpow.pop %v1066
      %v1068 = vsel %vm689, %v1067, 0.0
      %1069 = vadd.xlane.f32.xlu0 %v1068
      %v1070 = vpop.xlane.xlu0 %1069
      %v1071 = vrcp.pop %v1070
      %v1072 = vmul.f32 %v1067, %v1071
      %v1073 = vpack.c.bf16 %v1072, %v1072
      %v1074 = vmul.f32 %v509, %v1072
      %v1075 = vsel %vm689, %v1074, 0.0
      %1076 = vadd.xlane.f32.xlu0 %v1075
      %v1077 = vpop.xlane.xlu0 %1076
      %v1078 = vmul.f32 %v512, %v1072
      %v1079 = vsel %vm689, %v1078, 0.0
      %1080 = vadd.xlane.f32.xlu0 %v1079
      %v1081 = vpop.xlane.xlu0 %1080
      %v1082 = vmul.f32 %v515, %v1072
      %v1083 = vsel %vm689, %v1082, 0.0
      %1084 = vadd.xlane.f32.xlu0 %v1083
      %v1085 = vpop.xlane.xlu0 %1084
      %v1086 = vmul.f32 %v518, %v1072
      %v1087 = vsel %vm689, %v1086, 0.0
      %1088 = vadd.xlane.f32.xlu0 %v1087
      %v1089 = vpop.xlane.xlu0 %1088
      %v1090 = vmul.f32 %v521, %v1072
      %v1091 = vsel %vm689, %v1090, 0.0
      %1092 = vadd.xlane.f32.xlu0 %v1091
      %v1093 = vpop.xlane.xlu0 %1092
      %v1094 = vmul.f32 %v524, %v1072
      %v1095 = vsel %vm689, %v1094, 0.0
      %1096 = vadd.xlane.f32.xlu0 %v1095
      %v1097 = vpop.xlane.xlu0 %1096
      %v1098 = vmul.f32 %v527, %v1072
      %v1099 = vsel %vm689, %v1098, 0.0
      %1100 = vadd.xlane.f32.xlu0 %v1099
      %v1101 = vpop.xlane.xlu0 %1100
      %v1102 = vmul.f32 %v530, %v1072
      %v1103 = vsel %vm689, %v1102, 0.0
      %1104 = vadd.xlane.f32.xlu0 %v1103
      %v1105 = vpop.xlane.xlu0 %1104
      %v1106 = vmul.f32 %v533, %v1072
      %v1107 = vsel %vm689, %v1106, 0.0
      %1108 = vadd.xlane.f32.xlu0 %v1107
      %v1109 = vpop.xlane.xlu0 %1108
      %v1110 = vsel %vm738, %v1077, %v1081
      %v1111 = vsel %vm740, %v1110, %v1085
      %v1112 = vsel %vm742, %v1111, %v1089
      %v1113 = vsel %vm744, %v1112, %v1093
      %v1114 = vsel %vm746, %v1113, %v1097
      %v1115 = vsel %vm748, %v1114, %v1101
      %v1116 = vsel %vm750, %v1115, %v1105
      %v1117 = vsel %vm689, %v1116, %v1109
      %v1118 = vpack.c.bf16 %v1117, %v1117
      %v1120 = vsel %vm759, %v1118, 0
      %1122 = vmatprep.subr.bf16.mxu0 0
      %1123 = vmatpush1.bf16.msra.mxu0 %v768
      %1124 = vmatprep.subr.bf16.mxu0 0
      %1125 = vmatpush1.bf16.msra.mxu0 0
      %1126 = vmatprep.subr.bf16.mxu0 0
      %1127 = vmatpush1.bf16.msra.mxu0 0
      %1128 = vmatprep.subr.bf16.mxu0 0
      %1129 = vmatpush1.bf16.msra.mxu0 0
      %1130 = vmatprep.subr.bf16.mxu0 0
      %1131 = vmatpush1.bf16.msra.mxu0 0
      %1132 = vmatprep.subr.bf16.mxu0 0
      %1133 = vmatpush1.bf16.msra.mxu0 0
      %1134 = vmatprep.subr.bf16.mxu0 0
      %1135 = vmatpush1.bf16.msra.mxu0 0
      %1136 = vmatprep.subr.bf16.mxu0 0
      %1137 = vmatpush1.bf16.msra.mxu0 0
      %1138 = vmatprep.subr.bf16.mxu0 0
      %1139 = vmatpush1.bf16.msra.mxu0 0
      %1140 = vmatprep.subr.bf16.mxu0 0
      %1141 = vmatpush1.bf16.msra.mxu0 0
      %1142 = vmatprep.subr.bf16.mxu0 0
      %1143 = vmatpush1.bf16.msra.mxu0 0
      %1144 = vmatprep.subr.bf16.mxu0 0
      %1145 = vmatpush1.bf16.msra.mxu0 0
      %1146 = vmatprep.subr.bf16.mxu0 0
      %1147 = vmatpush1.bf16.msra.mxu0 0
      %1148 = vmatprep.subr.bf16.mxu0 0
      %1149 = vmatpush1.bf16.msra.mxu0 0
      %1150 = vmatprep.subr.bf16.mxu0 0
      %1151 = vmatpush1.bf16.msra.mxu0 0
      %1152 = vmatprep.subr.bf16.mxu0 0
      %1153 = vmatpush1.bf16.msra.mxu0 0
      %1154 = vmatprep.mubr.bf16.mxu0 0
      %1155 = vmatmul.mubr.bf16.gmra.mrb[0].mxu0 %v1120
      %v1156 = vpop.f32.mrb[0].mxu0
      %v1157 = vadd.f32 0.0, %v1156
      %v1158 = vpop.f32.mrb[0].mxu0
      %v1159 = vpop.f32.mrb[0].mxu0
      %v1160 = vpop.f32.mrb[0].mxu0
      %1161 = vdwg.mxu0
      %1162 = vrot.lane.b32.xlu0 %v535, 48
      %v1163 = vpop.permute.xlu0 %1162
      %v1165 = vsel %vm689, %v1073, 0
      %v1168 = vsel %vm763, %v1163, 0
      %1170 = vmatprep.subr.bf16.mxu0 0
      %1171 = vmatpush1.bf16.msra.mxu0 %v1168
      %1172 = vmatprep.subr.bf16.mxu0 0
      %1173 = vmatpush1.bf16.msra.mxu0 0
      %1174 = vmatprep.subr.bf16.mxu0 0
      %1175 = vmatpush1.bf16.msra.mxu0 0
      %1176 = vmatprep.subr.bf16.mxu0 0
      %1177 = vmatpush1.bf16.msra.mxu0 0
      %1178 = vmatprep.subr.bf16.mxu0 0
      %1179 = vmatpush1.bf16.msra.mxu0 0
      %1180 = vmatprep.subr.bf16.mxu0 0
      %1181 = vmatpush1.bf16.msra.mxu0 0
      %1182 = vmatprep.subr.bf16.mxu0 0
      %1183 = vmatpush1.bf16.msra.mxu0 0
      %1184 = vmatprep.subr.bf16.mxu0 0
      %1185 = vmatpush1.bf16.msra.mxu0 0
      %1186 = vmatprep.subr.bf16.mxu0 0
      %1187 = vmatpush1.bf16.msra.mxu0 0
      %1188 = vmatprep.subr.bf16.mxu0 0
      %1189 = vmatpush1.bf16.msra.mxu0 0
      %1190 = vmatprep.subr.bf16.mxu0 0
      %1191 = vmatpush1.bf16.msra.mxu0 0
      %1192 = vmatprep.subr.bf16.mxu0 0
      %1193 = vmatpush1.bf16.msra.mxu0 0
      %1194 = vmatprep.subr.bf16.mxu0 0
      %1195 = vmatpush1.bf16.msra.mxu0 0
      %1196 = vmatprep.subr.bf16.mxu0 0
      %1197 = vmatpush1.bf16.msra.mxu0 0
      %1198 = vmatprep.subr.bf16.mxu0 0
      %1199 = vmatpush1.bf16.msra.mxu0 0
      %1200 = vmatprep.subr.bf16.mxu0 0
      %1201 = vmatpush1.bf16.msra.mxu0 0
      %1202 = vmatprep.mubr.bf16.mxu0 0
      %1203 = vmatmul.mubr.bf16.gmra.mrb[0].mxu0 %v1165
      %v1204 = vpop.f32.mrb[0].mxu0
      %v1205 = vadd.f32 %v1157, %v1204
      %v1206 = vpop.f32.mrb[0].mxu0
      %v1207 = vpop.f32.mrb[0].mxu0
      %v1208 = vpop.f32.mrb[0].mxu0
      %1209 = vdwg.mxu0
      %v1210 = vpack.c.bf16 %v1205, %v1205
      %v1211 = vld [vmem:[%s7 + $0x8] sm:$0xf]
      %v1212 = vld [vmem:[%s7 + $0xc] sm:$0xf]
      %v1215 = vunpack.c.l.b16 %v1211
      %v1216 = vunpack.c.l.b16 %v1212
      %v1217 = vpack.c.b16 %v1216, %v1215
      %v1220 = vsel %vm541, %v1210, 0
      %1222 = vmatprep.subr.bf16.mxu0 0
      %1223 = vmatpush1.bf16.msra.mxu0 %v1217
      %1224 = vmatprep.subr.bf16.mxu0 0
      %1225 = vmatpush1.bf16.msra.mxu0 0
      %1226 = vmatprep.subr.bf16.mxu0 0
      %1227 = vmatpush1.bf16.msra.mxu0 0
      %1228 = vmatprep.subr.bf16.mxu0 0
      %1229 = vmatpush1.bf16.msra.mxu0 0
      %1230 = vmatprep.subr.bf16.mxu0 0
      %1231 = vmatpush1.bf16.msra.mxu0 0
      %1232 = vmatprep.subr.bf16.mxu0 0
      %1233 = vmatpush1.bf16.msra.mxu0 0
      %1234 = vmatprep.subr.bf16.mxu0 0
      %1235 = vmatpush1.bf16.msra.mxu0 0
      %1236 = vmatprep.subr.bf16.mxu0 0
      %1237 = vmatpush1.bf16.msra.mxu0 0
      %1238 = vmatprep.subr.bf16.mxu0 0
      %1239 = vmatpush1.bf16.msra.mxu0 0
      %1240 = vmatprep.subr.bf16.mxu0 0
      %1241 = vmatpush1.bf16.msra.mxu0 0
      %1242 = vmatprep.subr.bf16.mxu0 0
      %1243 = vmatpush1.bf16.msra.mxu0 0
      %1244 = vmatprep.subr.bf16.mxu0 0
      %1245 = vmatpush1.bf16.msra.mxu0 0
      %1246 = vmatprep.subr.bf16.mxu0 0
      %1247 = vmatpush1.bf16.msra.mxu0 0
      %1248 = vmatprep.subr.bf16.mxu0 0
      %1249 = vmatpush1.bf16.msra.mxu0 0
      %1250 = vmatprep.subr.bf16.mxu0 0
      %1251 = vmatpush1.bf16.msra.mxu0 0
      %1252 = vmatprep.subr.bf16.mxu0 0
      %1253 = vmatpush1.bf16.msra.mxu0 0
      %1254 = vmatprep.mubr.bf16.mxu0 0
      %1255 = vmatmul.mubr.bf16.gmra.mrb[0].mxu0 %v1220
      %v1256 = vpop.f32.mrb[0].mxu0
      %v1257 = vadd.f32 0.0, %v1256
      %v1258 = vpop.f32.mrb[0].mxu0
      %v1259 = vpop.f32.mrb[0].mxu0
      %v1260 = vpop.f32.mrb[0].mxu0
      %1261 = vdwg.mxu0
      %v1262 = vadd.f32 %v916, %v1257
      %v1263 = vadd.f32 %v414, %v1262
      %v1264 = vsel %vm445, %v1263, 0.0
      %1265 = vadd.xlane.f32.xlu0 %v1264
      %v1266 = vpop.xlane.xlu0 %1265
      %v1267 = vrcp.pop 32.0
      %v1268 = vmul.f32 %v1266, %v1267
      %v1269 = vsub.f32 %v1263, %v1268
      %v1270 = vmul.f32 %v1269, %v1269
      %v1271 = vsel %vm445, %v1270, 0.0
      %1272 = vadd.xlane.f32.xlu0 %v1271
      %v1273 = vpop.xlane.xlu0 %1272
      %v1274 = vmul.f32 %v1273, %v1267
      %v1275 = vadd.f32 %v1274, 1e-05
      %v1276 = vrsqrt.pop %v1275
      %v1277 = vmul.f32 %v1269, %v1276
      %v1278 = vld [vmem:[%s9] sm:$0x1]
      %v1280 = vlaneseq
      %v1281 = vshrl.u32 %v1280, 7
      %v1282 = vsub.s32 0, %v1281
      %v1283 = vrot.slane %v1278, %v1282
      %v1285 = vmul.f32 %v1277, %v1283
      %v1286 = vld [vmem:[%s10] sm:$0x1]
      %v1288 = vlaneseq
      %v1289 = vshrl.u32 %v1288, 7
      %v1290 = vsub.s32 0, %v1289
      %v1291 = vrot.slane %v1286, %v1290
      %v1293 = vadd.f32 %v1285, %v1291
      %1294 = vst.msk [vmem:[%s412] sm:$0xff] %vm445, %v1293
      %p1295 = scmp.lt.s32.totalorder %s22, 1
      %s1296 = scalar_select %p1295, %s22, 1
      %s1297 = smul.addr %s1296, 8
      %s1298 = scalar_lea.vmem %s11, %s1297
      // Predicated region
      $region65: #{text_encoder_forward.5} parent=63 // pred_check
        %p1299 = pneg %p286
      $region66: #{text_encoder_forward.5} parent=63 // pred_check_branch
        %1301 = sbr.rel (%p1299) target = $region68
      $region67: #{text_encoder_forward.5} parent=63 // pred_region
        _
      $region68: #{text_encoder_forward.5} parent=63 // pred_fallthru
        _
    $region64: #{text_encoder_forward.5} parent=5 // pred_fallthru
      _
    %p1302 = scmp.le.s32.totalorder 2, %s17
    // Predicated region
    $region69: #{text_encoder_forward.5} parent=5 // pred_check
      %p1303 = pneg %p1302
    $region70: #{text_encoder_forward.5} parent=5 // pred_check_branch
      %1305 = sbr.rel (%p1303) target = $region72
    $region71: #{text_encoder_forward.5} parent=5 // pred_region
      %s1306 = ssub.s32 %s17, 2
      // Predicated region
      $region73: #{text_encoder_forward.5} parent=71 // pred_check
        %p1307 = pneg %p292
      $region74: #{text_encoder_forward.5} parent=71 // pred_check_branch
        %1309 = sbr.rel (%p1307) target = $region76
      $region75: #{text_encoder_forward.5} parent=71 // pred_region
        %p1310 = scmp.lt.s32.totalorder %s23, 1
        %s1311 = scalar_select %p1310, %s23, 1
        %s1312 = smul.addr %s1311, 8
        %s1313 = scalar_lea.vmem %s11, %s1312
      $region76: #{text_encoder_forward.5} parent=71 // pred_fallthru
        _
    $region72: #{text_encoder_forward.5} parent=5 // pred_fallthru
      _
  $region6: #{text_encoder_forward.5} parent=0 // loop_footer
    %s21 = sadd.s32 1, %s17
  $region7: #{text_encoder_forward.5} parent=0 // loop_footer_branch
    %16 = sbr.rel target = $region3
  $region8: #{text_encoder_forward.5} parent=0 // loop_exit
    _

</llo_original>
